<compile_context>
chip_gen: v7x
topology: tpu7x:2x2x1
jax: 0.10.0
libtpu: 0.0.40
codegen_flags: <defaults>
</compile_context>

<pallas_src>
import math
from functools import partial

import jax
import jax.numpy as jnp
from jax import lax
from jax.experimental import pallas as pl
from jax.experimental.pallas import tpu as pltpu


# ----------------------------------------------------------------------------
# Layout constants
# ----------------------------------------------------------------------------
_PITCH = 12      # conv output parity-grid pitch (12x12 >= 11x11 / 9x9 valid)
_SLAB = 160      # per-image lane slab (144 = 12*12 data + 16 pad)
_ACC_W = 128     # per-image conv2 output width (lane dense), col = 12*oh2+ow2
_XPAD = 32       # extra lanes per step block (room for the +13 lane shift)


# ----------------------------------------------------------------------------
# Parameters (PyTorch default init: U(-1/sqrt(fan_in), +1/sqrt(fan_in)))
# ----------------------------------------------------------------------------
def init_params(key, num_frame, num_action):
    ks = jax.random.split(key, 8)

    def u(k, shape, fan_in):
        bound = 1.0 / math.sqrt(fan_in)
        return jax.random.uniform(k, shape, jnp.float32, -bound, bound)

    return dict(
        w1=u(ks[0], (16, num_frame, 8, 8), num_frame * 8 * 8),
        b1=u(ks[1], (16,), num_frame * 8 * 8),
        w2=u(ks[2], (32, 16, 4, 4), 16 * 4 * 4),
        b2=u(ks[3], (32,), 16 * 4 * 4),
        w3=u(ks[4], (256, 32 * 9 * 9), 32 * 9 * 9),
        b3=u(ks[5], (256,), 32 * 9 * 9),
        w4=u(ks[6], (num_action, 256), 256),
        b4=u(ks[7], (num_action,), 256),        # review fix: typo removed
    )


def prepare_params(params, num_frame, num_action):
    """One-time weight re-layouts (no per-forward transposes anywhere)."""
    C = num_frame

    # conv1: fold x/255 into the weights; one column-permuted copy per
    # output-parity group, matching the blocked-input row order
    # (uh, vh, ul, vl, c) with u = 4*uh + ul, v = 4*vh + vl.
    w1 = params["w1"] * (1.0 / 255.0)                      # (16, C, 8, 8)
    w1g = []
    for r1 in (0, 1):
        for s1 in (0, 1):
            wg = jnp.roll(w1, (4 * r1, 4 * s1), axis=(2, 3))          # o c u v
            wg = wg.reshape(16, C, 2, 4, 2, 4)                        # o c uh ul vh vl
            wg = wg.transpose(0, 2, 4, 3, 5, 1).reshape(16, 64 * C)   # o,(uh vh ul vl c)
            w1g.append(wg)
    w1g = jnp.stack(w1g, axis=0)                           # (4, 16, 64C)
    b1c = params["b1"].reshape(16, 1)

    # conv2: one (32, 64) slab per tap quadrant t = (i2//2)*2 + (j2//2);
    # columns ordered (parity group, ch1) to match the conv1 scratch rows.
    w2 = params["w2"].reshape(32, 16, 2, 2, 2, 2)          # ch2 ch1 pi r1 pj s1
    w2s = w2.transpose(2, 4, 0, 3, 5, 1).reshape(4, 32, 64)
    b2c = params["b2"].reshape(32, 1)

    # fc1: (256, 32*9*9) -> (32*128, 256), consuming the padded lane-dense
    # (32, 128) conv activation directly; junk lanes get exactly-zero weight.
    w3 = params["w3"].reshape(256, 32, 9, 9)
    w3 = jnp.pad(w3, ((0, 0), (0, 0), (0, 0), (0, _PITCH - 9)))       # ow2 9->12
    w3 = jnp.pad(w3.reshape(256, 32, 9 * _PITCH),
                 ((0, 0), (0, 0), (0, _ACC_W - 9 * _PITCH)))          # 108->128
    w3p = w3.reshape(256, 32 * _ACC_W).T                              # (4096, 256)
    # Review: correctness relies on those columns being exactly zero -- check.
    col = jnp.arange(_ACC_W)
    junk = ((col >= 9 * _PITCH) | ((col % _PITCH) >= 9)).astype(jnp.float32)
    junk_rows = jnp.tile(junk, 32)[:, None]
    assert float(jnp.max(jnp.abs(w3p) * junk_rows)) == 0.0, \
        "fc1 weight rows for padded activation lanes must be zero"
    b3r = params["b3"].reshape(1, 256)

    # fc2: pad to 128 output lanes so kernel-B stores are unmasked.
    w4m = jnp.zeros((256, 128), jnp.float32).at[:, :num_action].set(params["w4"].T)
    b4r = jnp.zeros((1, 128), jnp.float32).at[0, :num_action].set(params["b4"])

    return dict(w1g=w1g, b1c=b1c, w2s=w2s, b2c=b2c,
                w3p=w3p.astype(jnp.bfloat16), b3r=b3r,
                w4m=w4m.astype(jnp.bfloat16), b4r=b4r)


# ----------------------------------------------------------------------------
# Kernel A: conv1 + ReLU + conv2 + ReLU, `img` images per grid step.
# ----------------------------------------------------------------------------
def _conv1_group_plans(C):
    """Per parity-group matmul plan: tuple of (row_start, row_len, lane_shift).

    For conv1 output positions (2a + r1, 2b + s1), patch element (i, j) lives
    at input row u = (i + 4 r1) mod 8, v = (j + 4 s1) mod 8 with a lane shift
    of 12*[i + 4 r1 >= 8] + [j + 4 s1 >= 8].  With the blocked-input rows
    ordered (uh, vh, ul, vl, c), the shift is constant over each 16C-row
    (uh, vh) block, so each group is 1, 2 or 4 contiguous-row matmuls with
    per-group column-permuted weights -- no im2col copy needed at all.
    """
    blk = 16 * C
    plans = []
    for r1 in (0, 1):
        for s1 in (0, 1):
            chunks = []
            for b in range(4):                                # b = uh*2 + vh
                uh, vh = b // 2, b % 2
                d = (12 if (r1 == 1 and uh == 0) else 0) + \
                    (1 if (s1 == 1 and vh == 0) else 0)
                if chunks and chunks[-1][2] == d:
                    r0, rl, _ = chunks[-1]
                    chunks[-1] = (r0, rl + blk, d)
                else:
                    chunks.append((b * blk, blk, d))
            plans.append(tuple(chunks))
    return tuple(plans)                                       # grp = r1*2 + s1


def _conv_stack_kernel(x_ref, w1g_ref, b1_ref, w2s_ref, b2_ref, o_ref, g_ref,
                       *, plans, img, n1):
    # x_ref : (64C, img*160 + 32) f32 blocked input, images concatenated
    # g_ref : (64, img*160) f32 scratch -- conv1 activations, rows = (grp, ch1)
    nw = n1 + 16
    # conv1 (+bias +ReLU) for the four output-parity groups.  The stride-4
    # window overlap is a lane shift of the 16-row RESULT (cheap), not of the
    # large input operand.
    for grp, plan in enumerate(plans):
        acc = None
        for (r0, rl, d) in plan:
            part = jnp.dot(w1g_ref[grp, :, r0:r0 + rl],
                           x_ref[r0:r0 + rl, 0:nw],
                           preferred_element_type=jnp.float32)
            part = part[:, d:d + n1]
            acc = part if acc is None else acc + part
        g_ref[grp * 16:(grp + 1) * 16, :] = jnp.maximum(acc + b1_ref[...], 0.0)

    # conv2 (+bias +ReLU): 4 tap-quadrant matmuls of K=64 per image,
    # accumulated in f32, stored lane-dense (32, 128) in bf16.
    for i in range(img):
        base = i * _SLAB
        acc2 = None
        for t, off2 in enumerate((0, 1, 12, 13)):
            p = jnp.dot(w2s_ref[t],
                        g_ref[:, base + off2:base + off2 + _ACC_W],
                        preferred_element_type=jnp.float32)
            acc2 = p if acc2 is None else acc2 + p
        o_ref[i] = jnp.maximum(acc2 + b2_ref[...], 0.0).astype(o_ref.dtype)


def _conv_stack(xb, prep, img):
    ns, rows, lanes = xb.shape                               # rows = 64*C
    n1 = img * _SLAB
    kernel = partial(_conv_stack_kernel,
                     plans=_conv1_group_plans(rows // 64), img=img, n1=n1)
    return pl.pallas_call(
        kernel,
        out_shape=jax.ShapeDtypeStruct((ns * img, 32, _ACC_W), jnp.bfloat16),
        grid=(ns,),
        in_specs=[
            pl.BlockSpec((None, rows, lanes), lambda s: (s, 0, 0)),
            pl.BlockSpec((4, 16, rows), lambda s: (0, 0, 0)),
            pl.BlockSpec((16, 1), lambda s: (0, 0)),
            pl.BlockSpec((4, 32, 64), lambda s: (0, 0, 0)),
            pl.BlockSpec((32, 1), lambda s: (0, 0)),
        ],
        out_specs=pl.BlockSpec((img, 32, _ACC_W), lambda s: (s, 0, 0)),
        scratch_shapes=[pltpu.VMEM((64, n1), jnp.float32)],
        compiler_params=pltpu.CompilerParams(
            dimension_semantics=("parallel",),
            vmem_limit_bytes=16 * 1024 * 1024,
        ),
    )(xb, prep["w1g"], prep["b1c"], prep["w2s"], prep["b2c"])


# ----------------------------------------------------------------------------
# Kernel B: fc1 + ReLU + fc2, row-tiled over the batch (bf16 weights/acts).
# ----------------------------------------------------------------------------
def _fc_stack_kernel(x_ref, w3_ref, b3_ref, w4_ref, b4_ref, o_ref):
    h = jnp.dot(x_ref[...], w3_ref[...], preferred_element_type=jnp.float32)
    h = jnp.maximum(h + b3_ref[...], 0.0).astype(jnp.bfloat16)
    o_ref[...] = (jnp.dot(h, w4_ref[...], preferred_element_type=jnp.float32)
                  + b4_ref[...])


def _fc_stack(h2f, prep):
    B, K = h2f.shape
    # >= 2 grid steps so a v7x megacore can shard the batch; tile capped at
    # 256 rows (bf16 weights + <=1 MiB input tiles -> well inside 64 MiB VMEM).
    tm = max(8, min(256, -(-((B + 1) // 2) // 8) * 8))
    b_pad = -(-B // tm) * tm
    if b_pad != B:
        h2f = jnp.pad(h2f, ((0, b_pad - B), (0, 0)))
    return pl.pallas_call(
        _fc_stack_kernel,
        out_shape=jax.ShapeDtypeStruct((b_pad, 128), jnp.float32),
        grid=(b_pad // tm,),
        in_specs=[
            pl.BlockSpec((tm, K), lambda i: (i, 0)),
            pl.BlockSpec((K, 256), lambda i: (0, 0)),
            pl.BlockSpec((1, 256), lambda i: (0, 0)),
            pl.BlockSpec((256, 128), lambda i: (0, 0)),
            pl.BlockSpec((1, 128), lambda i: (0, 0)),
        ],
        out_specs=pl.BlockSpec((tm, 128), lambda i: (i, 0)),
        compiler_params=pltpu.CompilerParams(
            dimension_semantics=("parallel",),
            vmem_limit_bytes=32 * 1024 * 1024,
        ),
    )(h2f, prep["w3p"], prep["b3r"], prep["w4m"], prep["b4r"])


# ----------------------------------------------------------------------------
# Forward
# ----------------------------------------------------------------------------
def _images_per_step(batch):
    # Up to 8 images per conv grid step, but always >= 2 grid steps so a v7x
    # megacore has work for both TensorCores.
    return max(1, min(8, batch // 2))


def preprocess_input(x, img):
    """(B, C, 84, 84) -> (ceil(B/img), 64*C, img*160 + 32) blocked layout.

    Row (((uh*2 + vh)*4 + ul)*4 + vl)*C + c, lane slot*160 + 12*p + q holds
    xpad[c, 8*p + 4*uh + ul, 8*q + 4*vh + vl] of the conv1-padded (pad=2)
    image zero-extended to 96x96.  Pure layout work, same byte count as the
    raw input -- no im2col patch matrix ever reaches HBM.
    """
    B, C, _, _ = x.shape
    bc = -(-B // img) * img
    xp = jnp.pad(x, ((0, bc - B), (0, 0), (2, 10), (2, 10)))        # (bc,C,96,96)
    xb = xp.reshape(bc, C, 12, 2, 4, 12, 2, 4)                      # b c p uh ul q vh vl
    xb = xb.transpose(0, 3, 6, 4, 7, 1, 2, 5)                       # b uh vh ul vl c p q
    xb = xb.reshape(bc, 64 * C, 144)
    xb = jnp.pad(xb, ((0, 0), (0, 0), (0, _SLAB - 144)))            # (bc, 64C, 160)
    ns = bc // img
    xb = xb.reshape(ns, img, 64 * C, _SLAB).transpose(0, 2, 1, 3)
    xb = xb.reshape(ns, 64 * C, img * _SLAB)
    return jnp.pad(xb, ((0, 0), (0, 0), (0, _XPAD)))                # (ns, 64C, L)


@partial(jax.jit, static_argnames=("num_action",))
def q_network2_forward(x, prep, num_action):
    B = x.shape[0]
    assert x.shape[2:] == (84, 84), "fc1 = 32*9*9 requires 84x84 inputs"
    img = _images_per_step(B)
    xb = preprocess_input(x, img)
    h2 = _conv_stack(xb, prep, img)                        # (Bc, 32, 128) bf16
    out = _fc_stack(h2.reshape(h2.shape[0], 32 * _ACC_W), prep)
    # NOTE: for latency-critical B<=32 inference, kernel B could be fused into
    # kernel A with resident bf16 fc weights (single pallas_call); kept
    # separate here for clarity.
    return out[:B, :num_action]


# ----------------------------------------------------------------------------
# Pure-JAX reference (matches the PyTorch module) for the correctness check.
# ----------------------------------------------------------------------------
def reference_forward(x, params):
    hp = lax.Precision.HIGHEST
    dn = ("NCHW", "OIHW", "NCHW")
    xs = x / 255.0
    y = lax.conv_general_dilated(xs, params["w1"], (4, 4), ((2, 2), (2, 2)),
                                 dimension_numbers=dn, precision=hp)
    y = jax.nn.relu(y + params["b1"][None, :, None, None])
    y = lax.conv_general_dilated(y, params["w2"], (2, 2), ((0, 0), (0, 0)),
                                 dimension_numbers=dn, precision=hp)
    h2 = jax.nn.relu(y + params["b2"][None, :, None, None])
    f = h2.reshape(h2.shape[0], -1)
    y3 = jax.nn.relu(jnp.dot(f, params["w3"].T, precision=hp) + params["b3"])
    y4 = jnp.dot(y3, params["w4"].T, precision=hp) + params["b4"]
    return y4, h2


if __name__ == "__main__":
    num_frame, num_action, batch = 4, 6, 2
    key = jax.random.PRNGKey(0)
    k_x, k_p = jax.random.split(key)

    # Atari-style 84x84 frames in [0, 255); 84x84 is forced by fc1 = 32*9*9.
    x = jax.random.uniform(k_x, (batch, num_frame, 84, 84), jnp.float32,
                           0.0, 255.0)
    params = init_params(k_p, num_frame, num_action)
    prep = prepare_params(params, num_frame, num_action)

    out = q_network2_forward(x, prep, num_action)
    out = jax.block_until_ready(out)
    assert out.shape == (batch, num_action), out.shape
    assert out.dtype == jnp.float32

    # Correctness vs the pure-JAX (HIGHEST-precision) reference.  The kernel
    # keeps bf16 conv activations / fc weights with f32 accumulation, so the
    # expected quantisation noise is well under 1%; the tolerances below are
    # tight enough to catch any layout/indexing bug (those give O(1) errors).
    ref_out, ref_h2 = reference_forward(x, params)
    img = _images_per_step(batch)
    h2k = _conv_stack(preprocess_input(x, img), prep, img)[:batch]
    h2v = h2k[:, :, :9 * _PITCH].astype(jnp.float32)
    h2v = h2v.reshape(batch, 32, 9, _PITCH)[..., :9]

    def rel_err(a, b):
        return float(jnp.max(jnp.abs(a - b)) / (jnp.max(jnp.abs(b)) + 1e-8))

    conv_err = rel_err(h2v, ref_h2)
    out_err = rel_err(out, ref_out)
    assert conv_err < 2e-2, f"conv stack mismatch: rel err {conv_err}"
    assert out_err < 5e-2, f"forward mismatch: rel err {out_err}"

    print("KERNEL_OK")
</pallas_src>

<mosaic_0001>
module attributes {stable_mosaic.version = 11 : i64} {
  func.func @_conv_stack_kernel(%arg0: i32, %arg1: memref<1x256x192xf32, #tpu.memory_space<vmem>>, %arg2: memref<4x16x256xf32, #tpu.memory_space<vmem>>, %arg3: memref<16x1xf32, #tpu.memory_space<vmem>>, %arg4: memref<4x32x64xf32, #tpu.memory_space<vmem>>, %arg5: memref<32x1xf32, #tpu.memory_space<vmem>>, %arg6: memref<1x32x128xbf16, #tpu.memory_space<vmem>>, %arg7: memref<64x160xf32, #tpu.memory_space<vmem>>) attributes {dimension_semantics = [#tpu.dimension_semantics<parallel>], iteration_bounds = array<i64: 2>, scalar_prefetch = 0 : i64, scratch_operands = 1 : i64, tpu.core_type = #tpu.core_type<tc>, window_params = [{transform_indices = @transform_0, window_bounds = array<i64: 1, 256, 192>}, {pipeline_mode = #tpu.pipeline_mode<synchronous>, transform_indices = @transform_1, window_bounds = array<i64: 4, 16, 256>}, {pipeline_mode = #tpu.pipeline_mode<synchronous>, transform_indices = @transform_2, window_bounds = array<i64: 16, 1>}, {pipeline_mode = #tpu.pipeline_mode<synchronous>, transform_indices = @transform_3, window_bounds = array<i64: 4, 32, 64>}, {pipeline_mode = #tpu.pipeline_mode<synchronous>, transform_indices = @transform_4, window_bounds = array<i64: 32, 1>}, {transform_indices = @transform_5, window_bounds = array<i64: 1, 32, 128>}]} {
    %c0 = arith.constant 0 : index
    %c0_0 = arith.constant 0 : index
    %c0_1 = arith.constant 0 : index
    %0 = vector.load %arg2[%c0, %c0_0, %c0_1] : memref<4x16x256xf32, #tpu.memory_space<vmem>>, vector<1x16x256xf32>
    %1 = vector.shape_cast %0 : vector<1x16x256xf32> to vector<16x256xf32>
    %c0_2 = arith.constant 0 : index
    %c0_3 = arith.constant 0 : index
    %c0_4 = arith.constant 0 : index
    %2 = vector.load %arg1[%c0_2, %c0_3, %c0_4] : memref<1x256x192xf32, #tpu.memory_space<vmem>>, vector<1x256x176xf32>
    %3 = vector.shape_cast %2 : vector<1x256x176xf32> to vector<256x176xf32>
    %cst = arith.constant dense<0.000000e+00> : vector<16x176xf32>
    %4 = tpu.matmul %1, %3, %cst {dimension_numbers = #tpu.dot_dimension_numbers<[1], [0], [0], [1], [0, 0, 1, 1], [], []>} : vector<16x256xf32>, vector<256x176xf32>, vector<16x176xf32> -> vector<16x176xf32>
    %5 = vector.extract_strided_slice %4 {offsets = [0, 0], sizes = [16, 160], strides = [1, 1]} : vector<16x176xf32> to vector<16x160xf32>
    %c0_5 = arith.constant 0 : index
    %c0_6 = arith.constant 0 : index
    %6 = vector.load %arg3[%c0_5, %c0_6] : memref<16x1xf32, #tpu.memory_space<vmem>>, vector<16x1xf32>
    %7 = vector.broadcast %6 : vector<16x1xf32> to vector<16x160xf32>
    %8 = arith.addf %5, %7 : vector<16x160xf32>
    %cst_7 = arith.constant 0.000000e+00 : f32
    %9 = vector.broadcast %cst_7 : f32 to vector<16x160xf32>
    %10 = arith.maximumf %8, %9 : vector<16x160xf32>
    %c0_8 = arith.constant 0 : index
    %c0_9 = arith.constant 0 : index
    %11 = vector.load %arg7[%c0_8, %c0_9] : memref<64x160xf32, #tpu.memory_space<vmem>>, vector<16x160xf32>
    tpu.vector_store %arg7[%c0_8, %c0_9], %10 {strides = array<i32>} : memref<64x160xf32, #tpu.memory_space<vmem>>, vector<16x160xf32>,
    %c1 = arith.constant 1 : index
    %c0_10 = arith.constant 0 : index
    %c0_11 = arith.constant 0 : index
    %12 = vector.load %arg2[%c1, %c0_10, %c0_11] : memref<4x16x256xf32, #tpu.memory_space<vmem>>, vector<1x16x64xf32>
    %13 = vector.shape_cast %12 : vector<1x16x64xf32> to vector<16x64xf32>
    %c0_12 = arith.constant 0 : index
    %c0_13 = arith.constant 0 : index
    %c0_14 = arith.constant 0 : index
    %14 = vector.load %arg1[%c0_12, %c0_13, %c0_14] : memref<1x256x192xf32, #tpu.memory_space<vmem>>, vector<1x64x176xf32>
    %15 = vector.shape_cast %14 : vector<1x64x176xf32> to vector<64x176xf32>
    %cst_15 = arith.constant dense<0.000000e+00> : vector<16x176xf32>
    %16 = tpu.matmul %13, %15, %cst_15 {dimension_numbers = #tpu.dot_dimension_numbers<[1], [0], [0], [1], [0, 0, 1, 1], [], []>} : vector<16x64xf32>, vector<64x176xf32>, vector<16x176xf32> -> vector<16x176xf32>
    %17 = vector.extract_strided_slice %16 {offsets = [0, 1], sizes = [16, 160], strides = [1, 1]} : vector<16x176xf32> to vector<16x160xf32>
    %c1_16 = arith.constant 1 : index
    %c0_17 = arith.constant 0 : index
    %c64 = arith.constant 64 : index
    %18 = vector.load %arg2[%c1_16, %c0_17, %c64] : memref<4x16x256xf32, #tpu.memory_space<vmem>>, vector<1x16x64xf32>
    %19 = vector.shape_cast %18 : vector<1x16x64xf32> to vector<16x64xf32>
    %c0_18 = arith.constant 0 : index
    %c64_19 = arith.constant 64 : index
    %c0_20 = arith.constant 0 : index
    %20 = vector.load %arg1[%c0_18, %c64_19, %c0_20] : memref<1x256x192xf32, #tpu.memory_space<vmem>>, vector<1x64x176xf32>
    %21 = vector.shape_cast %20 : vector<1x64x176xf32> to vector<64x176xf32>
    %cst_21 = arith.constant dense<0.000000e+00> : vector<16x176xf32>
    %22 = tpu.matmul %19, %21, %cst_21 {dimension_numbers = #tpu.dot_dimension_numbers<[1], [0], [0], [1], [0, 0, 1, 1], [], []>} : vector<16x64xf32>, vector<64x176xf32>, vector<16x176xf32> -> vector<16x176xf32>
    %23 = vector.extract_strided_slice %22 {offsets = [0, 0], sizes = [16, 160], strides = [1, 1]} : vector<16x176xf32> to vector<16x160xf32>
    %24 = arith.addf %17, %23 : vector<16x160xf32>
    %c1_22 = arith.constant 1 : index
    %c0_23 = arith.constant 0 : index
    %c128 = arith.constant 128 : index
    %25 = vector.load %arg2[%c1_22, %c0_23, %c128] : memref<4x16x256xf32, #tpu.memory_space<vmem>>, vector<1x16x64xf32>
    %26 = vector.shape_cast %25 : vector<1x16x64xf32> to vector<16x64xf32>
    %c0_24 = arith.constant 0 : index
    %c128_25 = arith.constant 128 : index
    %c0_26 = arith.constant 0 : index
    %27 = vector.load %arg1[%c0_24, %c128_25, %c0_26] : memref<1x256x192xf32, #tpu.memory_space<vmem>>, vector<1x64x176xf32>
    %28 = vector.shape_cast %27 : vector<1x64x176xf32> to vector<64x176xf32>
    %cst_27 = arith.constant dense<0.000000e+00> : vector<16x176xf32>
    %29 = tpu.matmul %26, %28, %cst_27 {dimension_numbers = #tpu.dot_dimension_numbers<[1], [0], [0], [1], [0, 0, 1, 1], [], []>} : vector<16x64xf32>, vector<64x176xf32>, vector<16x176xf32> -> vector<16x176xf32>
    %30 = vector.extract_strided_slice %29 {offsets = [0, 1], sizes = [16, 160], strides = [1, 1]} : vector<16x176xf32> to vector<16x160xf32>
    %31 = arith.addf %24, %30 : vector<16x160xf32>
    %c1_28 = arith.constant 1 : index
    %c0_29 = arith.constant 0 : index
    %c192 = arith.constant 192 : index
    %32 = vector.load %arg2[%c1_28, %c0_29, %c192] : memref<4x16x256xf32, #tpu.memory_space<vmem>>, vector<1x16x64xf32>
    %33 = vector.shape_cast %32 : vector<1x16x64xf32> to vector<16x64xf32>
    %c0_30 = arith.constant 0 : index
    %c192_31 = arith.constant 192 : index
    %c0_32 = arith.constant 0 : index
    %34 = vector.load %arg1[%c0_30, %c192_31, %c0_32] : memref<1x256x192xf32, #tpu.memory_space<vmem>>, vector<1x64x176xf32>
    %35 = vector.shape_cast %34 : vector<1x64x176xf32> to vector<64x176xf32>
    %cst_33 = arith.constant dense<0.000000e+00> : vector<16x176xf32>
    %36 = tpu.matmul %33, %35, %cst_33 {dimension_numbers = #tpu.dot_dimension_numbers<[1], [0], [0], [1], [0, 0, 1, 1], [], []>} : vector<16x64xf32>, vector<64x176xf32>, vector<16x176xf32> -> vector<16x176xf32>
    %37 = vector.extract_strided_slice %36 {offsets = [0, 0], sizes = [16, 160], strides = [1, 1]} : vector<16x176xf32> to vector<16x160xf32>
    %38 = arith.addf %31, %37 : vector<16x160xf32>
    %c0_34 = arith.constant 0 : index
    %c0_35 = arith.constant 0 : index
    %39 = vector.load %arg3[%c0_34, %c0_35] : memref<16x1xf32, #tpu.memory_space<vmem>>, vector<16x1xf32>
    %40 = vector.broadcast %39 : vector<16x1xf32> to vector<16x160xf32>
    %41 = arith.addf %38, %40 : vector<16x160xf32>
    %cst_36 = arith.constant 0.000000e+00 : f32
    %42 = vector.broadcast %cst_36 : f32 to vector<16x160xf32>
    %43 = arith.maximumf %41, %42 : vector<16x160xf32>
    %c16 = arith.constant 16 : index
    %c0_37 = arith.constant 0 : index
    %44 = vector.load %arg7[%c16, %c0_37] : memref<64x160xf32, #tpu.memory_space<vmem>>, vector<16x160xf32>
    tpu.vector_store %arg7[%c16, %c0_37], %43 {strides = array<i32>} : memref<64x160xf32, #tpu.memory_space<vmem>>, vector<16x160xf32>,
    %c2 = arith.constant 2 : index
    %c0_38 = arith.constant 0 : index
    %c0_39 = arith.constant 0 : index
    %45 = vector.load %arg2[%c2, %c0_38, %c0_39] : memref<4x16x256xf32, #tpu.memory_space<vmem>>, vector<1x16x128xf32>
    %46 = vector.shape_cast %45 : vector<1x16x128xf32> to vector<16x128xf32>
    %c0_40 = arith.constant 0 : index
    %c0_41 = arith.constant 0 : index
    %c0_42 = arith.constant 0 : index
    %47 = vector.load %arg1[%c0_40, %c0_41, %c0_42] : memref<1x256x192xf32, #tpu.memory_space<vmem>>, vector<1x128x176xf32>
    %48 = vector.shape_cast %47 : vector<1x128x176xf32> to vector<128x176xf32>
    %cst_43 = arith.constant dense<0.000000e+00> : vector<16x176xf32>
    %49 = tpu.matmul %46, %48, %cst_43 {dimension_numbers = #tpu.dot_dimension_numbers<[1], [0], [0], [1], [0, 0, 1, 1], [], []>} : vector<16x128xf32>, vector<128x176xf32>, vector<16x176xf32> -> vector<16x176xf32>
    %50 = vector.extract_strided_slice %49 {offsets = [0, 12], sizes = [16, 160], strides = [1, 1]} : vector<16x176xf32> to vector<16x160xf32>
    %c2_44 = arith.constant 2 : index
    %c0_45 = arith.constant 0 : index
    %c128_46 = arith.constant 128 : index
    %51 = vector.load %arg2[%c2_44, %c0_45, %c128_46] : memref<4x16x256xf32, #tpu.memory_space<vmem>>, vector<1x16x128xf32>
    %52 = vector.shape_cast %51 : vector<1x16x128xf32> to vector<16x128xf32>
    %c0_47 = arith.constant 0 : index
    %c128_48 = arith.constant 128 : index
    %c0_49 = arith.constant 0 : index
    %53 = vector.load %arg1[%c0_47, %c128_48, %c0_49] : memref<1x256x192xf32, #tpu.memory_space<vmem>>, vector<1x128x176xf32>
    %54 = vector.shape_cast %53 : vector<1x128x176xf32> to vector<128x176xf32>
    %cst_50 = arith.constant dense<0.000000e+00> : vector<16x176xf32>
    %55 = tpu.matmul %52, %54, %cst_50 {dimension_numbers = #tpu.dot_dimension_numbers<[1], [0], [0], [1], [0, 0, 1, 1], [], []>} : vector<16x128xf32>, vector<128x176xf32>, vector<16x176xf32> -> vector<16x176xf32>
    %56 = vector.extract_strided_slice %55 {offsets = [0, 0], sizes = [16, 160], strides = [1, 1]} : vector<16x176xf32> to vector<16x160xf32>
    %57 = arith.addf %50, %56 : vector<16x160xf32>
    %c0_51 = arith.constant 0 : index
    %c0_52 = arith.constant 0 : index
    %58 = vector.load %arg3[%c0_51, %c0_52] : memref<16x1xf32, #tpu.memory_space<vmem>>, vector<16x1xf32>
    %59 = vector.broadcast %58 : vector<16x1xf32> to vector<16x160xf32>
    %60 = arith.addf %57, %59 : vector<16x160xf32>
    %cst_53 = arith.constant 0.000000e+00 : f32
    %61 = vector.broadcast %cst_53 : f32 to vector<16x160xf32>
    %62 = arith.maximumf %60, %61 : vector<16x160xf32>
    %c32 = arith.constant 32 : index
    %c0_54 = arith.constant 0 : index
    %63 = vector.load %arg7[%c32, %c0_54] : memref<64x160xf32, #tpu.memory_space<vmem>>, vector<16x160xf32>
    tpu.vector_store %arg7[%c32, %c0_54], %62 {strides = array<i32>} : memref<64x160xf32, #tpu.memory_space<vmem>>, vector<16x160xf32>,
    %c3 = arith.constant 3 : index
    %c0_55 = arith.constant 0 : index
    %c0_56 = arith.constant 0 : index
    %64 = vector.load %arg2[%c3, %c0_55, %c0_56] : memref<4x16x256xf32, #tpu.memory_space<vmem>>, vector<1x16x64xf32>
    %65 = vector.shape_cast %64 : vector<1x16x64xf32> to vector<16x64xf32>
    %c0_57 = arith.constant 0 : index
    %c0_58 = arith.constant 0 : index
    %c0_59 = arith.constant 0 : index
    %66 = vector.load %arg1[%c0_57, %c0_58, %c0_59] : memref<1x256x192xf32, #tpu.memory_space<vmem>>, vector<1x64x176xf32>
    %67 = vector.shape_cast %66 : vector<1x64x176xf32> to vector<64x176xf32>
    %cst_60 = arith.constant dense<0.000000e+00> : vector<16x176xf32>
    %68 = tpu.matmul %65, %67, %cst_60 {dimension_numbers = #tpu.dot_dimension_numbers<[1], [0], [0], [1], [0, 0, 1, 1], [], []>} : vector<16x64xf32>, vector<64x176xf32>, vector<16x176xf32> -> vector<16x176xf32>
    %69 = vector.extract_strided_slice %68 {offsets = [0, 13], sizes = [16, 160], strides = [1, 1]} : vector<16x176xf32> to vector<16x160xf32>
    %c3_61 = arith.constant 3 : index
    %c0_62 = arith.constant 0 : index
    %c64_63 = arith.constant 64 : index
    %70 = vector.load %arg2[%c3_61, %c0_62, %c64_63] : memref<4x16x256xf32, #tpu.memory_space<vmem>>, vector<1x16x64xf32>
    %71 = vector.shape_cast %70 : vector<1x16x64xf32> to vector<16x64xf32>
    %c0_64 = arith.constant 0 : index
    %c64_65 = arith.constant 64 : index
    %c0_66 = arith.constant 0 : index
    %72 = vector.load %arg1[%c0_64, %c64_65, %c0_66] : memref<1x256x192xf32, #tpu.memory_space<vmem>>, vector<1x64x176xf32>
    %73 = vector.shape_cast %72 : vector<1x64x176xf32> to vector<64x176xf32>
    %cst_67 = arith.constant dense<0.000000e+00> : vector<16x176xf32>
    %74 = tpu.matmul %71, %73, %cst_67 {dimension_numbers = #tpu.dot_dimension_numbers<[1], [0], [0], [1], [0, 0, 1, 1], [], []>} : vector<16x64xf32>, vector<64x176xf32>, vector<16x176xf32> -> vector<16x176xf32>
    %75 = vector.extract_strided_slice %74 {offsets = [0, 12], sizes = [16, 160], strides = [1, 1]} : vector<16x176xf32> to vector<16x160xf32>
    %76 = arith.addf %69, %75 : vector<16x160xf32>
    %c3_68 = arith.constant 3 : index
    %c0_69 = arith.constant 0 : index
    %c128_70 = arith.constant 128 : index
    %77 = vector.load %arg2[%c3_68, %c0_69, %c128_70] : memref<4x16x256xf32, #tpu.memory_space<vmem>>, vector<1x16x64xf32>
    %78 = vector.shape_cast %77 : vector<1x16x64xf32> to vector<16x64xf32>
    %c0_71 = arith.constant 0 : index
    %c128_72 = arith.constant 128 : index
    %c0_73 = arith.constant 0 : index
    %79 = vector.load %arg1[%c0_71, %c128_72, %c0_73] : memref<1x256x192xf32, #tpu.memory_space<vmem>>, vector<1x64x176xf32>
    %80 = vector.shape_cast %79 : vector<1x64x176xf32> to vector<64x176xf32>
    %cst_74 = arith.constant dense<0.000000e+00> : vector<16x176xf32>
    %81 = tpu.matmul %78, %80, %cst_74 {dimension_numbers = #tpu.dot_dimension_numbers<[1], [0], [0], [1], [0, 0, 1, 1], [], []>} : vector<16x64xf32>, vector<64x176xf32>, vector<16x176xf32> -> vector<16x176xf32>
    %82 = vector.extract_strided_slice %81 {offsets = [0, 1], sizes = [16, 160], strides = [1, 1]} : vector<16x176xf32> to vector<16x160xf32>
    %83 = arith.addf %76, %82 : vector<16x160xf32>
    %c3_75 = arith.constant 3 : index
    %c0_76 = arith.constant 0 : index
    %c192_77 = arith.constant 192 : index
    %84 = vector.load %arg2[%c3_75, %c0_76, %c192_77] : memref<4x16x256xf32, #tpu.memory_space<vmem>>, vector<1x16x64xf32>
    %85 = vector.shape_cast %84 : vector<1x16x64xf32> to vector<16x64xf32>
    %c0_78 = arith.constant 0 : index
    %c192_79 = arith.constant 192 : index
    %c0_80 = arith.constant 0 : index
    %86 = vector.load %arg1[%c0_78, %c192_79, %c0_80] : memref<1x256x192xf32, #tpu.memory_space<vmem>>, vector<1x64x176xf32>
    %87 = vector.shape_cast %86 : vector<1x64x176xf32> to vector<64x176xf32>
    %cst_81 = arith.constant dense<0.000000e+00> : vector<16x176xf32>
    %88 = tpu.matmul %85, %87, %cst_81 {dimension_numbers = #tpu.dot_dimension_numbers<[1], [0], [0], [1], [0, 0, 1, 1], [], []>} : vector<16x64xf32>, vector<64x176xf32>, vector<16x176xf32> -> vector<16x176xf32>
    %89 = vector.extract_strided_slice %88 {offsets = [0, 0], sizes = [16, 160], strides = [1, 1]} : vector<16x176xf32> to vector<16x160xf32>
    %90 = arith.addf %83, %89 : vector<16x160xf32>
    %c0_82 = arith.constant 0 : index
    %c0_83 = arith.constant 0 : index
    %91 = vector.load %arg3[%c0_82, %c0_83] : memref<16x1xf32, #tpu.memory_space<vmem>>, vector<16x1xf32>
    %92 = vector.broadcast %91 : vector<16x1xf32> to vector<16x160xf32>
    %93 = arith.addf %90, %92 : vector<16x160xf32>
    %cst_84 = arith.constant 0.000000e+00 : f32
    %94 = vector.broadcast %cst_84 : f32 to vector<16x160xf32>
    %95 = arith.maximumf %93, %94 : vector<16x160xf32>
    %c48 = arith.constant 48 : index
    %c0_85 = arith.constant 0 : index
    %96 = vector.load %arg7[%c48, %c0_85] : memref<64x160xf32, #tpu.memory_space<vmem>>, vector<16x160xf32>
    tpu.vector_store %arg7[%c48, %c0_85], %95 {strides = array<i32>} : memref<64x160xf32, #tpu.memory_space<vmem>>, vector<16x160xf32>,
    %c0_86 = arith.constant 0 : index
    %c0_87 = arith.constant 0 : index
    %c0_88 = arith.constant 0 : index
    %97 = vector.load %arg4[%c0_86, %c0_87, %c0_88] : memref<4x32x64xf32, #tpu.memory_space<vmem>>, vector<1x32x64xf32>
    %98 = vector.shape_cast %97 : vector<1x32x64xf32> to vector<32x64xf32>
    %c0_89 = arith.constant 0 : index
    %c0_90 = arith.constant 0 : index
    %99 = vector.load %arg7[%c0_89, %c0_90] : memref<64x160xf32, #tpu.memory_space<vmem>>, vector<64x128xf32>
    %cst_91 = arith.constant dense<0.000000e+00> : vector<32x128xf32>
    %100 = tpu.matmul %98, %99, %cst_91 {dimension_numbers = #tpu.dot_dimension_numbers<[1], [0], [0], [1], [0, 0, 1, 1], [], []>} : vector<32x64xf32>, vector<64x128xf32>, vector<32x128xf32> -> vector<32x128xf32>
    %c1_92 = arith.constant 1 : index
    %c0_93 = arith.constant 0 : index
    %c0_94 = arith.constant 0 : index
    %101 = vector.load %arg4[%c1_92, %c0_93, %c0_94] : memref<4x32x64xf32, #tpu.memory_space<vmem>>, vector<1x32x64xf32>
    %102 = vector.shape_cast %101 : vector<1x32x64xf32> to vector<32x64xf32>
    %c0_95 = arith.constant 0 : index
    %c1_96 = arith.constant 1 : index
    %103 = vector.load %arg7[%c0_95, %c1_96] : memref<64x160xf32, #tpu.memory_space<vmem>>, vector<64x128xf32>
    %cst_97 = arith.constant dense<0.000000e+00> : vector<32x128xf32>
    %104 = tpu.matmul %102, %103, %cst_97 {dimension_numbers = #tpu.dot_dimension_numbers<[1], [0], [0], [1], [0, 0, 1, 1], [], []>} : vector<32x64xf32>, vector<64x128xf32>, vector<32x128xf32> -> vector<32x128xf32>
    %105 = arith.addf %100, %104 : vector<32x128xf32>
    %c2_98 = arith.constant 2 : index
    %c0_99 = arith.constant 0 : index
    %c0_100 = arith.constant 0 : index
    %106 = vector.load %arg4[%c2_98, %c0_99, %c0_100] : memref<4x32x64xf32, #tpu.memory_space<vmem>>, vector<1x32x64xf32>
    %107 = vector.shape_cast %106 : vector<1x32x64xf32> to vector<32x64xf32>
    %c0_101 = arith.constant 0 : index
    %c12 = arith.constant 12 : index
    %108 = vector.load %arg7[%c0_101, %c12] : memref<64x160xf32, #tpu.memory_space<vmem>>, vector<64x128xf32>
    %cst_102 = arith.constant dense<0.000000e+00> : vector<32x128xf32>
    %109 = tpu.matmul %107, %108, %cst_102 {dimension_numbers = #tpu.dot_dimension_numbers<[1], [0], [0], [1], [0, 0, 1, 1], [], []>} : vector<32x64xf32>, vector<64x128xf32>, vector<32x128xf32> -> vector<32x128xf32>
    %110 = arith.addf %105, %109 : vector<32x128xf32>
    %c3_103 = arith.constant 3 : index
    %c0_104 = arith.constant 0 : index
    %c0_105 = arith.constant 0 : index
    %111 = vector.load %arg4[%c3_103, %c0_104, %c0_105] : memref<4x32x64xf32, #tpu.memory_space<vmem>>, vector<1x32x64xf32>
    %112 = vector.shape_cast %111 : vector<1x32x64xf32> to vector<32x64xf32>
    %c0_106 = arith.constant 0 : index
    %c13 = arith.constant 13 : index
    %113 = vector.load %arg7[%c0_106, %c13] : memref<64x160xf32, #tpu.memory_space<vmem>>, vector<64x128xf32>
    %cst_107 = arith.constant dense<0.000000e+00> : vector<32x128xf32>
    %114 = tpu.matmul %112, %113, %cst_107 {dimension_numbers = #tpu.dot_dimension_numbers<[1], [0], [0], [1], [0, 0, 1, 1], [], []>} : vector<32x64xf32>, vector<64x128xf32>, vector<32x128xf32> -> vector<32x128xf32>
    %115 = arith.addf %110, %114 : vector<32x128xf32>
    %c0_108 = arith.constant 0 : index
    %c0_109 = arith.constant 0 : index
    %116 = vector.load %arg5[%c0_108, %c0_109] : memref<32x1xf32, #tpu.memory_space<vmem>>, vector<32x1xf32>
    %117 = vector.broadcast %116 : vector<32x1xf32> to vector<32x128xf32>
    %118 = arith.addf %115, %117 : vector<32x128xf32>
    %cst_110 = arith.constant 0.000000e+00 : f32
    %119 = vector.broadcast %cst_110 : f32 to vector<32x128xf32>
    %120 = arith.maximumf %118, %119 : vector<32x128xf32>
    %121 = arith.truncf %120 : vector<32x128xf32> to vector<32x128xbf16>
    %c0_111 = arith.constant 0 : index
    %c0_112 = arith.constant 0 : index
    %c0_113 = arith.constant 0 : index
    %122 = vector.load %arg6[%c0_111, %c0_112, %c0_113] : memref<1x32x128xbf16, #tpu.memory_space<vmem>>, vector<1x32x128xbf16>
    %123 = vector.shape_cast %122 : vector<1x32x128xbf16> to vector<32x128xbf16>
    %124 = vector.shape_cast %121 : vector<32x128xbf16> to vector<1x32x128xbf16>
    tpu.vector_store %arg6[%c0_111, %c0_112, %c0_113], %124 {strides = array<i32>} : memref<1x32x128xbf16, #tpu.memory_space<vmem>>, vector<1x32x128xbf16>,
    return
  }
  func.func @transform_0(%arg0: i32) -> (i32, i32, i32) {
    %c0_i32 = arith.constant 0 : i32
    %c0_i32_0 = arith.constant 0 : i32
    %c0_i32_1 = arith.constant 0 : i32
    return %arg0, %c0_i32, %c0_i32_0 : i32, i32, i32
  }
  func.func @transform_1(%arg0: i32) -> (i32, i32, i32) {
    %c0_i32 = arith.constant 0 : i32
    %c0_i32_0 = arith.constant 0 : i32
    %c0_i32_1 = arith.constant 0 : i32
    %c0_i32_2 = arith.constant 0 : i32
    return %c0_i32, %c0_i32_0, %c0_i32_1 : i32, i32, i32
  }
  func.func @transform_2(%arg0: i32) -> (i32, i32) {
    %c0_i32 = arith.constant 0 : i32
    %c0_i32_0 = arith.constant 0 : i32
    %c0_i32_1 = arith.constant 0 : i32
    return %c0_i32, %c0_i32_0 : i32, i32
  }
  func.func @transform_3(%arg0: i32) -> (i32, i32, i32) {
    %c0_i32 = arith.constant 0 : i32
    %c0_i32_0 = arith.constant 0 : i32
    %c0_i32_1 = arith.constant 0 : i32
    %c0_i32_2 = arith.constant 0 : i32
    return %c0_i32, %c0_i32_0, %c0_i32_1 : i32, i32, i32
  }
  func.func @transform_4(%arg0: i32) -> (i32, i32) {
    %c0_i32 = arith.constant 0 : i32
    %c0_i32_0 = arith.constant 0 : i32
    %c0_i32_1 = arith.constant 0 : i32
    return %c0_i32, %c0_i32_0 : i32, i32
  }
  func.func @transform_5(%arg0: i32) -> (i32, i32, i32) {
    %c0_i32 = arith.constant 0 : i32
    %c0_i32_0 = arith.constant 0 : i32
    %c0_i32_1 = arith.constant 0 : i32
    return %arg0, %c0_i32, %c0_i32_0 : i32, i32, i32
  }
}

module attributes {stable_mosaic.version = 11 : i64} {
  func.func @_fc_stack_kernel(%arg0: i32, %arg1: memref<8x4096xbf16, #tpu.memory_space<vmem>>, %arg2: memref<4096x256xbf16, #tpu.memory_space<vmem>>, %arg3: memref<1x256xf32, #tpu.memory_space<vmem>>, %arg4: memref<256x128xbf16, #tpu.memory_space<vmem>>, %arg5: memref<1x128xf32, #tpu.memory_space<vmem>>, %arg6: memref<8x128xf32, #tpu.memory_space<vmem>>) attributes {dimension_semantics = [#tpu.dimension_semantics<parallel>], iteration_bounds = array<i64: 1>, scalar_prefetch = 0 : i64, scratch_operands = 0 : i64, tpu.core_type = #tpu.core_type<tc>, window_params = [{transform_indices = @transform_0, window_bounds = array<i64: 8, 4096>}, {pipeline_mode = #tpu.pipeline_mode<synchronous>, transform_indices = @transform_1, window_bounds = array<i64: 4096, 256>}, {pipeline_mode = #tpu.pipeline_mode<synchronous>, transform_indices = @transform_2, window_bounds = array<i64: 1, 256>}, {pipeline_mode = #tpu.pipeline_mode<synchronous>, transform_indices = @transform_3, window_bounds = array<i64: 256, 128>}, {pipeline_mode = #tpu.pipeline_mode<synchronous>, transform_indices = @transform_4, window_bounds = array<i64: 1, 128>}, {transform_indices = @transform_5, window_bounds = array<i64: 8, 128>}]} {
    %c0 = arith.constant 0 : index
    %c0_0 = arith.constant 0 : index
    %0 = vector.load %arg1[%c0, %c0_0] : memref<8x4096xbf16, #tpu.memory_space<vmem>>, vector<8x4096xbf16>
    %c0_1 = arith.constant 0 : index
    %c0_2 = arith.constant 0 : index
    %1 = vector.load %arg2[%c0_1, %c0_2] : memref<4096x256xbf16, #tpu.memory_space<vmem>>, vector<4096x256xbf16>
    %cst = arith.constant dense<0.000000e+00> : vector<8x256xf32>
    %2 = tpu.matmul %0, %1, %cst {dimension_numbers = #tpu.dot_dimension_numbers<[1], [0], [0], [1], [0, 0, 1, 1], [], []>} : vector<8x4096xbf16>, vector<4096x256xbf16>, vector<8x256xf32> -> vector<8x256xf32>
    %c0_3 = arith.constant 0 : index
    %c0_4 = arith.constant 0 : index
    %3 = vector.load %arg3[%c0_3, %c0_4] : memref<1x256xf32, #tpu.memory_space<vmem>>, vector<1x256xf32>
    %4 = vector.broadcast %3 : vector<1x256xf32> to vector<8x256xf32>
    %5 = arith.addf %2, %4 : vector<8x256xf32>
    %cst_5 = arith.constant 0.000000e+00 : f32
    %6 = vector.broadcast %cst_5 : f32 to vector<8x256xf32>
    %7 = arith.maximumf %5, %6 : vector<8x256xf32>
    %8 = arith.truncf %7 : vector<8x256xf32> to vector<8x256xbf16>
    %c0_6 = arith.constant 0 : index
    %c0_7 = arith.constant 0 : index
    %9 = vector.load %arg4[%c0_6, %c0_7] : memref<256x128xbf16, #tpu.memory_space<vmem>>, vector<256x128xbf16>
    %cst_8 = arith.constant dense<0.000000e+00> : vector<8x128xf32>
    %10 = tpu.matmul %8, %9, %cst_8 {dimension_numbers = #tpu.dot_dimension_numbers<[1], [0], [0], [1], [0, 0, 1, 1], [], []>} : vector<8x256xbf16>, vector<256x128xbf16>, vector<8x128xf32> -> vector<8x128xf32>
    %c0_9 = arith.constant 0 : index
    %c0_10 = arith.constant 0 : index
    %11 = vector.load %arg5[%c0_9, %c0_10] : memref<1x128xf32, #tpu.memory_space<vmem>>, vector<1x128xf32>
    %12 = vector.broadcast %11 : vector<1x128xf32> to vector<8x128xf32>
    %13 = arith.addf %10, %12 : vector<8x128xf32>
    %c0_11 = arith.constant 0 : index
    %c0_12 = arith.constant 0 : index
    %14 = vector.load %arg6[%c0_11, %c0_12] : memref<8x128xf32, #tpu.memory_space<vmem>>, vector<8x128xf32>
    tpu.vector_store %arg6[%c0_11, %c0_12], %13 {strides = array<i32>} : memref<8x128xf32, #tpu.memory_space<vmem>>, vector<8x128xf32>,
    return
  }
  func.func @transform_0(%arg0: i32) -> (i32, i32) {
    %c0_i32 = arith.constant 0 : i32
    %c0_i32_0 = arith.constant 0 : i32
    return %arg0, %c0_i32 : i32, i32
  }
  func.func @transform_1(%arg0: i32) -> (i32, i32) {
    %c0_i32 = arith.constant 0 : i32
    %c0_i32_0 = arith.constant 0 : i32
    %c0_i32_1 = arith.constant 0 : i32
    return %c0_i32, %c0_i32_0 : i32, i32
  }
  func.func @transform_2(%arg0: i32) -> (i32, i32) {
    %c0_i32 = arith.constant 0 : i32
    %c0_i32_0 = arith.constant 0 : i32
    %c0_i32_1 = arith.constant 0 : i32
    return %c0_i32, %c0_i32_0 : i32, i32
  }
  func.func @transform_3(%arg0: i32) -> (i32, i32) {
    %c0_i32 = arith.constant 0 : i32
    %c0_i32_0 = arith.constant 0 : i32
    %c0_i32_1 = arith.constant 0 : i32
    return %c0_i32, %c0_i32_0 : i32, i32
  }
  func.func @transform_4(%arg0: i32) -> (i32, i32) {
    %c0_i32 = arith.constant 0 : i32
    %c0_i32_0 = arith.constant 0 : i32
    %c0_i32_1 = arith.constant 0 : i32
    return %c0_i32, %c0_i32_0 : i32, i32
  }
  func.func @transform_5(%arg0: i32) -> (i32, i32) {
    %c0_i32 = arith.constant 0 : i32
    %c0_i32_0 = arith.constant 0 : i32
    return %arg0, %c0_i32 : i32, i32
  }
}

</mosaic_0001>

<llo_original>
// kernel: q_network2_forward.2
$region0: #{q_network2_forward.2}
  #allocation0 [shape = 'u32[]', space=smem, size = 0x4, offset = 0x4, fixed_abs, tag = 'smem constant byte address 0x4 - core index']
  #allocation1 [shape = 'u32[144,128]{1,0:T(1,128)}', space=vmem, size = 0x12000, scoped, tag = 'internal scratch']
  #allocation2 [shape = 'f32[64,160]{1,0:T(8,128)}', space=vmem, size = 0x10000, scoped, tag = 'scratch operand']
  %s0 = inlined_call_operand.vmem [shape: f32[2,256,192], index: 0, kind: input, shape index: {}]
  %s1 = inlined_call_operand.vmem [shape: f32[4,16,256], index: 1, kind: input, shape index: {}]
  %s2 = inlined_call_operand.vmem [shape: f32[16,1], index: 2, kind: input, shape index: {}]
  %s3 = inlined_call_operand.vmem [shape: f32[4,32,64], index: 3, kind: input, shape index: {}]
  %s4 = inlined_call_operand.vmem [shape: f32[32,1], index: 4, kind: input, shape index: {}]
  %s5 = inlined_call_operand.vmem [shape: bf16[2,32,128], index: 5, kind: output, shape index: {}]
  %s6 = sld [smem:[#allocation0]]
  $region53: #{q_network2_forward.2} parent=0
    _
  %s8 = ssub.s32 1, %s6
  %s9 = scalar_select 0, %s8, %s6
  loop: start=0, step=1, limit=4
  $region2: #{q_network2_forward.2} parent=0 // loop_pre_header
    _
  $region3: #{q_network2_forward.2} parent=0 // loop_header
    %s11 = sphi 0, %s15
    %p12 = scmp.ge.s32.totalorder %s11, 4
    %s21 = sphi 0, %s23
    %s24 = sphi 0, %s21
    %s25 = sphi 0, %s24
    %s41 = sphi 0, %s25
    %s45 = sphi 0, %s45
    %s47 = sphi 0, %s45
    %s48 = sphi 0, %s47
    %s62 = sphi 0, %s48
    %s66 = sphi 0, %s66
    %s68 = sphi 0, %s66
    %s69 = sphi 0, %s68
    %s83 = sphi 0, %s69
    %s87 = sphi 0, %s87
    %s89 = sphi 0, %s87
    %s90 = sphi 0, %s89
    %s104 = sphi 0, %s90
    %s108 = sphi 0, %s108
    %s110 = sphi 0, %s108
    %s111 = sphi 0, %s110
    %s125 = sphi 0, %s111
    %s131 = sphi 0, %s133
    %s134 = sphi 0, %s131
    %s135 = sphi 0, %s134
    %s151 = sphi 0, %s135
  $region4: #{q_network2_forward.2} parent=0 // loop_header_branch
    %14 = sbr.rel (%p12) target = $region8
  $region5: #{q_network2_forward.2} parent=0 // loop_body
    %s16 = ssub.s32 %s11, 1
    %s17 = ssub.s32 %s11, 2
    %s18 = sadd.s32 %s11, 1
    %s19 = ssub.s32 %s11, %s18
    %p20 = scmp.eq.s32.totalorder %s19, 0
    %s22 = sadd.s32 %s21, 1
    %s23 = scalar_select %p20, %s21, %s22
    %p26 = pneg %p20
    %p27 = scmp.eq.s32.totalorder %s11, 1
    %p28 = por %p26, %p27
    %p29 = scmp.ne.s32.totalorder %s21, %s24
    %p30 = scmp.eq.s32.totalorder %s11, 0
    %p31 = por %p29, %p30
    %p32 = scmp.ne.s32.totalorder %s21, %s24
    %p33 = scmp.eq.s32.totalorder %s16, 1
    %p34 = por %p32, %p33
    %p35 = scmp.ne.s32.totalorder %s24, %s25
    %p36 = scmp.eq.s32.totalorder %s16, 0
    %p37 = por %p35, %p36
    %p38 = scmp.ne.s32.totalorder %s24, %s25
    %p39 = scmp.eq.s32.totalorder %s17, 1
    %p40 = por %p38, %p39
    %p42 = scmp.ne.s32.totalorder %s25, %s41
    %p43 = scmp.eq.s32.totalorder %s17, 0
    %p44 = por %p42, %p43
    %s46 = sadd.s32 %s45, 1
    %p49 = scmp.eq.s32.totalorder %s11, 1
    %p50 = scmp.ne.s32.totalorder %s45, %s47
    %p51 = scmp.eq.s32.totalorder %s11, 0
    %p52 = por %p50, %p51
    %p53 = scmp.ne.s32.totalorder %s45, %s47
    %p54 = scmp.eq.s32.totalorder %s16, 1
    %p55 = por %p53, %p54
    %p56 = scmp.ne.s32.totalorder %s47, %s48
    %p57 = scmp.eq.s32.totalorder %s16, 0
    %p58 = por %p56, %p57
    %p59 = scmp.ne.s32.totalorder %s47, %s48
    %p60 = scmp.eq.s32.totalorder %s17, 1
    %p61 = por %p59, %p60
    %p63 = scmp.ne.s32.totalorder %s48, %s62
    %p64 = scmp.eq.s32.totalorder %s17, 0
    %p65 = por %p63, %p64
    %s67 = sadd.s32 %s66, 1
    %p70 = scmp.eq.s32.totalorder %s11, 1
    %p71 = scmp.ne.s32.totalorder %s66, %s68
    %p72 = scmp.eq.s32.totalorder %s11, 0
    %p73 = por %p71, %p72
    %p74 = scmp.ne.s32.totalorder %s66, %s68
    %p75 = scmp.eq.s32.totalorder %s16, 1
    %p76 = por %p74, %p75
    %p77 = scmp.ne.s32.totalorder %s68, %s69
    %p78 = scmp.eq.s32.totalorder %s16, 0
    %p79 = por %p77, %p78
    %p80 = scmp.ne.s32.totalorder %s68, %s69
    %p81 = scmp.eq.s32.totalorder %s17, 1
    %p82 = por %p80, %p81
    %p84 = scmp.ne.s32.totalorder %s69, %s83
    %p85 = scmp.eq.s32.totalorder %s17, 0
    %p86 = por %p84, %p85
    %s88 = sadd.s32 %s87, 1
    %p91 = scmp.eq.s32.totalorder %s11, 1
    %p92 = scmp.ne.s32.totalorder %s87, %s89
    %p93 = scmp.eq.s32.totalorder %s11, 0
    %p94 = por %p92, %p93
    %p95 = scmp.ne.s32.totalorder %s87, %s89
    %p96 = scmp.eq.s32.totalorder %s16, 1
    %p97 = por %p95, %p96
    %p98 = scmp.ne.s32.totalorder %s89, %s90
    %p99 = scmp.eq.s32.totalorder %s16, 0
    %p100 = por %p98, %p99
    %p101 = scmp.ne.s32.totalorder %s89, %s90
    %p102 = scmp.eq.s32.totalorder %s17, 1
    %p103 = por %p101, %p102
    %p105 = scmp.ne.s32.totalorder %s90, %s104
    %p106 = scmp.eq.s32.totalorder %s17, 0
    %p107 = por %p105, %p106
    %s109 = sadd.s32 %s108, 1
    %p112 = scmp.eq.s32.totalorder %s11, 1
    %p113 = scmp.ne.s32.totalorder %s108, %s110
    %p114 = scmp.eq.s32.totalorder %s11, 0
    %p115 = por %p113, %p114
    %p116 = scmp.ne.s32.totalorder %s108, %s110
    %p117 = scmp.eq.s32.totalorder %s16, 1
    %p118 = por %p116, %p117
    %p119 = scmp.ne.s32.totalorder %s110, %s111
    %p120 = scmp.eq.s32.totalorder %s16, 0
    %p121 = por %p119, %p120
    %p122 = scmp.ne.s32.totalorder %s110, %s111
    %p123 = scmp.eq.s32.totalorder %s17, 1
    %p124 = por %p122, %p123
    %p126 = scmp.ne.s32.totalorder %s111, %s125
    %p127 = scmp.eq.s32.totalorder %s17, 0
    %p128 = por %p126, %p127
    %s129 = ssub.s32 %s11, %s18
    %p130 = scmp.eq.s32.totalorder %s129, 0
    %s132 = sadd.s32 %s131, 1
    %s133 = scalar_select %p130, %s131, %s132
    %p136 = pneg %p130
    %p137 = scmp.eq.s32.totalorder %s11, 1
    %p138 = por %p136, %p137
    %p139 = scmp.ne.s32.totalorder %s131, %s134
    %p140 = scmp.eq.s32.totalorder %s11, 0
    %p141 = por %p139, %p140
    %p142 = scmp.ne.s32.totalorder %s131, %s134
    %p143 = scmp.eq.s32.totalorder %s16, 1
    %p144 = por %p142, %p143
    %p145 = scmp.ne.s32.totalorder %s134, %s135
    %p146 = scmp.eq.s32.totalorder %s16, 0
    %p147 = por %p145, %p146
    %p148 = scmp.ne.s32.totalorder %s134, %s135
    %p149 = scmp.eq.s32.totalorder %s17, 1
    %p150 = por %p148, %p149
    %p152 = scmp.ne.s32.totalorder %s135, %s151
    %p153 = scmp.eq.s32.totalorder %s17, 0
    %p154 = por %p152, %p153
    %p155 = scmp.le.s32.totalorder 1, %s11
    %p156 = scmp.lt.s32.totalorder %s11, 3
    %p157 = pnand %p155, %p156
    %p158 = pneg %p157
    // Predicated region
    $region9: #{q_network2_forward.2} parent=5 // pred_check
      _
    $region10: #{q_network2_forward.2} parent=5 // pred_check_branch
      %160 = sbr.rel (%p157) target = $region12
    $region11: #{q_network2_forward.2} parent=5 // pred_region
      %s161 = ssub.s32 %s11, 1
      // Predicated region
      $region13: #{q_network2_forward.2} parent=11 // pred_check
        %p162 = pneg %p58
      $region14: #{q_network2_forward.2} parent=11 // pred_check_branch
        %164 = sbr.rel (%p162) target = $region16
      $region15: #{q_network2_forward.2} parent=11 // pred_region
        _
      $region16: #{q_network2_forward.2} parent=11 // pred_fallthru
        _
      // Predicated region
      $region17: #{q_network2_forward.2} parent=11 // pred_check
        %p165 = pneg %p79
      $region18: #{q_network2_forward.2} parent=11 // pred_check_branch
        %167 = sbr.rel (%p165) target = $region20
      $region19: #{q_network2_forward.2} parent=11 // pred_region
        _
      $region20: #{q_network2_forward.2} parent=11 // pred_fallthru
        _
      // Predicated region
      $region21: #{q_network2_forward.2} parent=11 // pred_check
        %p168 = pneg %p100
      $region22: #{q_network2_forward.2} parent=11 // pred_check_branch
        %170 = sbr.rel (%p168) target = $region24
      $region23: #{q_network2_forward.2} parent=11 // pred_region
        _
      $region24: #{q_network2_forward.2} parent=11 // pred_fallthru
        _
      // Predicated region
      $region25: #{q_network2_forward.2} parent=11 // pred_check
        %p171 = pneg %p121
      $region26: #{q_network2_forward.2} parent=11 // pred_check_branch
        %173 = sbr.rel (%p171) target = $region28
      $region27: #{q_network2_forward.2} parent=11 // pred_region
        _
      $region28: #{q_network2_forward.2} parent=11 // pred_fallthru
        _
    $region12: #{q_network2_forward.2} parent=5 // pred_fallthru
      _
    %p174 = scmp.lt.s32.totalorder %s11, 2
    // Predicated region
    $region29: #{q_network2_forward.2} parent=5 // pred_check
      %p175 = pneg %p174
    $region30: #{q_network2_forward.2} parent=5 // pred_check_branch
      %177 = sbr.rel (%p175) target = $region32
    $region31: #{q_network2_forward.2} parent=5 // pred_region
      // Predicated region
      $region33: #{q_network2_forward.2} parent=31 // pred_check
        %p178 = pneg %p31
      $region34: #{q_network2_forward.2} parent=31 // pred_check_branch
        %180 = sbr.rel (%p178) target = $region36
      $region35: #{q_network2_forward.2} parent=31 // pred_region
        %p181 = scmp.lt.s32.totalorder %s11, 1
        %s182 = scalar_select %p181, %s11, 1
        %s183 = smul.addr %s182, 64
        %s184 = smul.addr %s183, 8
        %s185 = scalar_lea.vmem %s0, %s184
      $region36: #{q_network2_forward.2} parent=31 // pred_fallthru
        _
    $region32: #{q_network2_forward.2} parent=5 // pred_fallthru
      _
    %p186 = scmp.le.s32.totalorder 1, %s11
    %p187 = scmp.lt.s32.totalorder %s11, 3
    %p188 = pnand %p186, %p187
    %p189 = pneg %p188
    // Predicated region
    $region37: #{q_network2_forward.2} parent=5 // pred_check
      _
    $region38: #{q_network2_forward.2} parent=5 // pred_check_branch
      %191 = sbr.rel (%p188) target = $region40
    $region39: #{q_network2_forward.2} parent=5 // pred_region
      %s192 = ssub.s32 %s11, 1
      %p193 = scmp.lt.s32.totalorder %s16, 1
      %s194 = scalar_select %p193, %s16, 1
      %s195 = smul.addr %s194, 64
      %s196 = smul.addr %s195, 8
      %s197 = scalar_lea.vmem %s0, %s196
      %p198 = pneg %p37
      %p199 = pneg %p34
      %p200 = pneg %p58
      %p201 = pneg %p55
      %p202 = pneg %p79
      %p203 = pneg %p76
      %p204 = pneg %p100
      %p205 = pneg %p97
      %p206 = pneg %p121
      %p207 = pneg %p118
      %p208 = pneg %p147
      %p209 = pneg %p144
      %p210 = scmp.lt.s32.totalorder %s16, 1
      %s211 = scalar_select %p210, %s16, 1
      %s212 = smul.addr %s211, 4
      %s213 = smul.addr %s212, 4
      %s214 = scalar_lea.vmem %s5, %s213
      %p215 = scmp.lt.s32.totalorder %s16, 1
      %s216 = scalar_select %p215, %s16, 1
      %s217 = smul.addr %s216, 64
      %s218 = smul.addr %s217, 8
      %s219 = scalar_lea.vmem %s0, %s218
      %p220 = scmp.lt.s32.totalorder %s16, 1
      %s221 = scalar_select %p220, %s16, 1
      %s222 = smul.addr %s221, 4
      %s223 = smul.addr %s222, 4
      %s224 = scalar_lea.vmem %s5, %s223
      %v225 = vld [vmem:[%s1] sm:$0xff]
      %v226 = vld [vmem:[%s1 + $0x8] sm:$0xff]
      %v227 = vld [vmem:[%s1 + $0x10] sm:$0xff]
      %v228 = vld [vmem:[%s1 + $0x18] sm:$0xff]
      %v229 = vld [vmem:[%s219] sm:$0xff]
      %v230 = vld [vmem:[%s219 + $0x8] sm:$0xff]
      %v231 = vld [vmem:[%s219 + $0x10] sm:$0xff]
      %v232 = vld [vmem:[%s219 + $0x18] sm:$0xff]
      %v233 = vld [vmem:[%s219 + $0x20] sm:$0xff]
      %v234 = vld [vmem:[%s219 + $0x28] sm:$0xff]
      %v235 = vld [vmem:[%s219 + $0x30] sm:$0xff]
      %v236 = vld [vmem:[%s219 + $0x38] sm:$0xff]
      %v237 = vld [vmem:[%s219 + $0x40] sm:$0xff]
      %v238 = vld [vmem:[%s219 + $0x48] sm:$0xff]
      %v239 = vld [vmem:[%s219 + $0x50] sm:$0xff]
      %v240 = vld [vmem:[%s219 + $0x58] sm:$0xff]
      %v241 = vld [vmem:[%s219 + $0x60] sm:$0xff]
      %v242 = vld [vmem:[%s219 + $0x68] sm:$0xff]
      %v243 = vld [vmem:[%s219 + $0x70] sm:$0xff]
      %v244 = vld [vmem:[%s219 + $0x78] sm:$0xff]
      %v245 = vld [vmem:[%s219 + $0x80] sm:$0xff]
      %v246 = vld [vmem:[%s219 + $0x88] sm:$0xff]
      %v247 = vld [vmem:[%s219 + $0x90] sm:$0xff]
      %v248 = vld [vmem:[%s219 + $0x98] sm:$0xff]
      %v249 = vld [vmem:[%s219 + $0xa0] sm:$0xff]
      %v250 = vld [vmem:[%s219 + $0xa8] sm:$0xff]
      %v251 = vld [vmem:[%s219 + $0xb0] sm:$0xff]
      %v252 = vld [vmem:[%s219 + $0xb8] sm:$0xff]
      %v253 = vld [vmem:[%s219 + $0xc0] sm:$0xff]
      %v254 = vld [vmem:[%s219 + $0xc8] sm:$0xff]
      %v255 = vld [vmem:[%s219 + $0xd0] sm:$0xff]
      %v256 = vld [vmem:[%s219 + $0xd8] sm:$0xff]
      %v257 = vld [vmem:[%s219 + $0xe0] sm:$0xff]
      %v258 = vld [vmem:[%s219 + $0xe8] sm:$0xff]
      %v259 = vld [vmem:[%s219 + $0xf0] sm:$0xff]
      %v260 = vld [vmem:[%s219 + $0xf8] sm:$0xff]
      %v261 = vld [vmem:[%s219 + $0x100] sm:$0xff]
      %v262 = vld [vmem:[%s219 + $0x108] sm:$0xff]
      %v263 = vld [vmem:[%s219 + $0x110] sm:$0xff]
      %v264 = vld [vmem:[%s219 + $0x118] sm:$0xff]
      %v265 = vld [vmem:[%s219 + $0x120] sm:$0xff]
      %v266 = vld [vmem:[%s219 + $0x128] sm:$0xff]
      %v267 = vld [vmem:[%s219 + $0x130] sm:$0xff]
      %v268 = vld [vmem:[%s219 + $0x138] sm:$0xff]
      %v269 = vld [vmem:[%s219 + $0x140] sm:$0xff]
      %v270 = vld [vmem:[%s219 + $0x148] sm:$0xff]
      %v271 = vld [vmem:[%s219 + $0x150] sm:$0xff]
      %v272 = vld [vmem:[%s219 + $0x158] sm:$0xff]
      %v273 = vld [vmem:[%s219 + $0x160] sm:$0xff]
      %v274 = vld [vmem:[%s219 + $0x168] sm:$0xff]
      %v275 = vld [vmem:[%s219 + $0x170] sm:$0xff]
      %v276 = vld [vmem:[%s219 + $0x178] sm:$0xff]
      %v277 = vld [vmem:[%s219 + $0x180] sm:$0xff]
      %v278 = vld [vmem:[%s219 + $0x188] sm:$0xff]
      %v279 = vld [vmem:[%s219 + $0x190] sm:$0xff]
      %v280 = vld [vmem:[%s219 + $0x198] sm:$0xff]
      %v281 = vld [vmem:[%s219 + $0x1a0] sm:$0xff]
      %v282 = vld [vmem:[%s219 + $0x1a8] sm:$0xff]
      %v283 = vld [vmem:[%s219 + $0x1b0] sm:$0xff]
      %v284 = vld [vmem:[%s219 + $0x1b8] sm:$0xff]
      %v285 = vld [vmem:[%s219 + $0x1c0] sm:$0xff]
      %v286 = vld [vmem:[%s219 + $0x1c8] sm:$0xff]
      %v287 = vld [vmem:[%s219 + $0x1d0] sm:$0xff]
      %v288 = vld [vmem:[%s219 + $0x1d8] sm:$0xff]
      %v289 = vld [vmem:[%s219 + $0x1e0] sm:$0xff]
      %v290 = vld [vmem:[%s219 + $0x1e8] sm:$0xff]
      %v291 = vld [vmem:[%s219 + $0x1f0] sm:$0xff]
      %v292 = vld [vmem:[%s219 + $0x1f8] sm:$0xff]
      %293 = vmatprep.subr.mxu0 %v230
      %294 = vmatpush1.msra.mxu0 %v229
      %295 = vmatprep.subr.mxu0 %v232
      %296 = vmatpush1.msra.mxu0 %v231
      %297 = vmatprep.subr.mxu0 %v234
      %298 = vmatpush1.msra.mxu0 %v233
      %299 = vmatprep.subr.mxu0 %v236
      %300 = vmatpush1.msra.mxu0 %v235
      %301 = vmatprep.subr.mxu0 %v238
      %302 = vmatpush1.msra.mxu0 %v237
      %303 = vmatprep.subr.mxu0 %v240
      %304 = vmatpush1.msra.mxu0 %v239
      %305 = vmatprep.subr.mxu0 %v242
      %306 = vmatpush1.msra.mxu0 %v241
      %307 = vmatprep.subr.mxu0 %v244
      %308 = vmatpush1.msra.mxu0 %v243
      %309 = vmatprep.subr.mxu0 %v246
      %310 = vmatpush1.msra.mxu0 %v245
      %311 = vmatprep.subr.mxu0 %v248
      %312 = vmatpush1.msra.mxu0 %v247
      %313 = vmatprep.subr.mxu0 %v250
      %314 = vmatpush1.msra.mxu0 %v249
      %315 = vmatprep.subr.mxu0 %v252
      %316 = vmatpush1.msra.mxu0 %v251
      %317 = vmatprep.subr.mxu0 %v254
      %318 = vmatpush1.msra.mxu0 %v253
      %319 = vmatprep.subr.mxu0 %v256
      %320 = vmatpush1.msra.mxu0 %v255
      %321 = vmatprep.subr.mxu0 %v258
      %322 = vmatpush1.msra.mxu0 %v257
      %323 = vmatprep.subr.mxu0 %v260
      %324 = vmatpush1.msra.mxu0 %v259
      %325 = vmatprep.subr.mxu0 %v262
      %326 = vmatpush1.msra.mxu0 %v261
      %327 = vmatprep.subr.mxu0 %v264
      %328 = vmatpush1.msra.mxu0 %v263
      %329 = vmatprep.subr.mxu0 %v266
      %330 = vmatpush1.msra.mxu0 %v265
      %331 = vmatprep.subr.mxu0 %v268
      %332 = vmatpush1.msra.mxu0 %v267
      %333 = vmatprep.subr.mxu0 %v270
      %334 = vmatpush1.msra.mxu0 %v269
      %335 = vmatprep.subr.mxu0 %v272
      %336 = vmatpush1.msra.mxu0 %v271
      %337 = vmatprep.subr.mxu0 %v274
      %338 = vmatpush1.msra.mxu0 %v273
      %339 = vmatprep.subr.mxu0 %v276
      %340 = vmatpush1.msra.mxu0 %v275
      %341 = vmatprep.subr.mxu0 %v278
      %342 = vmatpush1.msra.mxu0 %v277
      %343 = vmatprep.subr.mxu0 %v280
      %344 = vmatpush1.msra.mxu0 %v279
      %345 = vmatprep.subr.mxu0 %v282
      %346 = vmatpush1.msra.mxu0 %v281
      %347 = vmatprep.subr.mxu0 %v284
      %348 = vmatpush1.msra.mxu0 %v283
      %349 = vmatprep.subr.mxu0 %v286
      %350 = vmatpush1.msra.mxu0 %v285
      %351 = vmatprep.subr.mxu0 %v288
      %352 = vmatpush1.msra.mxu0 %v287
      %353 = vmatprep.subr.mxu0 %v290
      %354 = vmatpush1.msra.mxu0 %v289
      %355 = vmatprep.subr.mxu0 %v292
      %356 = vmatpush1.msra.mxu0 %v291
      %357 = vmatprep.mubr.f32.mxu0 %v226
      %358 = vmatmul.mubr.f32.gmra.mrb[0].mxu0 %v225
      %v359 = vpop.f32.mrb[0].mxu0
      %v360 = vadd.f32 0.0, %v359
      %v361 = vpop.f32.mrb[0].mxu0
      %v362 = vadd.f32 0.0, %v361
      %363 = vmatprep.mubr.f32.mxu0 %v228
      %364 = vmatmul.mubr.f32.gmra.mrb[0].mxu0 %v227
      %v365 = vpop.f32.mrb[0].mxu0
      %v366 = vadd.f32 0.0, %v365
      %v367 = vpop.f32.mrb[0].mxu0
      %v368 = vadd.f32 0.0, %v367
      %369 = vdwg.mxu0
      %v370 = vld [vmem:[%s2] sm:$0xff]
      %v371 = vld [vmem:[%s2 + $0x8] sm:$0xff]
      %373 = vset.pattern.permute.xlu0 0
      %374 = vperm.xlu0 %373, %v370
      %v375 = vpop.permute.xlu0 %374
      %378 = vset.pattern.permute.xlu0 0
      %379 = vperm.xlu0 %378, %v371
      %v380 = vpop.permute.xlu0 %379
      %v382 = vadd.f32 %v360, %v375
      %v383 = vadd.f32 %v362, %v375
      %v384 = vadd.f32 %v366, %v380
      %v385 = vadd.f32 %v368, %v380
      %v386 = vmax.f32 %v382, 0.0
      %v387 = vmax.f32 %v383, 0.0
      %v388 = vmax.f32 %v384, 0.0
      %v389 = vmax.f32 %v385, 0.0
      %390 = vst [vmem:[#allocation2] sm:$0xff] %v386
      %vm391 = vcmask 261120
      %392 = vst.msk [vmem:[#allocation2 + $0x8] sm:$0xff] %vm391, %v387
      %393 = vst [vmem:[#allocation2 + $0x10] sm:$0xff] %v388
      %394 = vst.msk [vmem:[#allocation2 + $0x18] sm:$0xff] %vm391, %v389
      %s395 = scalar_lea.vmem %s1, 32
      %v396 = vld [vmem:[%s395] sm:$0xff]
      %v397 = vld [vmem:[%s395 + $0x10] sm:$0xff]
      %v398 = vld [vmem:[%s219] sm:$0xff]
      %v399 = vld [vmem:[%s219 + $0x8] sm:$0xff]
      %v400 = vld [vmem:[%s219 + $0x10] sm:$0xff]
      %v401 = vld [vmem:[%s219 + $0x18] sm:$0xff]
      %v402 = vld [vmem:[%s219 + $0x20] sm:$0xff]
      %v403 = vld [vmem:[%s219 + $0x28] sm:$0xff]
      %v404 = vld [vmem:[%s219 + $0x30] sm:$0xff]
      %v405 = vld [vmem:[%s219 + $0x38] sm:$0xff]
      %v406 = vld [vmem:[%s219 + $0x40] sm:$0xff]
      %v407 = vld [vmem:[%s219 + $0x48] sm:$0xff]
      %v408 = vld [vmem:[%s219 + $0x50] sm:$0xff]
      %v409 = vld [vmem:[%s219 + $0x58] sm:$0xff]
      %v410 = vld [vmem:[%s219 + $0x60] sm:$0xff]
      %v411 = vld [vmem:[%s219 + $0x68] sm:$0xff]
      %v412 = vld [vmem:[%s219 + $0x70] sm:$0xff]
      %v413 = vld [vmem:[%s219 + $0x78] sm:$0xff]
      %vm414 = vcmask 523264
      %v416 = vsel %vm414, %v396, 0
      %v419 = vsel %vm414, %v397, 0
      %421 = vmatprep.subr.mxu0 %v399
      %422 = vmatpush1.msra.mxu0 %v398
      %423 = vmatprep.subr.mxu0 %v401
      %424 = vmatpush1.msra.mxu0 %v400
      %425 = vmatprep.subr.mxu0 %v403
      %426 = vmatpush1.msra.mxu0 %v402
      %427 = vmatprep.subr.mxu0 %v405
      %428 = vmatpush1.msra.mxu0 %v404
      %429 = vmatprep.subr.mxu0 %v407
      %430 = vmatpush1.msra.mxu0 %v406
      %431 = vmatprep.subr.mxu0 %v409
      %432 = vmatpush1.msra.mxu0 %v408
      %433 = vmatprep.subr.mxu0 %v411
      %434 = vmatpush1.msra.mxu0 %v410
      %435 = vmatprep.subr.mxu0 %v413
      %436 = vmatpush1.msra.mxu0 %v412
      %437 = vmatprep.subr.mxu0 0.0
      %438 = vmatpush1.msra.mxu0 0.0
      %439 = vmatprep.subr.mxu0 0.0
      %440 = vmatpush1.msra.mxu0 0.0
      %441 = vmatprep.subr.mxu0 0.0
      %442 = vmatpush1.msra.mxu0 0.0
      %443 = vmatprep.subr.mxu0 0.0
      %444 = vmatpush1.msra.mxu0 0.0
      %445 = vmatprep.subr.mxu0 0.0
      %446 = vmatpush1.msra.mxu0 0.0
      %447 = vmatprep.subr.mxu0 0.0
      %448 = vmatpush1.msra.mxu0 0.0
      %449 = vmatprep.subr.mxu0 0.0
      %450 = vmatpush1.msra.mxu0 0.0
      %451 = vmatprep.subr.mxu0 0.0
      %452 = vmatpush1.msra.mxu0 0.0
      %453 = vmatprep.subr.mxu0 0.0
      %454 = vmatpush1.msra.mxu0 0.0
      %455 = vmatprep.subr.mxu0 0.0
      %456 = vmatpush1.msra.mxu0 0.0
      %457 = vmatprep.subr.mxu0 0.0
      %458 = vmatpush1.msra.mxu0 0.0
      %459 = vmatprep.subr.mxu0 0.0
      %460 = vmatpush1.msra.mxu0 0.0
      %461 = vmatprep.subr.mxu0 0.0
      %462 = vmatpush1.msra.mxu0 0.0
      %463 = vmatprep.subr.mxu0 0.0
      %464 = vmatpush1.msra.mxu0 0.0
      %465 = vmatprep.subr.mxu0 0.0
      %466 = vmatpush1.msra.mxu0 0.0
      %467 = vmatprep.subr.mxu0 0.0
      %468 = vmatpush1.msra.mxu0 0.0
      %469 = vmatprep.subr.mxu0 0.0
      %470 = vmatpush1.msra.mxu0 0.0
      %471 = vmatprep.subr.mxu0 0.0
      %472 = vmatpush1.msra.mxu0 0.0
      %473 = vmatprep.subr.mxu0 0.0
      %474 = vmatpush1.msra.mxu0 0.0
      %475 = vmatprep.subr.mxu0 0.0
      %476 = vmatpush1.msra.mxu0 0.0
      %477 = vmatprep.subr.mxu0 0.0
      %478 = vmatpush1.msra.mxu0 0.0
      %479 = vmatprep.subr.mxu0 0.0
      %480 = vmatpush1.msra.mxu0 0.0
      %481 = vmatprep.subr.mxu0 0.0
      %482 = vmatpush1.msra.mxu0 0.0
      %483 = vmatprep.subr.mxu0 0.0
      %484 = vmatpush1.msra.mxu0 0.0
      %485 = vmatprep.mubr.f32.mxu0 0.0
      %486 = vmatmul.mubr.f32.gmra.mrb[0].mxu0 %v416
      %v487 = vpop.f32.mrb[0].mxu0
      %v488 = vadd.f32 0.0, %v487
      %v489 = vpop.f32.mrb[0].mxu0
      %v490 = vadd.f32 0.0, %v489
      %491 = vmatprep.mubr.f32.mxu0 0.0
      %492 = vmatmul.mubr.f32.gmra.mrb[0].mxu0 %v419
      %v493 = vpop.f32.mrb[0].mxu0
      %v494 = vadd.f32 0.0, %v493
      %v495 = vpop.f32.mrb[0].mxu0
      %v496 = vadd.f32 0.0, %v495
      %497 = vdwg.mxu0
      %v498 = vld [vmem:[%s219 + $0x80] sm:$0xff]
      %v499 = vld [vmem:[%s219 + $0x88] sm:$0xff]
      %v500 = vld [vmem:[%s219 + $0x90] sm:$0xff]
      %v501 = vld [vmem:[%s219 + $0x98] sm:$0xff]
      %v502 = vld [vmem:[%s219 + $0xa0] sm:$0xff]
      %v503 = vld [vmem:[%s219 + $0xa8] sm:$0xff]
      %v504 = vld [vmem:[%s219 + $0xb0] sm:$0xff]
      %v505 = vld [vmem:[%s219 + $0xb8] sm:$0xff]
      %v506 = vld [vmem:[%s219 + $0xc0] sm:$0xff]
      %v507 = vld [vmem:[%s219 + $0xc8] sm:$0xff]
      %v508 = vld [vmem:[%s219 + $0xd0] sm:$0xff]
      %v509 = vld [vmem:[%s219 + $0xd8] sm:$0xff]
      %v510 = vld [vmem:[%s219 + $0xe0] sm:$0xff]
      %v511 = vld [vmem:[%s219 + $0xe8] sm:$0xff]
      %v512 = vld [vmem:[%s219 + $0xf0] sm:$0xff]
      %v513 = vld [vmem:[%s219 + $0xf8] sm:$0xff]
      %514 = vrot.lane.b32.xlu0 %v396, 64
      %v515 = vpop.permute.xlu0 %514
      %516 = vrot.lane.b32.xlu0 %v397, 64
      %v517 = vpop.permute.xlu0 %516
      %v518 = vsel %vm414, %v515, 0
      %v520 = vsel %vm414, %v517, 0
      %522 = vmatprep.subr.mxu0 %v499
      %523 = vmatpush1.msra.mxu0 %v498
      %524 = vmatprep.subr.mxu0 %v501
      %525 = vmatpush1.msra.mxu0 %v500
      %526 = vmatprep.subr.mxu0 %v503
      %527 = vmatpush1.msra.mxu0 %v502
      %528 = vmatprep.subr.mxu0 %v505
      %529 = vmatpush1.msra.mxu0 %v504
      %530 = vmatprep.subr.mxu0 %v507
      %531 = vmatpush1.msra.mxu0 %v506
      %532 = vmatprep.subr.mxu0 %v509
      %533 = vmatpush1.msra.mxu0 %v508
      %534 = vmatprep.subr.mxu0 %v511
      %535 = vmatpush1.msra.mxu0 %v510
      %536 = vmatprep.subr.mxu0 %v513
      %537 = vmatpush1.msra.mxu0 %v512
      %538 = vmatprep.subr.mxu0 0.0
      %539 = vmatpush1.msra.mxu0 0.0
      %540 = vmatprep.subr.mxu0 0.0
      %541 = vmatpush1.msra.mxu0 0.0
      %542 = vmatprep.subr.mxu0 0.0
      %543 = vmatpush1.msra.mxu0 0.0
      %544 = vmatprep.subr.mxu0 0.0
      %545 = vmatpush1.msra.mxu0 0.0
      %546 = vmatprep.subr.mxu0 0.0
      %547 = vmatpush1.msra.mxu0 0.0
      %548 = vmatprep.subr.mxu0 0.0
      %549 = vmatpush1.msra.mxu0 0.0
      %550 = vmatprep.subr.mxu0 0.0
      %551 = vmatpush1.msra.mxu0 0.0
      %552 = vmatprep.subr.mxu0 0.0
      %553 = vmatpush1.msra.mxu0 0.0
      %554 = vmatprep.subr.mxu0 0.0
      %555 = vmatpush1.msra.mxu0 0.0
      %556 = vmatprep.subr.mxu0 0.0
      %557 = vmatpush1.msra.mxu0 0.0
      %558 = vmatprep.subr.mxu0 0.0
      %559 = vmatpush1.msra.mxu0 0.0
      %560 = vmatprep.subr.mxu0 0.0
      %561 = vmatpush1.msra.mxu0 0.0
      %562 = vmatprep.subr.mxu0 0.0
      %563 = vmatpush1.msra.mxu0 0.0
      %564 = vmatprep.subr.mxu0 0.0
      %565 = vmatpush1.msra.mxu0 0.0
      %566 = vmatprep.subr.mxu0 0.0
      %567 = vmatpush1.msra.mxu0 0.0
      %568 = vmatprep.subr.mxu0 0.0
      %569 = vmatpush1.msra.mxu0 0.0
      %570 = vmatprep.subr.mxu0 0.0
      %571 = vmatpush1.msra.mxu0 0.0
      %572 = vmatprep.subr.mxu0 0.0
      %573 = vmatpush1.msra.mxu0 0.0
      %574 = vmatprep.subr.mxu0 0.0
      %575 = vmatpush1.msra.mxu0 0.0
      %576 = vmatprep.subr.mxu0 0.0
      %577 = vmatpush1.msra.mxu0 0.0
      %578 = vmatprep.subr.mxu0 0.0
      %579 = vmatpush1.msra.mxu0 0.0
      %580 = vmatprep.subr.mxu0 0.0
      %581 = vmatpush1.msra.mxu0 0.0
      %582 = vmatprep.subr.mxu0 0.0
      %583 = vmatpush1.msra.mxu0 0.0
      %584 = vmatprep.subr.mxu0 0.0
      %585 = vmatpush1.msra.mxu0 0.0
      %586 = vmatprep.mubr.f32.mxu0 0.0
      %587 = vmatmul.mubr.f32.gmra.mrb[0].mxu0 %v518
      %v588 = vpop.f32.mrb[0].mxu0
      %v589 = vadd.f32 0.0, %v588
      %v590 = vpop.f32.mrb[0].mxu0
      %v591 = vadd.f32 0.0, %v590
      %592 = vmatprep.mubr.f32.mxu0 0.0
      %593 = vmatmul.mubr.f32.gmra.mrb[0].mxu0 %v520
      %v594 = vpop.f32.mrb[0].mxu0
      %v595 = vadd.f32 0.0, %v594
      %v596 = vpop.f32.mrb[0].mxu0
      %v597 = vadd.f32 0.0, %v596
      %598 = vdwg.mxu0
      %603 = vrot.lane.b32.xlu0 %v589, 1
      %v604 = vpop.permute.xlu0 %603
      %605 = vrot.lane.b32.xlu0 %v591, 1
      %v606 = vpop.permute.xlu0 %605
      %607 = vrot.lane.b32.xlu0 %v595, 1
      %v608 = vpop.permute.xlu0 %607
      %609 = vrot.lane.b32.xlu0 %v597, 1
      %v610 = vpop.permute.xlu0 %609
      %vm611 = vcmask 7168
      %v612 = vsel %vm611, %v604, %v606
      %v613 = vsel %vm611, %v608, %v610
      %v618 = vadd.f32 %v488, %v604
      %v619 = vadd.f32 %v490, %v612
      %v620 = vadd.f32 %v494, %v608
      %v621 = vadd.f32 %v496, %v613
      %v622 = vld [vmem:[%s395 + $0x8] sm:$0xff]
      %v623 = vld [vmem:[%s395 + $0x18] sm:$0xff]
      %v624 = vld [vmem:[%s219 + $0x100] sm:$0xff]
      %v625 = vld [vmem:[%s219 + $0x108] sm:$0xff]
      %v626 = vld [vmem:[%s219 + $0x110] sm:$0xff]
      %v627 = vld [vmem:[%s219 + $0x118] sm:$0xff]
      %v628 = vld [vmem:[%s219 + $0x120] sm:$0xff]
      %v629 = vld [vmem:[%s219 + $0x128] sm:$0xff]
      %v630 = vld [vmem:[%s219 + $0x130] sm:$0xff]
      %v631 = vld [vmem:[%s219 + $0x138] sm:$0xff]
      %v632 = vld [vmem:[%s219 + $0x140] sm:$0xff]
      %v633 = vld [vmem:[%s219 + $0x148] sm:$0xff]
      %v634 = vld [vmem:[%s219 + $0x150] sm:$0xff]
      %v635 = vld [vmem:[%s219 + $0x158] sm:$0xff]
      %v636 = vld [vmem:[%s219 + $0x160] sm:$0xff]
      %v637 = vld [vmem:[%s219 + $0x168] sm:$0xff]
      %v638 = vld [vmem:[%s219 + $0x170] sm:$0xff]
      %v639 = vld [vmem:[%s219 + $0x178] sm:$0xff]
      %v641 = vsel %vm414, %v622, 0
      %v644 = vsel %vm414, %v623, 0
      %646 = vmatprep.subr.mxu0 %v625
      %647 = vmatpush1.msra.mxu0 %v624
      %648 = vmatprep.subr.mxu0 %v627
      %649 = vmatpush1.msra.mxu0 %v626
      %650 = vmatprep.subr.mxu0 %v629
      %651 = vmatpush1.msra.mxu0 %v628
      %652 = vmatprep.subr.mxu0 %v631
      %653 = vmatpush1.msra.mxu0 %v630
      %654 = vmatprep.subr.mxu0 %v633
      %655 = vmatpush1.msra.mxu0 %v632
      %656 = vmatprep.subr.mxu0 %v635
      %657 = vmatpush1.msra.mxu0 %v634
      %658 = vmatprep.subr.mxu0 %v637
      %659 = vmatpush1.msra.mxu0 %v636
      %660 = vmatprep.subr.mxu0 %v639
      %661 = vmatpush1.msra.mxu0 %v638
      %662 = vmatprep.subr.mxu0 0.0
      %663 = vmatpush1.msra.mxu0 0.0
      %664 = vmatprep.subr.mxu0 0.0
      %665 = vmatpush1.msra.mxu0 0.0
      %666 = vmatprep.subr.mxu0 0.0
      %667 = vmatpush1.msra.mxu0 0.0
      %668 = vmatprep.subr.mxu0 0.0
      %669 = vmatpush1.msra.mxu0 0.0
      %670 = vmatprep.subr.mxu0 0.0
      %671 = vmatpush1.msra.mxu0 0.0
      %672 = vmatprep.subr.mxu0 0.0
      %673 = vmatpush1.msra.mxu0 0.0
      %674 = vmatprep.subr.mxu0 0.0
      %675 = vmatpush1.msra.mxu0 0.0
      %676 = vmatprep.subr.mxu0 0.0
      %677 = vmatpush1.msra.mxu0 0.0
      %678 = vmatprep.subr.mxu0 0.0
      %679 = vmatpush1.msra.mxu0 0.0
      %680 = vmatprep.subr.mxu0 0.0
      %681 = vmatpush1.msra.mxu0 0.0
      %682 = vmatprep.subr.mxu0 0.0
      %683 = vmatpush1.msra.mxu0 0.0
      %684 = vmatprep.subr.mxu0 0.0
      %685 = vmatpush1.msra.mxu0 0.0
      %686 = vmatprep.subr.mxu0 0.0
      %687 = vmatpush1.msra.mxu0 0.0
      %688 = vmatprep.subr.mxu0 0.0
      %689 = vmatpush1.msra.mxu0 0.0
      %690 = vmatprep.subr.mxu0 0.0
      %691 = vmatpush1.msra.mxu0 0.0
      %692 = vmatprep.subr.mxu0 0.0
      %693 = vmatpush1.msra.mxu0 0.0
      %694 = vmatprep.subr.mxu0 0.0
      %695 = vmatpush1.msra.mxu0 0.0
      %696 = vmatprep.subr.mxu0 0.0
      %697 = vmatpush1.msra.mxu0 0.0
      %698 = vmatprep.subr.mxu0 0.0
      %699 = vmatpush1.msra.mxu0 0.0
      %700 = vmatprep.subr.mxu0 0.0
      %701 = vmatpush1.msra.mxu0 0.0
      %702 = vmatprep.subr.mxu0 0.0
      %703 = vmatpush1.msra.mxu0 0.0
      %704 = vmatprep.subr.mxu0 0.0
      %705 = vmatpush1.msra.mxu0 0.0
      %706 = vmatprep.subr.mxu0 0.0
      %707 = vmatpush1.msra.mxu0 0.0
      %708 = vmatprep.subr.mxu0 0.0
      %709 = vmatpush1.msra.mxu0 0.0
      %710 = vmatprep.mubr.f32.mxu0 0.0
      %711 = vmatmul.mubr.f32.gmra.mrb[0].mxu0 %v641
      %v712 = vpop.f32.mrb[0].mxu0
      %v713 = vadd.f32 0.0, %v712
      %v714 = vpop.f32.mrb[0].mxu0
      %v715 = vadd.f32 0.0, %v714
      %716 = vmatprep.mubr.f32.mxu0 0.0
      %717 = vmatmul.mubr.f32.gmra.mrb[0].mxu0 %v644
      %v718 = vpop.f32.mrb[0].mxu0
      %v719 = vadd.f32 0.0, %v718
      %v720 = vpop.f32.mrb[0].mxu0
      %v721 = vadd.f32 0.0, %v720
      %722 = vdwg.mxu0
      %v723 = vadd.f32 %v618, %v713
      %v724 = vadd.f32 %v619, %v715
      %v725 = vadd.f32 %v620, %v719
      %v726 = vadd.f32 %v621, %v721
      %v727 = vld [vmem:[%s219 + $0x180] sm:$0xff]
      %v728 = vld [vmem:[%s219 + $0x188] sm:$0xff]
      %v729 = vld [vmem:[%s219 + $0x190] sm:$0xff]
      %v730 = vld [vmem:[%s219 + $0x198] sm:$0xff]
      %v731 = vld [vmem:[%s219 + $0x1a0] sm:$0xff]
      %v732 = vld [vmem:[%s219 + $0x1a8] sm:$0xff]
      %v733 = vld [vmem:[%s219 + $0x1b0] sm:$0xff]
      %v734 = vld [vmem:[%s219 + $0x1b8] sm:$0xff]
      %v735 = vld [vmem:[%s219 + $0x1c0] sm:$0xff]
      %v736 = vld [vmem:[%s219 + $0x1c8] sm:$0xff]
      %v737 = vld [vmem:[%s219 + $0x1d0] sm:$0xff]
      %v738 = vld [vmem:[%s219 + $0x1d8] sm:$0xff]
      %v739 = vld [vmem:[%s219 + $0x1e0] sm:$0xff]
      %v740 = vld [vmem:[%s219 + $0x1e8] sm:$0xff]
      %v741 = vld [vmem:[%s219 + $0x1f0] sm:$0xff]
      %v742 = vld [vmem:[%s219 + $0x1f8] sm:$0xff]
      %743 = vrot.lane.b32.xlu0 %v622, 64
      %v744 = vpop.permute.xlu0 %743
      %745 = vrot.lane.b32.xlu0 %v623, 64
      %v746 = vpop.permute.xlu0 %745
      %v747 = vsel %vm414, %v744, 0
      %v749 = vsel %vm414, %v746, 0
      %751 = vmatprep.subr.mxu0 %v728
      %752 = vmatpush1.msra.mxu0 %v727
      %753 = vmatprep.subr.mxu0 %v730
      %754 = vmatpush1.msra.mxu0 %v729
      %755 = vmatprep.subr.mxu0 %v732
      %756 = vmatpush1.msra.mxu0 %v731
      %757 = vmatprep.subr.mxu0 %v734
      %758 = vmatpush1.msra.mxu0 %v733
      %759 = vmatprep.subr.mxu0 %v736
      %760 = vmatpush1.msra.mxu0 %v735
      %761 = vmatprep.subr.mxu0 %v738
      %762 = vmatpush1.msra.mxu0 %v737
      %763 = vmatprep.subr.mxu0 %v740
      %764 = vmatpush1.msra.mxu0 %v739
      %765 = vmatprep.subr.mxu0 %v742
      %766 = vmatpush1.msra.mxu0 %v741
      %767 = vmatprep.subr.mxu0 0.0
      %768 = vmatpush1.msra.mxu0 0.0
      %769 = vmatprep.subr.mxu0 0.0
      %770 = vmatpush1.msra.mxu0 0.0
      %771 = vmatprep.subr.mxu0 0.0
      %772 = vmatpush1.msra.mxu0 0.0
      %773 = vmatprep.subr.mxu0 0.0
      %774 = vmatpush1.msra.mxu0 0.0
      %775 = vmatprep.subr.mxu0 0.0
      %776 = vmatpush1.msra.mxu0 0.0
      %777 = vmatprep.subr.mxu0 0.0
      %778 = vmatpush1.msra.mxu0 0.0
      %779 = vmatprep.subr.mxu0 0.0
      %780 = vmatpush1.msra.mxu0 0.0
      %781 = vmatprep.subr.mxu0 0.0
      %782 = vmatpush1.msra.mxu0 0.0
      %783 = vmatprep.subr.mxu0 0.0
      %784 = vmatpush1.msra.mxu0 0.0
      %785 = vmatprep.subr.mxu0 0.0
      %786 = vmatpush1.msra.mxu0 0.0
      %787 = vmatprep.subr.mxu0 0.0
      %788 = vmatpush1.msra.mxu0 0.0
      %789 = vmatprep.subr.mxu0 0.0
      %790 = vmatpush1.msra.mxu0 0.0
      %791 = vmatprep.subr.mxu0 0.0
      %792 = vmatpush1.msra.mxu0 0.0
      %793 = vmatprep.subr.mxu0 0.0
      %794 = vmatpush1.msra.mxu0 0.0
      %795 = vmatprep.subr.mxu0 0.0
      %796 = vmatpush1.msra.mxu0 0.0
      %797 = vmatprep.subr.mxu0 0.0
      %798 = vmatpush1.msra.mxu0 0.0
      %799 = vmatprep.subr.mxu0 0.0
      %800 = vmatpush1.msra.mxu0 0.0
      %801 = vmatprep.subr.mxu0 0.0
      %802 = vmatpush1.msra.mxu0 0.0
      %803 = vmatprep.subr.mxu0 0.0
      %804 = vmatpush1.msra.mxu0 0.0
      %805 = vmatprep.subr.mxu0 0.0
      %806 = vmatpush1.msra.mxu0 0.0
      %807 = vmatprep.subr.mxu0 0.0
      %808 = vmatpush1.msra.mxu0 0.0
      %809 = vmatprep.subr.mxu0 0.0
      %810 = vmatpush1.msra.mxu0 0.0
      %811 = vmatprep.subr.mxu0 0.0
      %812 = vmatpush1.msra.mxu0 0.0
      %813 = vmatprep.subr.mxu0 0.0
      %814 = vmatpush1.msra.mxu0 0.0
      %815 = vmatprep.mubr.f32.mxu0 0.0
      %816 = vmatmul.mubr.f32.gmra.mrb[0].mxu0 %v747
      %v817 = vpop.f32.mrb[0].mxu0
      %v818 = vadd.f32 0.0, %v817
      %v819 = vpop.f32.mrb[0].mxu0
      %v820 = vadd.f32 0.0, %v819
      %821 = vmatprep.mubr.f32.mxu0 0.0
      %822 = vmatmul.mubr.f32.gmra.mrb[0].mxu0 %v749
      %v823 = vpop.f32.mrb[0].mxu0
      %v824 = vadd.f32 0.0, %v823
      %v825 = vpop.f32.mrb[0].mxu0
      %v826 = vadd.f32 0.0, %v825
      %827 = vdwg.mxu0
      %832 = vrot.lane.b32.xlu0 %v818, 1
      %v833 = vpop.permute.xlu0 %832
      %834 = vrot.lane.b32.xlu0 %v820, 1
      %v835 = vpop.permute.xlu0 %834
      %836 = vrot.lane.b32.xlu0 %v824, 1
      %v837 = vpop.permute.xlu0 %836
      %838 = vrot.lane.b32.xlu0 %v826, 1
      %v839 = vpop.permute.xlu0 %838
      %v840 = vsel %vm611, %v833, %v835
      %v841 = vsel %vm611, %v837, %v839
      %v846 = vadd.f32 %v723, %v833
      %v847 = vadd.f32 %v724, %v840
      %v848 = vadd.f32 %v725, %v837
      %v849 = vadd.f32 %v726, %v841
      %v850 = vld [vmem:[%s2] sm:$0xff]
      %v851 = vld [vmem:[%s2 + $0x8] sm:$0xff]
      %853 = vset.pattern.permute.xlu0 0
      %854 = vperm.xlu0 %853, %v850
      %v855 = vpop.permute.xlu0 %854
      %858 = vset.pattern.permute.xlu0 0
      %859 = vperm.xlu0 %858, %v851
      %v860 = vpop.permute.xlu0 %859
      %v862 = vadd.f32 %v846, %v855
      %v863 = vadd.f32 %v847, %v855
      %v864 = vadd.f32 %v848, %v860
      %v865 = vadd.f32 %v849, %v860
      %v866 = vmax.f32 %v862, 0.0
      %v867 = vmax.f32 %v863, 0.0
      %v868 = vmax.f32 %v864, 0.0
      %v869 = vmax.f32 %v865, 0.0
      %874 = vrot.lane.b32.xlu0 %v866, 127
      %v875 = vpop.permute.xlu0 %874
      %876 = vrot.lane.b32.xlu0 %v867, 127
      %v877 = vpop.permute.xlu0 %876
      %878 = vrot.lane.b32.xlu0 %v868, 127
      %v879 = vpop.permute.xlu0 %878
      %880 = vrot.lane.b32.xlu0 %v869, 127
      %v881 = vpop.permute.xlu0 %880
      %vm882 = vcmask 1039360
      %v883 = vsel %vm882, %v875, %v877
      %v884 = vsel %vm882, %v879, %v881
      %889 = vst [vmem:[#allocation2 + $0x20] sm:$0xff] %v883
      %890 = vst.msk [vmem:[#allocation2 + $0x28] sm:$0xff] %vm391, %v877
      %891 = vst [vmem:[#allocation2 + $0x30] sm:$0xff] %v884
      %892 = vst.msk [vmem:[#allocation2 + $0x38] sm:$0xff] %vm391, %v881
      %s893 = scalar_lea.vmem %s1, 64
      %v894 = vld [vmem:[%s893] sm:$0xff]
      %v895 = vld [vmem:[%s893 + $0x10] sm:$0xff]
      %v896 = vld [vmem:[%s219] sm:$0xff]
      %v897 = vld [vmem:[%s219 + $0x8] sm:$0xff]
      %v898 = vld [vmem:[%s219 + $0x10] sm:$0xff]
      %v899 = vld [vmem:[%s219 + $0x18] sm:$0xff]
      %v900 = vld [vmem:[%s219 + $0x20] sm:$0xff]
      %v901 = vld [vmem:[%s219 + $0x28] sm:$0xff]
      %v902 = vld [vmem:[%s219 + $0x30] sm:$0xff]
      %v903 = vld [vmem:[%s219 + $0x38] sm:$0xff]
      %v904 = vld [vmem:[%s219 + $0x40] sm:$0xff]
      %v905 = vld [vmem:[%s219 + $0x48] sm:$0xff]
      %v906 = vld [vmem:[%s219 + $0x50] sm:$0xff]
      %v907 = vld [vmem:[%s219 + $0x58] sm:$0xff]
      %v908 = vld [vmem:[%s219 + $0x60] sm:$0xff]
      %v909 = vld [vmem:[%s219 + $0x68] sm:$0xff]
      %v910 = vld [vmem:[%s219 + $0x70] sm:$0xff]
      %v911 = vld [vmem:[%s219 + $0x78] sm:$0xff]
      %v912 = vld [vmem:[%s219 + $0x80] sm:$0xff]
      %v913 = vld [vmem:[%s219 + $0x88] sm:$0xff]
      %v914 = vld [vmem:[%s219 + $0x90] sm:$0xff]
      %v915 = vld [vmem:[%s219 + $0x98] sm:$0xff]
      %v916 = vld [vmem:[%s219 + $0xa0] sm:$0xff]
      %v917 = vld [vmem:[%s219 + $0xa8] sm:$0xff]
      %v918 = vld [vmem:[%s219 + $0xb0] sm:$0xff]
      %v919 = vld [vmem:[%s219 + $0xb8] sm:$0xff]
      %v920 = vld [vmem:[%s219 + $0xc0] sm:$0xff]
      %v921 = vld [vmem:[%s219 + $0xc8] sm:$0xff]
      %v922 = vld [vmem:[%s219 + $0xd0] sm:$0xff]
      %v923 = vld [vmem:[%s219 + $0xd8] sm:$0xff]
      %v924 = vld [vmem:[%s219 + $0xe0] sm:$0xff]
      %v925 = vld [vmem:[%s219 + $0xe8] sm:$0xff]
      %v926 = vld [vmem:[%s219 + $0xf0] sm:$0xff]
      %v927 = vld [vmem:[%s219 + $0xf8] sm:$0xff]
      %928 = vmatprep.subr.mxu0 %v897
      %929 = vmatpush1.msra.mxu0 %v896
      %930 = vmatprep.subr.mxu0 %v899
      %931 = vmatpush1.msra.mxu0 %v898
      %932 = vmatprep.subr.mxu0 %v901
      %933 = vmatpush1.msra.mxu0 %v900
      %934 = vmatprep.subr.mxu0 %v903
      %935 = vmatpush1.msra.mxu0 %v902
      %936 = vmatprep.subr.mxu0 %v905
      %937 = vmatpush1.msra.mxu0 %v904
      %938 = vmatprep.subr.mxu0 %v907
      %939 = vmatpush1.msra.mxu0 %v906
      %940 = vmatprep.subr.mxu0 %v909
      %941 = vmatpush1.msra.mxu0 %v908
      %942 = vmatprep.subr.mxu0 %v911
      %943 = vmatpush1.msra.mxu0 %v910
      %944 = vmatprep.subr.mxu0 %v913
      %945 = vmatpush1.msra.mxu0 %v912
      %946 = vmatprep.subr.mxu0 %v915
      %947 = vmatpush1.msra.mxu0 %v914
      %948 = vmatprep.subr.mxu0 %v917
      %949 = vmatpush1.msra.mxu0 %v916
      %950 = vmatprep.subr.mxu0 %v919
      %951 = vmatpush1.msra.mxu0 %v918
      %952 = vmatprep.subr.mxu0 %v921
      %953 = vmatpush1.msra.mxu0 %v920
      %954 = vmatprep.subr.mxu0 %v923
      %955 = vmatpush1.msra.mxu0 %v922
      %956 = vmatprep.subr.mxu0 %v925
      %957 = vmatpush1.msra.mxu0 %v924
      %958 = vmatprep.subr.mxu0 %v927
      %959 = vmatpush1.msra.mxu0 %v926
      %960 = vmatprep.subr.mxu0 0.0
      %961 = vmatpush1.msra.mxu0 0.0
      %962 = vmatprep.subr.mxu0 0.0
      %963 = vmatpush1.msra.mxu0 0.0
      %964 = vmatprep.subr.mxu0 0.0
      %965 = vmatpush1.msra.mxu0 0.0
      %966 = vmatprep.subr.mxu0 0.0
      %967 = vmatpush1.msra.mxu0 0.0
      %968 = vmatprep.subr.mxu0 0.0
      %969 = vmatpush1.msra.mxu0 0.0
      %970 = vmatprep.subr.mxu0 0.0
      %971 = vmatpush1.msra.mxu0 0.0
      %972 = vmatprep.subr.mxu0 0.0
      %973 = vmatpush1.msra.mxu0 0.0
      %974 = vmatprep.subr.mxu0 0.0
      %975 = vmatpush1.msra.mxu0 0.0
      %976 = vmatprep.subr.mxu0 0.0
      %977 = vmatpush1.msra.mxu0 0.0
      %978 = vmatprep.subr.mxu0 0.0
      %979 = vmatpush1.msra.mxu0 0.0
      %980 = vmatprep.subr.mxu0 0.0
      %981 = vmatpush1.msra.mxu0 0.0
      %982 = vmatprep.subr.mxu0 0.0
      %983 = vmatpush1.msra.mxu0 0.0
      %984 = vmatprep.subr.mxu0 0.0
      %985 = vmatpush1.msra.mxu0 0.0
      %986 = vmatprep.subr.mxu0 0.0
      %987 = vmatpush1.msra.mxu0 0.0
      %988 = vmatprep.subr.mxu0 0.0
      %989 = vmatpush1.msra.mxu0 0.0
      %990 = vmatprep.subr.mxu0 0.0
      %991 = vmatpush1.msra.mxu0 0.0
      %992 = vmatprep.mubr.f32.mxu0 0.0
      %993 = vmatmul.mubr.f32.gmra.mrb[0].mxu0 %v894
      %v994 = vpop.f32.mrb[0].mxu0
      %v995 = vadd.f32 0.0, %v994
      %v996 = vpop.f32.mrb[0].mxu0
      %v997 = vadd.f32 0.0, %v996
      %998 = vmatprep.mubr.f32.mxu0 0.0
      %999 = vmatmul.mubr.f32.gmra.mrb[0].mxu0 %v895
      %v1000 = vpop.f32.mrb[0].mxu0
      %v1001 = vadd.f32 0.0, %v1000
      %v1002 = vpop.f32.mrb[0].mxu0
      %v1003 = vadd.f32 0.0, %v1002
      %1004 = vdwg.mxu0
      %v1005 = vld [vmem:[%s893 + $0x8] sm:$0xff]
      %v1006 = vld [vmem:[%s893 + $0x18] sm:$0xff]
      %v1007 = vld [vmem:[%s219 + $0x100] sm:$0xff]
      %v1008 = vld [vmem:[%s219 + $0x108] sm:$0xff]
      %v1009 = vld [vmem:[%s219 + $0x110] sm:$0xff]
      %v1010 = vld [vmem:[%s219 + $0x118] sm:$0xff]
      %v1011 = vld [vmem:[%s219 + $0x120] sm:$0xff]
      %v1012 = vld [vmem:[%s219 + $0x128] sm:$0xff]
      %v1013 = vld [vmem:[%s219 + $0x130] sm:$0xff]
      %v1014 = vld [vmem:[%s219 + $0x138] sm:$0xff]
      %v1015 = vld [vmem:[%s219 + $0x140] sm:$0xff]
      %v1016 = vld [vmem:[%s219 + $0x148] sm:$0xff]
      %v1017 = vld [vmem:[%s219 + $0x150] sm:$0xff]
      %v1018 = vld [vmem:[%s219 + $0x158] sm:$0xff]
      %v1019 = vld [vmem:[%s219 + $0x160] sm:$0xff]
      %v1020 = vld [vmem:[%s219 + $0x168] sm:$0xff]
      %v1021 = vld [vmem:[%s219 + $0x170] sm:$0xff]
      %v1022 = vld [vmem:[%s219 + $0x178] sm:$0xff]
      %v1023 = vld [vmem:[%s219 + $0x180] sm:$0xff]
      %v1024 = vld [vmem:[%s219 + $0x188] sm:$0xff]
      %v1025 = vld [vmem:[%s219 + $0x190] sm:$0xff]
      %v1026 = vld [vmem:[%s219 + $0x198] sm:$0xff]
      %v1027 = vld [vmem:[%s219 + $0x1a0] sm:$0xff]
      %v1028 = vld [vmem:[%s219 + $0x1a8] sm:$0xff]
      %v1029 = vld [vmem:[%s219 + $0x1b0] sm:$0xff]
      %v1030 = vld [vmem:[%s219 + $0x1b8] sm:$0xff]
      %v1031 = vld [vmem:[%s219 + $0x1c0] sm:$0xff]
      %v1032 = vld [vmem:[%s219 + $0x1c8] sm:$0xff]
      %v1033 = vld [vmem:[%s219 + $0x1d0] sm:$0xff]
      %v1034 = vld [vmem:[%s219 + $0x1d8] sm:$0xff]
      %v1035 = vld [vmem:[%s219 + $0x1e0] sm:$0xff]
      %v1036 = vld [vmem:[%s219 + $0x1e8] sm:$0xff]
      %v1037 = vld [vmem:[%s219 + $0x1f0] sm:$0xff]
      %v1038 = vld [vmem:[%s219 + $0x1f8] sm:$0xff]
      %1039 = vmatprep.subr.mxu0 %v1008
      %1040 = vmatpush1.msra.mxu0 %v1007
      %1041 = vmatprep.subr.mxu0 %v1010
      %1042 = vmatpush1.msra.mxu0 %v1009
      %1043 = vmatprep.subr.mxu0 %v1012
      %1044 = vmatpush1.msra.mxu0 %v1011
      %1045 = vmatprep.subr.mxu0 %v1014
      %1046 = vmatpush1.msra.mxu0 %v1013
      %1047 = vmatprep.subr.mxu0 %v1016
      %1048 = vmatpush1.msra.mxu0 %v1015
      %1049 = vmatprep.subr.mxu0 %v1018
      %1050 = vmatpush1.msra.mxu0 %v1017
      %1051 = vmatprep.subr.mxu0 %v1020
      %1052 = vmatpush1.msra.mxu0 %v1019
      %1053 = vmatprep.subr.mxu0 %v1022
      %1054 = vmatpush1.msra.mxu0 %v1021
      %1055 = vmatprep.subr.mxu0 %v1024
      %1056 = vmatpush1.msra.mxu0 %v1023
      %1057 = vmatprep.subr.mxu0 %v1026
      %1058 = vmatpush1.msra.mxu0 %v1025
      %1059 = vmatprep.subr.mxu0 %v1028
      %1060 = vmatpush1.msra.mxu0 %v1027
      %1061 = vmatprep.subr.mxu0 %v1030
      %1062 = vmatpush1.msra.mxu0 %v1029
      %1063 = vmatprep.subr.mxu0 %v1032
      %1064 = vmatpush1.msra.mxu0 %v1031
      %1065 = vmatprep.subr.mxu0 %v1034
      %1066 = vmatpush1.msra.mxu0 %v1033
      %1067 = vmatprep.subr.mxu0 %v1036
      %1068 = vmatpush1.msra.mxu0 %v1035
      %1069 = vmatprep.subr.mxu0 %v1038
      %1070 = vmatpush1.msra.mxu0 %v1037
      %1071 = vmatprep.subr.mxu0 0.0
      %1072 = vmatpush1.msra.mxu0 0.0
      %1073 = vmatprep.subr.mxu0 0.0
      %1074 = vmatpush1.msra.mxu0 0.0
      %1075 = vmatprep.subr.mxu0 0.0
      %1076 = vmatpush1.msra.mxu0 0.0
      %1077 = vmatprep.subr.mxu0 0.0
      %1078 = vmatpush1.msra.mxu0 0.0
      %1079 = vmatprep.subr.mxu0 0.0
      %1080 = vmatpush1.msra.mxu0 0.0
      %1081 = vmatprep.subr.mxu0 0.0
      %1082 = vmatpush1.msra.mxu0 0.0
      %1083 = vmatprep.subr.mxu0 0.0
      %1084 = vmatpush1.msra.mxu0 0.0
      %1085 = vmatprep.subr.mxu0 0.0
      %1086 = vmatpush1.msra.mxu0 0.0
      %1087 = vmatprep.subr.mxu0 0.0
      %1088 = vmatpush1.msra.mxu0 0.0
      %1089 = vmatprep.subr.mxu0 0.0
      %1090 = vmatpush1.msra.mxu0 0.0
      %1091 = vmatprep.subr.mxu0 0.0
      %1092 = vmatpush1.msra.mxu0 0.0
      %1093 = vmatprep.subr.mxu0 0.0
      %1094 = vmatpush1.msra.mxu0 0.0
      %1095 = vmatprep.subr.mxu0 0.0
      %1096 = vmatpush1.msra.mxu0 0.0
      %1097 = vmatprep.subr.mxu0 0.0
      %1098 = vmatpush1.msra.mxu0 0.0
      %1099 = vmatprep.subr.mxu0 0.0
      %1100 = vmatpush1.msra.mxu0 0.0
      %1101 = vmatprep.subr.mxu0 0.0
      %1102 = vmatpush1.msra.mxu0 0.0
      %1103 = vmatprep.mubr.f32.mxu0 0.0
      %1104 = vmatmul.mubr.f32.gmra.mrb[0].mxu0 %v1005
      %v1105 = vpop.f32.mrb[0].mxu0
      %v1106 = vadd.f32 0.0, %v1105
      %v1107 = vpop.f32.mrb[0].mxu0
      %v1108 = vadd.f32 0.0, %v1107
      %1109 = vmatprep.mubr.f32.mxu0 0.0
      %1110 = vmatmul.mubr.f32.gmra.mrb[0].mxu0 %v1006
      %v1111 = vpop.f32.mrb[0].mxu0
      %v1112 = vadd.f32 0.0, %v1111
      %v1113 = vpop.f32.mrb[0].mxu0
      %v1114 = vadd.f32 0.0, %v1113
      %1115 = vdwg.mxu0
      %1120 = vrot.lane.b32.xlu0 %v1106, 12
      %v1121 = vpop.permute.xlu0 %1120
      %1122 = vrot.lane.b32.xlu0 %v1108, 12
      %v1123 = vpop.permute.xlu0 %1122
      %1124 = vrot.lane.b32.xlu0 %v1112, 12
      %v1125 = vpop.permute.xlu0 %1124
      %1126 = vrot.lane.b32.xlu0 %v1114, 12
      %v1127 = vpop.permute.xlu0 %1126
      %vm1128 = vcmask 97280
      %v1129 = vsel %vm1128, %v1121, %v1123
      %v1130 = vsel %vm1128, %v1125, %v1127
      %v1135 = vadd.f32 %v995, %v1121
      %v1136 = vadd.f32 %v997, %v1129
      %v1137 = vadd.f32 %v1001, %v1125
      %v1138 = vadd.f32 %v1003, %v1130
      %v1139 = vld [vmem:[%s2] sm:$0xff]
      %v1140 = vld [vmem:[%s2 + $0x8] sm:$0xff]
      %1142 = vset.pattern.permute.xlu0 0
      %1143 = vperm.xlu0 %1142, %v1139
      %v1144 = vpop.permute.xlu0 %1143
      %1147 = vset.pattern.permute.xlu0 0
      %1148 = vperm.xlu0 %1147, %v1140
      %v1149 = vpop.permute.xlu0 %1148
      %v1151 = vadd.f32 %v1135, %v1144
      %v1152 = vadd.f32 %v1136, %v1144
      %v1153 = vadd.f32 %v1137, %v1149
      %v1154 = vadd.f32 %v1138, %v1149
      %v1155 = vmax.f32 %v1151, 0.0
      %v1156 = vmax.f32 %v1152, 0.0
      %v1157 = vmax.f32 %v1153, 0.0
      %v1158 = vmax.f32 %v1154, 0.0
      %1163 = vrot.lane.b32.xlu0 %v1155, 116
      %v1164 = vpop.permute.xlu0 %1163
      %1165 = vrot.lane.b32.xlu0 %v1156, 116
      %v1166 = vpop.permute.xlu0 %1165
      %1167 = vrot.lane.b32.xlu0 %v1157, 116
      %v1168 = vpop.permute.xlu0 %1167
      %1169 = vrot.lane.b32.xlu0 %v1158, 116
      %v1170 = vpop.permute.xlu0 %1169
      %vm1171 = vcmask 949248
      %v1172 = vsel %vm1171, %v1164, %v1166
      %v1173 = vsel %vm1171, %v1168, %v1170
      %1178 = vst [vmem:[#allocation2 + $0x40] sm:$0xff] %v1172
      %1179 = vst.msk [vmem:[#allocation2 + $0x48] sm:$0xff] %vm391, %v1166
      %1180 = vst [vmem:[#allocation2 + $0x50] sm:$0xff] %v1173
      %1181 = vst.msk [vmem:[#allocation2 + $0x58] sm:$0xff] %vm391, %v1170
      %s1182 = scalar_lea.vmem %s1, 96
      %v1183 = vld [vmem:[%s1182] sm:$0xff]
      %v1184 = vld [vmem:[%s1182 + $0x10] sm:$0xff]
      %v1185 = vld [vmem:[%s219] sm:$0xff]
      %v1186 = vld [vmem:[%s219 + $0x8] sm:$0xff]
      %v1187 = vld [vmem:[%s219 + $0x10] sm:$0xff]
      %v1188 = vld [vmem:[%s219 + $0x18] sm:$0xff]
      %v1189 = vld [vmem:[%s219 + $0x20] sm:$0xff]
      %v1190 = vld [vmem:[%s219 + $0x28] sm:$0xff]
      %v1191 = vld [vmem:[%s219 + $0x30] sm:$0xff]
      %v1192 = vld [vmem:[%s219 + $0x38] sm:$0xff]
      %v1193 = vld [vmem:[%s219 + $0x40] sm:$0xff]
      %v1194 = vld [vmem:[%s219 + $0x48] sm:$0xff]
      %v1195 = vld [vmem:[%s219 + $0x50] sm:$0xff]
      %v1196 = vld [vmem:[%s219 + $0x58] sm:$0xff]
      %v1197 = vld [vmem:[%s219 + $0x60] sm:$0xff]
      %v1198 = vld [vmem:[%s219 + $0x68] sm:$0xff]
      %v1199 = vld [vmem:[%s219 + $0x70] sm:$0xff]
      %v1200 = vld [vmem:[%s219 + $0x78] sm:$0xff]
      %v1202 = vsel %vm414, %v1183, 0
      %v1205 = vsel %vm414, %v1184, 0
      %1207 = vmatprep.subr.mxu0 %v1186
      %1208 = vmatpush1.msra.mxu0 %v1185
      %1209 = vmatprep.subr.mxu0 %v1188
      %1210 = vmatpush1.msra.mxu0 %v1187
      %1211 = vmatprep.subr.mxu0 %v1190
      %1212 = vmatpush1.msra.mxu0 %v1189
      %1213 = vmatprep.subr.mxu0 %v1192
      %1214 = vmatpush1.msra.mxu0 %v1191
      %1215 = vmatprep.subr.mxu0 %v1194
      %1216 = vmatpush1.msra.mxu0 %v1193
      %1217 = vmatprep.subr.mxu0 %v1196
      %1218 = vmatpush1.msra.mxu0 %v1195
      %1219 = vmatprep.subr.mxu0 %v1198
      %1220 = vmatpush1.msra.mxu0 %v1197
      %1221 = vmatprep.subr.mxu0 %v1200
      %1222 = vmatpush1.msra.mxu0 %v1199
      %1223 = vmatprep.subr.mxu0 0.0
      %1224 = vmatpush1.msra.mxu0 0.0
      %1225 = vmatprep.subr.mxu0 0.0
      %1226 = vmatpush1.msra.mxu0 0.0
      %1227 = vmatprep.subr.mxu0 0.0
      %1228 = vmatpush1.msra.mxu0 0.0
      %1229 = vmatprep.subr.mxu0 0.0
      %1230 = vmatpush1.msra.mxu0 0.0
      %1231 = vmatprep.subr.mxu0 0.0
      %1232 = vmatpush1.msra.mxu0 0.0
      %1233 = vmatprep.subr.mxu0 0.0
      %1234 = vmatpush1.msra.mxu0 0.0
      %1235 = vmatprep.subr.mxu0 0.0
      %1236 = vmatpush1.msra.mxu0 0.0
      %1237 = vmatprep.subr.mxu0 0.0
      %1238 = vmatpush1.msra.mxu0 0.0
      %1239 = vmatprep.subr.mxu0 0.0
      %1240 = vmatpush1.msra.mxu0 0.0
      %1241 = vmatprep.subr.mxu0 0.0
      %1242 = vmatpush1.msra.mxu0 0.0
      %1243 = vmatprep.subr.mxu0 0.0
      %1244 = vmatpush1.msra.mxu0 0.0
      %1245 = vmatprep.subr.mxu0 0.0
      %1246 = vmatpush1.msra.mxu0 0.0
      %1247 = vmatprep.subr.mxu0 0.0
      %1248 = vmatpush1.msra.mxu0 0.0
      %1249 = vmatprep.subr.mxu0 0.0
      %1250 = vmatpush1.msra.mxu0 0.0
      %1251 = vmatprep.subr.mxu0 0.0
      %1252 = vmatpush1.msra.mxu0 0.0
      %1253 = vmatprep.subr.mxu0 0.0
      %1254 = vmatpush1.msra.mxu0 0.0
      %1255 = vmatprep.subr.mxu0 0.0
      %1256 = vmatpush1.msra.mxu0 0.0
      %1257 = vmatprep.subr.mxu0 0.0
      %1258 = vmatpush1.msra.mxu0 0.0
      %1259 = vmatprep.subr.mxu0 0.0
      %1260 = vmatpush1.msra.mxu0 0.0
      %1261 = vmatprep.subr.mxu0 0.0
      %1262 = vmatpush1.msra.mxu0 0.0
      %1263 = vmatprep.subr.mxu0 0.0
      %1264 = vmatpush1.msra.mxu0 0.0
      %1265 = vmatprep.subr.mxu0 0.0
      %1266 = vmatpush1.msra.mxu0 0.0
      %1267 = vmatprep.subr.mxu0 0.0
      %1268 = vmatpush1.msra.mxu0 0.0
      %1269 = vmatprep.subr.mxu0 0.0
      %1270 = vmatpush1.msra.mxu0 0.0
      %1271 = vmatprep.mubr.f32.mxu0 0.0
      %1272 = vmatmul.mubr.f32.gmra.mrb[0].mxu0 %v1202
      %v1273 = vpop.f32.mrb[0].mxu0
      %v1274 = vadd.f32 0.0, %v1273
      %v1275 = vpop.f32.mrb[0].mxu0
      %v1276 = vadd.f32 0.0, %v1275
      %1277 = vmatprep.mubr.f32.mxu0 0.0
      %1278 = vmatmul.mubr.f32.gmra.mrb[0].mxu0 %v1205
      %v1279 = vpop.f32.mrb[0].mxu0
      %v1280 = vadd.f32 0.0, %v1279
      %v1281 = vpop.f32.mrb[0].mxu0
      %v1282 = vadd.f32 0.0, %v1281
      %1283 = vdwg.mxu0
      %v1284 = vld [vmem:[%s219 + $0x80] sm:$0xff]
      %v1285 = vld [vmem:[%s219 + $0x88] sm:$0xff]
      %v1286 = vld [vmem:[%s219 + $0x90] sm:$0xff]
      %v1287 = vld [vmem:[%s219 + $0x98] sm:$0xff]
      %v1288 = vld [vmem:[%s219 + $0xa0] sm:$0xff]
      %v1289 = vld [vmem:[%s219 + $0xa8] sm:$0xff]
      %v1290 = vld [vmem:[%s219 + $0xb0] sm:$0xff]
      %v1291 = vld [vmem:[%s219 + $0xb8] sm:$0xff]
      %v1292 = vld [vmem:[%s219 + $0xc0] sm:$0xff]
      %v1293 = vld [vmem:[%s219 + $0xc8] sm:$0xff]
      %v1294 = vld [vmem:[%s219 + $0xd0] sm:$0xff]
      %v1295 = vld [vmem:[%s219 + $0xd8] sm:$0xff]
      %v1296 = vld [vmem:[%s219 + $0xe0] sm:$0xff]
      %v1297 = vld [vmem:[%s219 + $0xe8] sm:$0xff]
      %v1298 = vld [vmem:[%s219 + $0xf0] sm:$0xff]
      %v1299 = vld [vmem:[%s219 + $0xf8] sm:$0xff]
      %1300 = vrot.lane.b32.xlu0 %v1183, 64
      %v1301 = vpop.permute.xlu0 %1300
      %1302 = vrot.lane.b32.xlu0 %v1184, 64
      %v1303 = vpop.permute.xlu0 %1302
      %v1304 = vsel %vm414, %v1301, 0
      %v1306 = vsel %vm414, %v1303, 0
      %1308 = vmatprep.subr.mxu0 %v1285
      %1309 = vmatpush1.msra.mxu0 %v1284
      %1310 = vmatprep.subr.mxu0 %v1287
      %1311 = vmatpush1.msra.mxu0 %v1286
      %1312 = vmatprep.subr.mxu0 %v1289
      %1313 = vmatpush1.msra.mxu0 %v1288
      %1314 = vmatprep.subr.mxu0 %v1291
      %1315 = vmatpush1.msra.mxu0 %v1290
      %1316 = vmatprep.subr.mxu0 %v1293
      %1317 = vmatpush1.msra.mxu0 %v1292
      %1318 = vmatprep.subr.mxu0 %v1295
      %1319 = vmatpush1.msra.mxu0 %v1294
      %1320 = vmatprep.subr.mxu0 %v1297
      %1321 = vmatpush1.msra.mxu0 %v1296
      %1322 = vmatprep.subr.mxu0 %v1299
      %1323 = vmatpush1.msra.mxu0 %v1298
      %1324 = vmatprep.subr.mxu0 0.0
      %1325 = vmatpush1.msra.mxu0 0.0
      %1326 = vmatprep.subr.mxu0 0.0
      %1327 = vmatpush1.msra.mxu0 0.0
      %1328 = vmatprep.subr.mxu0 0.0
      %1329 = vmatpush1.msra.mxu0 0.0
      %1330 = vmatprep.subr.mxu0 0.0
      %1331 = vmatpush1.msra.mxu0 0.0
      %1332 = vmatprep.subr.mxu0 0.0
      %1333 = vmatpush1.msra.mxu0 0.0
      %1334 = vmatprep.subr.mxu0 0.0
      %1335 = vmatpush1.msra.mxu0 0.0
      %1336 = vmatprep.subr.mxu0 0.0
      %1337 = vmatpush1.msra.mxu0 0.0
      %1338 = vmatprep.subr.mxu0 0.0
      %1339 = vmatpush1.msra.mxu0 0.0
      %1340 = vmatprep.subr.mxu0 0.0
      %1341 = vmatpush1.msra.mxu0 0.0
      %1342 = vmatprep.subr.mxu0 0.0
      %1343 = vmatpush1.msra.mxu0 0.0
      %1344 = vmatprep.subr.mxu0 0.0
      %1345 = vmatpush1.msra.mxu0 0.0
      %1346 = vmatprep.subr.mxu0 0.0
      %1347 = vmatpush1.msra.mxu0 0.0
      %1348 = vmatprep.subr.mxu0 0.0
      %1349 = vmatpush1.msra.mxu0 0.0
      %1350 = vmatprep.subr.mxu0 0.0
      %1351 = vmatpush1.msra.mxu0 0.0
      %1352 = vmatprep.subr.mxu0 0.0
      %1353 = vmatpush1.msra.mxu0 0.0
      %1354 = vmatprep.subr.mxu0 0.0
      %1355 = vmatpush1.msra.mxu0 0.0
      %1356 = vmatprep.subr.mxu0 0.0
      %1357 = vmatpush1.msra.mxu0 0.0
      %1358 = vmatprep.subr.mxu0 0.0
      %1359 = vmatpush1.msra.mxu0 0.0
      %1360 = vmatprep.subr.mxu0 0.0
      %1361 = vmatpush1.msra.mxu0 0.0
      %1362 = vmatprep.subr.mxu0 0.0
      %1363 = vmatpush1.msra.mxu0 0.0
      %1364 = vmatprep.subr.mxu0 0.0
      %1365 = vmatpush1.msra.mxu0 0.0
      %1366 = vmatprep.subr.mxu0 0.0
      %1367 = vmatpush1.msra.mxu0 0.0
      %1368 = vmatprep.subr.mxu0 0.0
      %1369 = vmatpush1.msra.mxu0 0.0
      %1370 = vmatprep.subr.mxu0 0.0
      %1371 = vmatpush1.msra.mxu0 0.0
      %1372 = vmatprep.mubr.f32.mxu0 0.0
      %1373 = vmatmul.mubr.f32.gmra.mrb[0].mxu0 %v1304
      %v1374 = vpop.f32.mrb[0].mxu0
      %v1375 = vadd.f32 0.0, %v1374
      %v1376 = vpop.f32.mrb[0].mxu0
      %v1377 = vadd.f32 0.0, %v1376
      %1378 = vmatprep.mubr.f32.mxu0 0.0
      %1379 = vmatmul.mubr.f32.gmra.mrb[0].mxu0 %v1306
      %v1380 = vpop.f32.mrb[0].mxu0
      %v1381 = vadd.f32 0.0, %v1380
      %v1382 = vpop.f32.mrb[0].mxu0
      %v1383 = vadd.f32 0.0, %v1382
      %1384 = vdwg.mxu0
      %1389 = vrot.lane.b32.xlu0 %v1375, 1
      %v1390 = vpop.permute.xlu0 %1389
      %1391 = vrot.lane.b32.xlu0 %v1377, 1
      %v1392 = vpop.permute.xlu0 %1391
      %1393 = vrot.lane.b32.xlu0 %v1381, 1
      %v1394 = vpop.permute.xlu0 %1393
      %1395 = vrot.lane.b32.xlu0 %v1383, 1
      %v1396 = vpop.permute.xlu0 %1395
      %v1397 = vsel %vm611, %v1390, %v1392
      %v1398 = vsel %vm611, %v1394, %v1396
      %v1403 = vadd.f32 %v1274, %v1390
      %v1404 = vadd.f32 %v1276, %v1397
      %v1405 = vadd.f32 %v1280, %v1394
      %v1406 = vadd.f32 %v1282, %v1398
      %v1407 = vld [vmem:[%s1182 + $0x8] sm:$0xff]
      %v1408 = vld [vmem:[%s1182 + $0x18] sm:$0xff]
      %v1409 = vld [vmem:[%s219 + $0x100] sm:$0xff]
      %v1410 = vld [vmem:[%s219 + $0x108] sm:$0xff]
      %v1411 = vld [vmem:[%s219 + $0x110] sm:$0xff]
      %v1412 = vld [vmem:[%s219 + $0x118] sm:$0xff]
      %v1413 = vld [vmem:[%s219 + $0x120] sm:$0xff]
      %v1414 = vld [vmem:[%s219 + $0x128] sm:$0xff]
      %v1415 = vld [vmem:[%s219 + $0x130] sm:$0xff]
      %v1416 = vld [vmem:[%s219 + $0x138] sm:$0xff]
      %v1417 = vld [vmem:[%s219 + $0x140] sm:$0xff]
      %v1418 = vld [vmem:[%s219 + $0x148] sm:$0xff]
      %v1419 = vld [vmem:[%s219 + $0x150] sm:$0xff]
      %v1420 = vld [vmem:[%s219 + $0x158] sm:$0xff]
      %v1421 = vld [vmem:[%s219 + $0x160] sm:$0xff]
      %v1422 = vld [vmem:[%s219 + $0x168] sm:$0xff]
      %v1423 = vld [vmem:[%s219 + $0x170] sm:$0xff]
      %v1424 = vld [vmem:[%s219 + $0x178] sm:$0xff]
      %v1426 = vsel %vm414, %v1407, 0
      %v1429 = vsel %vm414, %v1408, 0
      %1431 = vmatprep.subr.mxu0 %v1410
      %1432 = vmatpush1.msra.mxu0 %v1409
      %1433 = vmatprep.subr.mxu0 %v1412
      %1434 = vmatpush1.msra.mxu0 %v1411
      %1435 = vmatprep.subr.mxu0 %v1414
      %1436 = vmatpush1.msra.mxu0 %v1413
      %1437 = vmatprep.subr.mxu0 %v1416
      %1438 = vmatpush1.msra.mxu0 %v1415
      %1439 = vmatprep.subr.mxu0 %v1418
      %1440 = vmatpush1.msra.mxu0 %v1417
      %1441 = vmatprep.subr.mxu0 %v1420
      %1442 = vmatpush1.msra.mxu0 %v1419
      %1443 = vmatprep.subr.mxu0 %v1422
      %1444 = vmatpush1.msra.mxu0 %v1421
      %1445 = vmatprep.subr.mxu0 %v1424
      %1446 = vmatpush1.msra.mxu0 %v1423
      %1447 = vmatprep.subr.mxu0 0.0
      %1448 = vmatpush1.msra.mxu0 0.0
      %1449 = vmatprep.subr.mxu0 0.0
      %1450 = vmatpush1.msra.mxu0 0.0
      %1451 = vmatprep.subr.mxu0 0.0
      %1452 = vmatpush1.msra.mxu0 0.0
      %1453 = vmatprep.subr.mxu0 0.0
      %1454 = vmatpush1.msra.mxu0 0.0
      %1455 = vmatprep.subr.mxu0 0.0
      %1456 = vmatpush1.msra.mxu0 0.0
      %1457 = vmatprep.subr.mxu0 0.0
      %1458 = vmatpush1.msra.mxu0 0.0
      %1459 = vmatprep.subr.mxu0 0.0
      %1460 = vmatpush1.msra.mxu0 0.0
      %1461 = vmatprep.subr.mxu0 0.0
      %1462 = vmatpush1.msra.mxu0 0.0
      %1463 = vmatprep.subr.mxu0 0.0
      %1464 = vmatpush1.msra.mxu0 0.0
      %1465 = vmatprep.subr.mxu0 0.0
      %1466 = vmatpush1.msra.mxu0 0.0
      %1467 = vmatprep.subr.mxu0 0.0
      %1468 = vmatpush1.msra.mxu0 0.0
      %1469 = vmatprep.subr.mxu0 0.0
      %1470 = vmatpush1.msra.mxu0 0.0
      %1471 = vmatprep.subr.mxu0 0.0
      %1472 = vmatpush1.msra.mxu0 0.0
      %1473 = vmatprep.subr.mxu0 0.0
      %1474 = vmatpush1.msra.mxu0 0.0
      %1475 = vmatprep.subr.mxu0 0.0
      %1476 = vmatpush1.msra.mxu0 0.0
      %1477 = vmatprep.subr.mxu0 0.0
      %1478 = vmatpush1.msra.mxu0 0.0
      %1479 = vmatprep.subr.mxu0 0.0
      %1480 = vmatpush1.msra.mxu0 0.0
      %1481 = vmatprep.subr.mxu0 0.0
      %1482 = vmatpush1.msra.mxu0 0.0
      %1483 = vmatprep.subr.mxu0 0.0
      %1484 = vmatpush1.msra.mxu0 0.0
      %1485 = vmatprep.subr.mxu0 0.0
      %1486 = vmatpush1.msra.mxu0 0.0
      %1487 = vmatprep.subr.mxu0 0.0
      %1488 = vmatpush1.msra.mxu0 0.0
      %1489 = vmatprep.subr.mxu0 0.0
      %1490 = vmatpush1.msra.mxu0 0.0
      %1491 = vmatprep.subr.mxu0 0.0
      %1492 = vmatpush1.msra.mxu0 0.0
      %1493 = vmatprep.subr.mxu0 0.0
      %1494 = vmatpush1.msra.mxu0 0.0
      %1495 = vmatprep.mubr.f32.mxu0 0.0
      %1496 = vmatmul.mubr.f32.gmra.mrb[0].mxu0 %v1426
      %v1497 = vpop.f32.mrb[0].mxu0
      %v1498 = vadd.f32 0.0, %v1497
      %v1499 = vpop.f32.mrb[0].mxu0
      %v1500 = vadd.f32 0.0, %v1499
      %1501 = vmatprep.mubr.f32.mxu0 0.0
      %1502 = vmatmul.mubr.f32.gmra.mrb[0].mxu0 %v1429
      %v1503 = vpop.f32.mrb[0].mxu0
      %v1504 = vadd.f32 0.0, %v1503
      %v1505 = vpop.f32.mrb[0].mxu0
      %v1506 = vadd.f32 0.0, %v1505
      %1507 = vdwg.mxu0
      %1512 = vrot.lane.b32.xlu0 %v1498, 12
      %v1513 = vpop.permute.xlu0 %1512
      %1514 = vrot.lane.b32.xlu0 %v1500, 12
      %v1515 = vpop.permute.xlu0 %1514
      %1516 = vrot.lane.b32.xlu0 %v1504, 12
      %v1517 = vpop.permute.xlu0 %1516
      %1518 = vrot.lane.b32.xlu0 %v1506, 12
      %v1519 = vpop.permute.xlu0 %1518
      %v1520 = vsel %vm1128, %v1513, %v1515
      %v1521 = vsel %vm1128, %v1517, %v1519
      %v1526 = vadd.f32 %v1403, %v1513
      %v1527 = vadd.f32 %v1404, %v1520
      %v1528 = vadd.f32 %v1405, %v1517
      %v1529 = vadd.f32 %v1406, %v1521
      %v1530 = vld [vmem:[%s219 + $0x180] sm:$0xff]
      %v1531 = vld [vmem:[%s219 + $0x188] sm:$0xff]
      %v1532 = vld [vmem:[%s219 + $0x190] sm:$0xff]
      %v1533 = vld [vmem:[%s219 + $0x198] sm:$0xff]
      %v1534 = vld [vmem:[%s219 + $0x1a0] sm:$0xff]
      %v1535 = vld [vmem:[%s219 + $0x1a8] sm:$0xff]
      %v1536 = vld [vmem:[%s219 + $0x1b0] sm:$0xff]
      %v1537 = vld [vmem:[%s219 + $0x1b8] sm:$0xff]
      %v1538 = vld [vmem:[%s219 + $0x1c0] sm:$0xff]
      %v1539 = vld [vmem:[%s219 + $0x1c8] sm:$0xff]
      %v1540 = vld [vmem:[%s219 + $0x1d0] sm:$0xff]
      %v1541 = vld [vmem:[%s219 + $0x1d8] sm:$0xff]
      %v1542 = vld [vmem:[%s219 + $0x1e0] sm:$0xff]
      %v1543 = vld [vmem:[%s219 + $0x1e8] sm:$0xff]
      %v1544 = vld [vmem:[%s219 + $0x1f0] sm:$0xff]
      %v1545 = vld [vmem:[%s219 + $0x1f8] sm:$0xff]
      %1546 = vrot.lane.b32.xlu0 %v1407, 64
      %v1547 = vpop.permute.xlu0 %1546
      %1548 = vrot.lane.b32.xlu0 %v1408, 64
      %v1549 = vpop.permute.xlu0 %1548
      %v1550 = vsel %vm414, %v1547, 0
      %v1552 = vsel %vm414, %v1549, 0
      %1554 = vmatprep.subr.mxu0 %v1531
      %1555 = vmatpush1.msra.mxu0 %v1530
      %1556 = vmatprep.subr.mxu0 %v1533
      %1557 = vmatpush1.msra.mxu0 %v1532
      %1558 = vmatprep.subr.mxu0 %v1535
      %1559 = vmatpush1.msra.mxu0 %v1534
      %1560 = vmatprep.subr.mxu0 %v1537
      %1561 = vmatpush1.msra.mxu0 %v1536
      %1562 = vmatprep.subr.mxu0 %v1539
      %1563 = vmatpush1.msra.mxu0 %v1538
      %1564 = vmatprep.subr.mxu0 %v1541
      %1565 = vmatpush1.msra.mxu0 %v1540
      %1566 = vmatprep.subr.mxu0 %v1543
      %1567 = vmatpush1.msra.mxu0 %v1542
      %1568 = vmatprep.subr.mxu0 %v1545
      %1569 = vmatpush1.msra.mxu0 %v1544
      %1570 = vmatprep.subr.mxu0 0.0
      %1571 = vmatpush1.msra.mxu0 0.0
      %1572 = vmatprep.subr.mxu0 0.0
      %1573 = vmatpush1.msra.mxu0 0.0
      %1574 = vmatprep.subr.mxu0 0.0
      %1575 = vmatpush1.msra.mxu0 0.0
      %1576 = vmatprep.subr.mxu0 0.0
      %1577 = vmatpush1.msra.mxu0 0.0
      %1578 = vmatprep.subr.mxu0 0.0
      %1579 = vmatpush1.msra.mxu0 0.0
      %1580 = vmatprep.subr.mxu0 0.0
      %1581 = vmatpush1.msra.mxu0 0.0
      %1582 = vmatprep.subr.mxu0 0.0
      %1583 = vmatpush1.msra.mxu0 0.0
      %1584 = vmatprep.subr.mxu0 0.0
      %1585 = vmatpush1.msra.mxu0 0.0
      %1586 = vmatprep.subr.mxu0 0.0
      %1587 = vmatpush1.msra.mxu0 0.0
      %1588 = vmatprep.subr.mxu0 0.0
      %1589 = vmatpush1.msra.mxu0 0.0
      %1590 = vmatprep.subr.mxu0 0.0
      %1591 = vmatpush1.msra.mxu0 0.0
      %1592 = vmatprep.subr.mxu0 0.0
      %1593 = vmatpush1.msra.mxu0 0.0
      %1594 = vmatprep.subr.mxu0 0.0
      %1595 = vmatpush1.msra.mxu0 0.0
      %1596 = vmatprep.subr.mxu0 0.0
      %1597 = vmatpush1.msra.mxu0 0.0
      %1598 = vmatprep.subr.mxu0 0.0
      %1599 = vmatpush1.msra.mxu0 0.0
      %1600 = vmatprep.subr.mxu0 0.0
      %1601 = vmatpush1.msra.mxu0 0.0
      %1602 = vmatprep.subr.mxu0 0.0
      %1603 = vmatpush1.msra.mxu0 0.0
      %1604 = vmatprep.subr.mxu0 0.0
      %1605 = vmatpush1.msra.mxu0 0.0
      %1606 = vmatprep.subr.mxu0 0.0
      %1607 = vmatpush1.msra.mxu0 0.0
      %1608 = vmatprep.subr.mxu0 0.0
      %1609 = vmatpush1.msra.mxu0 0.0
      %1610 = vmatprep.subr.mxu0 0.0
      %1611 = vmatpush1.msra.mxu0 0.0
      %1612 = vmatprep.subr.mxu0 0.0
      %1613 = vmatpush1.msra.mxu0 0.0
      %1614 = vmatprep.subr.mxu0 0.0
      %1615 = vmatpush1.msra.mxu0 0.0
      %1616 = vmatprep.subr.mxu0 0.0
      %1617 = vmatpush1.msra.mxu0 0.0
      %1618 = vmatprep.mubr.f32.mxu0 0.0
      %1619 = vmatmul.mubr.f32.gmra.mrb[0].mxu0 %v1550
      %v1620 = vpop.f32.mrb[0].mxu0
      %v1621 = vadd.f32 0.0, %v1620
      %v1622 = vpop.f32.mrb[0].mxu0
      %v1623 = vadd.f32 0.0, %v1622
      %1624 = vmatprep.mubr.f32.mxu0 0.0
      %1625 = vmatmul.mubr.f32.gmra.mrb[0].mxu0 %v1552
      %v1626 = vpop.f32.mrb[0].mxu0
      %v1627 = vadd.f32 0.0, %v1626
      %v1628 = vpop.f32.mrb[0].mxu0
      %v1629 = vadd.f32 0.0, %v1628
      %1630 = vdwg.mxu0
      %1635 = vrot.lane.b32.xlu0 %v1621, 13
      %v1636 = vpop.permute.xlu0 %1635
      %1637 = vrot.lane.b32.xlu0 %v1623, 13
      %v1638 = vpop.permute.xlu0 %1637
      %1639 = vrot.lane.b32.xlu0 %v1627, 13
      %v1640 = vpop.permute.xlu0 %1639
      %1641 = vrot.lane.b32.xlu0 %v1629, 13
      %v1642 = vpop.permute.xlu0 %1641
      %vm1643 = vcmask 105472
      %v1644 = vsel %vm1643, %v1636, %v1638
      %v1645 = vsel %vm1643, %v1640, %v1642
      %v1650 = vadd.f32 %v1526, %v1636
      %v1651 = vadd.f32 %v1527, %v1644
      %v1652 = vadd.f32 %v1528, %v1640
      %v1653 = vadd.f32 %v1529, %v1645
      %v1654 = vld [vmem:[%s2] sm:$0xff]
      %v1655 = vld [vmem:[%s2 + $0x8] sm:$0xff]
      %1657 = vset.pattern.permute.xlu0 0
      %1658 = vperm.xlu0 %1657, %v1654
      %v1659 = vpop.permute.xlu0 %1658
      %1662 = vset.pattern.permute.xlu0 0
      %1663 = vperm.xlu0 %1662, %v1655
      %v1664 = vpop.permute.xlu0 %1663
      %v1666 = vadd.f32 %v1650, %v1659
      %v1667 = vadd.f32 %v1651, %v1659
      %v1668 = vadd.f32 %v1652, %v1664
      %v1669 = vadd.f32 %v1653, %v1664
      %v1670 = vmax.f32 %v1666, 0.0
      %v1671 = vmax.f32 %v1667, 0.0
      %v1672 = vmax.f32 %v1668, 0.0
      %v1673 = vmax.f32 %v1669, 0.0
      %1678 = vrot.lane.b32.xlu0 %v1670, 115
      %v1679 = vpop.permute.xlu0 %1678
      %1680 = vrot.lane.b32.xlu0 %v1671, 115
      %v1681 = vpop.permute.xlu0 %1680
      %1682 = vrot.lane.b32.xlu0 %v1672, 115
      %v1683 = vpop.permute.xlu0 %1682
      %1684 = vrot.lane.b32.xlu0 %v1673, 115
      %v1685 = vpop.permute.xlu0 %1684
      %vm1686 = vcmask 941056
      %v1687 = vsel %vm1686, %v1679, %v1681
      %v1688 = vsel %vm1686, %v1683, %v1685
      %1693 = vst [vmem:[#allocation2 + $0x60] sm:$0xff] %v1687
      %1694 = vst.msk [vmem:[#allocation2 + $0x68] sm:$0xff] %vm391, %v1681
      %1695 = vst [vmem:[#allocation2 + $0x70] sm:$0xff] %v1688
      %1696 = vst.msk [vmem:[#allocation2 + $0x78] sm:$0xff] %vm391, %v1685
      %v1697 = vld [vmem:[%s3] sm:$0xff]
      %v1698 = vld [vmem:[%s3 + $0x8] sm:$0xff]
      %v1699 = vld [vmem:[%s3 + $0x10] sm:$0xff]
      %v1700 = vld [vmem:[%s3 + $0x18] sm:$0xff]
      %v1701 = vld [vmem:[#allocation2] sm:$0xff]
      %v1702 = vld [vmem:[#allocation2 + $0x10] sm:$0xff]
      %v1703 = vld [vmem:[#allocation2 + $0x20] sm:$0xff]
      %v1704 = vld [vmem:[#allocation2 + $0x30] sm:$0xff]
      %v1705 = vld [vmem:[#allocation2 + $0x40] sm:$0xff]
      %v1706 = vld [vmem:[#allocation2 + $0x50] sm:$0xff]
      %v1707 = vld [vmem:[#allocation2 + $0x60] sm:$0xff]
      %v1708 = vld [vmem:[#allocation2 + $0x70] sm:$0xff]
      %s1709 = scalar_lea.vmem %s3, 32
      %v1710 = vld [vmem:[%s1709] sm:$0xff]
      %v1711 = vld [vmem:[%s1709 + $0x8] sm:$0xff]
      %v1712 = vld [vmem:[%s1709 + $0x10] sm:$0xff]
      %v1713 = vld [vmem:[%s1709 + $0x18] sm:$0xff]
      %v1714 = vld [vmem:[#allocation2 + $0x8] sm:$0xff]
      %v1715 = vld [vmem:[#allocation2 + $0x18] sm:$0xff]
      %v1716 = vld [vmem:[#allocation2 + $0x28] sm:$0xff]
      %v1717 = vld [vmem:[#allocation2 + $0x38] sm:$0xff]
      %v1718 = vld [vmem:[#allocation2 + $0x48] sm:$0xff]
      %v1719 = vld [vmem:[#allocation2 + $0x58] sm:$0xff]
      %v1720 = vld [vmem:[#allocation2 + $0x68] sm:$0xff]
      %v1721 = vld [vmem:[#allocation2 + $0x78] sm:$0xff]
      %1738 = vrot.lane.b32.xlu0 %v1701, 127
      %v1739 = vpop.permute.xlu0 %1738
      %1740 = vrot.lane.b32.xlu0 %v1714, 127
      %v1741 = vpop.permute.xlu0 %1740
      %1742 = vrot.lane.b32.xlu0 %v1702, 127
      %v1743 = vpop.permute.xlu0 %1742
      %1744 = vrot.lane.b32.xlu0 %v1715, 127
      %v1745 = vpop.permute.xlu0 %1744
      %1746 = vrot.lane.b32.xlu0 %v1703, 127
      %v1747 = vpop.permute.xlu0 %1746
      %1748 = vrot.lane.b32.xlu0 %v1716, 127
      %v1749 = vpop.permute.xlu0 %1748
      %1750 = vrot.lane.b32.xlu0 %v1704, 127
      %v1751 = vpop.permute.xlu0 %1750
      %1752 = vrot.lane.b32.xlu0 %v1717, 127
      %v1753 = vpop.permute.xlu0 %1752
      %1754 = vrot.lane.b32.xlu0 %v1705, 127
      %v1755 = vpop.permute.xlu0 %1754
      %1756 = vrot.lane.b32.xlu0 %v1718, 127
      %v1757 = vpop.permute.xlu0 %1756
      %1758 = vrot.lane.b32.xlu0 %v1706, 127
      %v1759 = vpop.permute.xlu0 %1758
      %1760 = vrot.lane.b32.xlu0 %v1719, 127
      %v1761 = vpop.permute.xlu0 %1760
      %1762 = vrot.lane.b32.xlu0 %v1707, 127
      %v1763 = vpop.permute.xlu0 %1762
      %1764 = vrot.lane.b32.xlu0 %v1720, 127
      %v1765 = vpop.permute.xlu0 %1764
      %1766 = vrot.lane.b32.xlu0 %v1708, 127
      %v1767 = vpop.permute.xlu0 %1766
      %1768 = vrot.lane.b32.xlu0 %v1721, 127
      %v1769 = vpop.permute.xlu0 %1768
      %v1770 = vsel %vm882, %v1739, %v1741
      %v1771 = vsel %vm882, %v1743, %v1745
      %v1772 = vsel %vm882, %v1747, %v1749
      %v1773 = vsel %vm882, %v1751, %v1753
      %v1774 = vsel %vm882, %v1755, %v1757
      %v1775 = vsel %vm882, %v1759, %v1761
      %v1776 = vsel %vm882, %v1763, %v1765
      %v1777 = vsel %vm882, %v1767, %v1769
      %v1787 = vsel %vm414, %v1710, 0
      %v1790 = vsel %vm414, %v1711, 0
      %v1793 = vsel %vm414, %v1712, 0
      %v1796 = vsel %vm414, %v1713, 0
      %1798 = vmatprep.subr.mxu0 0.0
      %1799 = vmatpush1.msra.mxu0 %v1770
      %1800 = vmatprep.subr.mxu0 0.0
      %1801 = vmatpush1.msra.mxu0 %v1771
      %1802 = vmatprep.subr.mxu0 0.0
      %1803 = vmatpush1.msra.mxu0 %v1772
      %1804 = vmatprep.subr.mxu0 0.0
      %1805 = vmatpush1.msra.mxu0 %v1773
      %1806 = vmatprep.subr.mxu0 0.0
      %1807 = vmatpush1.msra.mxu0 %v1774
      %1808 = vmatprep.subr.mxu0 0.0
      %1809 = vmatpush1.msra.mxu0 %v1775
      %1810 = vmatprep.subr.mxu0 0.0
      %1811 = vmatpush1.msra.mxu0 %v1776
      %1812 = vmatprep.subr.mxu0 0.0
      %1813 = vmatpush1.msra.mxu0 %v1777
      %1814 = vmatprep.subr.mxu0 0.0
      %1815 = vmatpush1.msra.mxu0 0.0
      %1816 = vmatprep.subr.mxu0 0.0
      %1817 = vmatpush1.msra.mxu0 0.0
      %1818 = vmatprep.subr.mxu0 0.0
      %1819 = vmatpush1.msra.mxu0 0.0
      %1820 = vmatprep.subr.mxu0 0.0
      %1821 = vmatpush1.msra.mxu0 0.0
      %1822 = vmatprep.subr.mxu0 0.0
      %1823 = vmatpush1.msra.mxu0 0.0
      %1824 = vmatprep.subr.mxu0 0.0
      %1825 = vmatpush1.msra.mxu0 0.0
      %1826 = vmatprep.subr.mxu0 0.0
      %1827 = vmatpush1.msra.mxu0 0.0
      %1828 = vmatprep.subr.mxu0 0.0
      %1829 = vmatpush1.msra.mxu0 0.0
      %1830 = vmatprep.subr.mxu0 0.0
      %1831 = vmatpush1.msra.mxu0 0.0
      %1832 = vmatprep.subr.mxu0 0.0
      %1833 = vmatpush1.msra.mxu0 0.0
      %1834 = vmatprep.subr.mxu0 0.0
      %1835 = vmatpush1.msra.mxu0 0.0
      %1836 = vmatprep.subr.mxu0 0.0
      %1837 = vmatpush1.msra.mxu0 0.0
      %1838 = vmatprep.subr.mxu0 0.0
      %1839 = vmatpush1.msra.mxu0 0.0
      %1840 = vmatprep.subr.mxu0 0.0
      %1841 = vmatpush1.msra.mxu0 0.0
      %1842 = vmatprep.subr.mxu0 0.0
      %1843 = vmatpush1.msra.mxu0 0.0
      %1844 = vmatprep.subr.mxu0 0.0
      %1845 = vmatpush1.msra.mxu0 0.0
      %1846 = vmatprep.subr.mxu0 0.0
      %1847 = vmatpush1.msra.mxu0 0.0
      %1848 = vmatprep.subr.mxu0 0.0
      %1849 = vmatpush1.msra.mxu0 0.0
      %1850 = vmatprep.subr.mxu0 0.0
      %1851 = vmatpush1.msra.mxu0 0.0
      %1852 = vmatprep.subr.mxu0 0.0
      %1853 = vmatpush1.msra.mxu0 0.0
      %1854 = vmatprep.subr.mxu0 0.0
      %1855 = vmatpush1.msra.mxu0 0.0
      %1856 = vmatprep.subr.mxu0 0.0
      %1857 = vmatpush1.msra.mxu0 0.0
      %1858 = vmatprep.subr.mxu0 0.0
      %1859 = vmatpush1.msra.mxu0 0.0
      %1860 = vmatprep.subr.mxu0 0.0
      %1861 = vmatpush1.msra.mxu0 0.0
      %1862 = vmatprep.mubr.f32.mxu0 0.0
      %1863 = vmatmul.mubr.f32.gmra.mrb[0].mxu0 %v1787
      %v1864 = vpop.f32.mrb[0].mxu0
      %v1865 = vadd.f32 0.0, %v1864
      %v1866 = vpop.f32.mrb[0].mxu0
      %1867 = vmatprep.mubr.f32.mxu0 0.0
      %1868 = vmatmul.mubr.f32.gmra.mrb[0].mxu0 %v1790
      %v1869 = vpop.f32.mrb[0].mxu0
      %v1870 = vadd.f32 0.0, %v1869
      %v1871 = vpop.f32.mrb[0].mxu0
      %1872 = vmatprep.mubr.f32.mxu0 0.0
      %1873 = vmatmul.mubr.f32.gmra.mrb[0].mxu0 %v1793
      %v1874 = vpop.f32.mrb[0].mxu0
      %v1875 = vadd.f32 0.0, %v1874
      %v1876 = vpop.f32.mrb[0].mxu0
      %1877 = vmatprep.mubr.f32.mxu0 0.0
      %1878 = vmatmul.mubr.f32.gmra.mrb[0].mxu0 %v1796
      %v1879 = vpop.f32.mrb[0].mxu0
      %v1880 = vadd.f32 0.0, %v1879
      %v1881 = vpop.f32.mrb[0].mxu0
      %1882 = vdwg.mxu0
      %v1884 = vsel %vm414, %v1697, 0
      %v1887 = vsel %vm414, %v1698, 0
      %v1890 = vsel %vm414, %v1699, 0
      %v1893 = vsel %vm414, %v1700, 0
      %1895 = vmatprep.subr.mxu0 0.0
      %1896 = vmatpush1.msra.mxu0 %v1701
      %1897 = vmatprep.subr.mxu0 0.0
      %1898 = vmatpush1.msra.mxu0 %v1702
      %1899 = vmatprep.subr.mxu0 0.0
      %1900 = vmatpush1.msra.mxu0 %v1703
      %1901 = vmatprep.subr.mxu0 0.0
      %1902 = vmatpush1.msra.mxu0 %v1704
      %1903 = vmatprep.subr.mxu0 0.0
      %1904 = vmatpush1.msra.mxu0 %v1705
      %1905 = vmatprep.subr.mxu0 0.0
      %1906 = vmatpush1.msra.mxu0 %v1706
      %1907 = vmatprep.subr.mxu0 0.0
      %1908 = vmatpush1.msra.mxu0 %v1707
      %1909 = vmatprep.subr.mxu0 0.0
      %1910 = vmatpush1.msra.mxu0 %v1708
      %1911 = vmatprep.subr.mxu0 0.0
      %1912 = vmatpush1.msra.mxu0 0.0
      %1913 = vmatprep.subr.mxu0 0.0
      %1914 = vmatpush1.msra.mxu0 0.0
      %1915 = vmatprep.subr.mxu0 0.0
      %1916 = vmatpush1.msra.mxu0 0.0
      %1917 = vmatprep.subr.mxu0 0.0
      %1918 = vmatpush1.msra.mxu0 0.0
      %1919 = vmatprep.subr.mxu0 0.0
      %1920 = vmatpush1.msra.mxu0 0.0
      %1921 = vmatprep.subr.mxu0 0.0
      %1922 = vmatpush1.msra.mxu0 0.0
      %1923 = vmatprep.subr.mxu0 0.0
      %1924 = vmatpush1.msra.mxu0 0.0
      %1925 = vmatprep.subr.mxu0 0.0
      %1926 = vmatpush1.msra.mxu0 0.0
      %1927 = vmatprep.subr.mxu0 0.0
      %1928 = vmatpush1.msra.mxu0 0.0
      %1929 = vmatprep.subr.mxu0 0.0
      %1930 = vmatpush1.msra.mxu0 0.0
      %1931 = vmatprep.subr.mxu0 0.0
      %1932 = vmatpush1.msra.mxu0 0.0
      %1933 = vmatprep.subr.mxu0 0.0
      %1934 = vmatpush1.msra.mxu0 0.0
      %1935 = vmatprep.subr.mxu0 0.0
      %1936 = vmatpush1.msra.mxu0 0.0
      %1937 = vmatprep.subr.mxu0 0.0
      %1938 = vmatpush1.msra.mxu0 0.0
      %1939 = vmatprep.subr.mxu0 0.0
      %1940 = vmatpush1.msra.mxu0 0.0
      %1941 = vmatprep.subr.mxu0 0.0
      %1942 = vmatpush1.msra.mxu0 0.0
      %1943 = vmatprep.subr.mxu0 0.0
      %1944 = vmatpush1.msra.mxu0 0.0
      %1945 = vmatprep.subr.mxu0 0.0
      %1946 = vmatpush1.msra.mxu0 0.0
      %1947 = vmatprep.subr.mxu0 0.0
      %1948 = vmatpush1.msra.mxu0 0.0
      %1949 = vmatprep.subr.mxu0 0.0
      %1950 = vmatpush1.msra.mxu0 0.0
      %1951 = vmatprep.subr.mxu0 0.0
      %1952 = vmatpush1.msra.mxu0 0.0
      %1953 = vmatprep.subr.mxu0 0.0
      %1954 = vmatpush1.msra.mxu0 0.0
      %1955 = vmatprep.subr.mxu0 0.0
      %1956 = vmatpush1.msra.mxu0 0.0
      %1957 = vmatprep.subr.mxu0 0.0
      %1958 = vmatpush1.msra.mxu0 0.0
      %1959 = vmatprep.mubr.f32.mxu0 0.0
      %1960 = vmatmul.mubr.f32.gmra.mrb[0].mxu0 %v1884
      %v1961 = vpop.f32.mrb[0].mxu0
      %v1962 = vadd.f32 %v1865, %v1961
      %v1963 = vpop.f32.mrb[0].mxu0
      %1964 = vmatprep.mubr.f32.mxu0 0.0
      %1965 = vmatmul.mubr.f32.gmra.mrb[0].mxu0 %v1887
      %v1966 = vpop.f32.mrb[0].mxu0
      %v1967 = vadd.f32 %v1870, %v1966
      %v1968 = vpop.f32.mrb[0].mxu0
      %1969 = vmatprep.mubr.f32.mxu0 0.0
      %1970 = vmatmul.mubr.f32.gmra.mrb[0].mxu0 %v1890
      %v1971 = vpop.f32.mrb[0].mxu0
      %v1972 = vadd.f32 %v1875, %v1971
      %v1973 = vpop.f32.mrb[0].mxu0
      %1974 = vmatprep.mubr.f32.mxu0 0.0
      %1975 = vmatmul.mubr.f32.gmra.mrb[0].mxu0 %v1893
      %v1976 = vpop.f32.mrb[0].mxu0
      %v1977 = vadd.f32 %v1880, %v1976
      %v1978 = vpop.f32.mrb[0].mxu0
      %1979 = vdwg.mxu0
      %s1980 = scalar_lea.vmem %s3, 64
      %v1981 = vld [vmem:[%s1980] sm:$0xff]
      %v1982 = vld [vmem:[%s1980 + $0x8] sm:$0xff]
      %v1983 = vld [vmem:[%s1980 + $0x10] sm:$0xff]
      %v1984 = vld [vmem:[%s1980 + $0x18] sm:$0xff]
      %1985 = vrot.lane.b32.xlu0 %v1701, 116
      %v1986 = vpop.permute.xlu0 %1985
      %1987 = vrot.lane.b32.xlu0 %v1714, 116
      %v1988 = vpop.permute.xlu0 %1987
      %1989 = vrot.lane.b32.xlu0 %v1702, 116
      %v1990 = vpop.permute.xlu0 %1989
      %1991 = vrot.lane.b32.xlu0 %v1715, 116
      %v1992 = vpop.permute.xlu0 %1991
      %1993 = vrot.lane.b32.xlu0 %v1703, 116
      %v1994 = vpop.permute.xlu0 %1993
      %1995 = vrot.lane.b32.xlu0 %v1716, 116
      %v1996 = vpop.permute.xlu0 %1995
      %1997 = vrot.lane.b32.xlu0 %v1704, 116
      %v1998 = vpop.permute.xlu0 %1997
      %1999 = vrot.lane.b32.xlu0 %v1717, 116
      %v2000 = vpop.permute.xlu0 %1999
      %2001 = vrot.lane.b32.xlu0 %v1705, 116
      %v2002 = vpop.permute.xlu0 %2001
      %2003 = vrot.lane.b32.xlu0 %v1718, 116
      %v2004 = vpop.permute.xlu0 %2003
      %2005 = vrot.lane.b32.xlu0 %v1706, 116
      %v2006 = vpop.permute.xlu0 %2005
      %2007 = vrot.lane.b32.xlu0 %v1719, 116
      %v2008 = vpop.permute.xlu0 %2007
      %2009 = vrot.lane.b32.xlu0 %v1707, 116
      %v2010 = vpop.permute.xlu0 %2009
      %2011 = vrot.lane.b32.xlu0 %v1720, 116
      %v2012 = vpop.permute.xlu0 %2011
      %2013 = vrot.lane.b32.xlu0 %v1708, 116
      %v2014 = vpop.permute.xlu0 %2013
      %2015 = vrot.lane.b32.xlu0 %v1721, 116
      %v2016 = vpop.permute.xlu0 %2015
      %v2017 = vsel %vm1171, %v1986, %v1988
      %v2018 = vsel %vm1171, %v1990, %v1992
      %v2019 = vsel %vm1171, %v1994, %v1996
      %v2020 = vsel %vm1171, %v1998, %v2000
      %v2021 = vsel %vm1171, %v2002, %v2004
      %v2022 = vsel %vm1171, %v2006, %v2008
      %v2023 = vsel %vm1171, %v2010, %v2012
      %v2024 = vsel %vm1171, %v2014, %v2016
      %v2034 = vsel %vm414, %v1981, 0
      %v2037 = vsel %vm414, %v1982, 0
      %v2040 = vsel %vm414, %v1983, 0
      %v2043 = vsel %vm414, %v1984, 0
      %2045 = vmatprep.subr.mxu0 0.0
      %2046 = vmatpush1.msra.mxu0 %v2017
      %2047 = vmatprep.subr.mxu0 0.0
      %2048 = vmatpush1.msra.mxu0 %v2018
      %2049 = vmatprep.subr.mxu0 0.0
      %2050 = vmatpush1.msra.mxu0 %v2019
      %2051 = vmatprep.subr.mxu0 0.0
      %2052 = vmatpush1.msra.mxu0 %v2020
      %2053 = vmatprep.subr.mxu0 0.0
      %2054 = vmatpush1.msra.mxu0 %v2021
      %2055 = vmatprep.subr.mxu0 0.0
      %2056 = vmatpush1.msra.mxu0 %v2022
      %2057 = vmatprep.subr.mxu0 0.0
      %2058 = vmatpush1.msra.mxu0 %v2023
      %2059 = vmatprep.subr.mxu0 0.0
      %2060 = vmatpush1.msra.mxu0 %v2024
      %2061 = vmatprep.subr.mxu0 0.0
      %2062 = vmatpush1.msra.mxu0 0.0
      %2063 = vmatprep.subr.mxu0 0.0
      %2064 = vmatpush1.msra.mxu0 0.0
      %2065 = vmatprep.subr.mxu0 0.0
      %2066 = vmatpush1.msra.mxu0 0.0
      %2067 = vmatprep.subr.mxu0 0.0
      %2068 = vmatpush1.msra.mxu0 0.0
      %2069 = vmatprep.subr.mxu0 0.0
      %2070 = vmatpush1.msra.mxu0 0.0
      %2071 = vmatprep.subr.mxu0 0.0
      %2072 = vmatpush1.msra.mxu0 0.0
      %2073 = vmatprep.subr.mxu0 0.0
      %2074 = vmatpush1.msra.mxu0 0.0
      %2075 = vmatprep.subr.mxu0 0.0
      %2076 = vmatpush1.msra.mxu0 0.0
      %2077 = vmatprep.subr.mxu0 0.0
      %2078 = vmatpush1.msra.mxu0 0.0
      %2079 = vmatprep.subr.mxu0 0.0
      %2080 = vmatpush1.msra.mxu0 0.0
      %2081 = vmatprep.subr.mxu0 0.0
      %2082 = vmatpush1.msra.mxu0 0.0
      %2083 = vmatprep.subr.mxu0 0.0
      %2084 = vmatpush1.msra.mxu0 0.0
      %2085 = vmatprep.subr.mxu0 0.0
      %2086 = vmatpush1.msra.mxu0 0.0
      %2087 = vmatprep.subr.mxu0 0.0
      %2088 = vmatpush1.msra.mxu0 0.0
      %2089 = vmatprep.subr.mxu0 0.0
      %2090 = vmatpush1.msra.mxu0 0.0
      %2091 = vmatprep.subr.mxu0 0.0
      %2092 = vmatpush1.msra.mxu0 0.0
      %2093 = vmatprep.subr.mxu0 0.0
      %2094 = vmatpush1.msra.mxu0 0.0
      %2095 = vmatprep.subr.mxu0 0.0
      %2096 = vmatpush1.msra.mxu0 0.0
      %2097 = vmatprep.subr.mxu0 0.0
      %2098 = vmatpush1.msra.mxu0 0.0
      %2099 = vmatprep.subr.mxu0 0.0
      %2100 = vmatpush1.msra.mxu0 0.0
      %2101 = vmatprep.subr.mxu0 0.0
      %2102 = vmatpush1.msra.mxu0 0.0
      %2103 = vmatprep.subr.mxu0 0.0
      %2104 = vmatpush1.msra.mxu0 0.0
      %2105 = vmatprep.subr.mxu0 0.0
      %2106 = vmatpush1.msra.mxu0 0.0
      %2107 = vmatprep.subr.mxu0 0.0
      %2108 = vmatpush1.msra.mxu0 0.0
      %2109 = vmatprep.mubr.f32.mxu0 0.0
      %2110 = vmatmul.mubr.f32.gmra.mrb[0].mxu0 %v2034
      %v2111 = vpop.f32.mrb[0].mxu0
      %v2112 = vadd.f32 0.0, %v2111
      %v2113 = vpop.f32.mrb[0].mxu0
      %2114 = vmatprep.mubr.f32.mxu0 0.0
      %2115 = vmatmul.mubr.f32.gmra.mrb[0].mxu0 %v2037
      %v2116 = vpop.f32.mrb[0].mxu0
      %v2117 = vadd.f32 0.0, %v2116
      %v2118 = vpop.f32.mrb[0].mxu0
      %2119 = vmatprep.mubr.f32.mxu0 0.0
      %2120 = vmatmul.mubr.f32.gmra.mrb[0].mxu0 %v2040
      %v2121 = vpop.f32.mrb[0].mxu0
      %v2122 = vadd.f32 0.0, %v2121
      %v2123 = vpop.f32.mrb[0].mxu0
      %2124 = vmatprep.mubr.f32.mxu0 0.0
      %2125 = vmatmul.mubr.f32.gmra.mrb[0].mxu0 %v2043
      %v2126 = vpop.f32.mrb[0].mxu0
      %v2127 = vadd.f32 0.0, %v2126
      %v2128 = vpop.f32.mrb[0].mxu0
      %2129 = vdwg.mxu0
      %v2130 = vadd.f32 %v1962, %v2112
      %v2131 = vadd.f32 %v1967, %v2117
      %v2132 = vadd.f32 %v1972, %v2122
      %v2133 = vadd.f32 %v1977, %v2127
      %s2134 = scalar_lea.vmem %s3, 96
      %v2135 = vld [vmem:[%s2134] sm:$0xff]
      %v2136 = vld [vmem:[%s2134 + $0x8] sm:$0xff]
      %v2137 = vld [vmem:[%s2134 + $0x10] sm:$0xff]
      %v2138 = vld [vmem:[%s2134 + $0x18] sm:$0xff]
      %2139 = vrot.lane.b32.xlu0 %v1701, 115
      %v2140 = vpop.permute.xlu0 %2139
      %2141 = vrot.lane.b32.xlu0 %v1714, 115
      %v2142 = vpop.permute.xlu0 %2141
      %2143 = vrot.lane.b32.xlu0 %v1702, 115
      %v2144 = vpop.permute.xlu0 %2143
      %2145 = vrot.lane.b32.xlu0 %v1715, 115
      %v2146 = vpop.permute.xlu0 %2145
      %2147 = vrot.lane.b32.xlu0 %v1703, 115
      %v2148 = vpop.permute.xlu0 %2147
      %2149 = vrot.lane.b32.xlu0 %v1716, 115
      %v2150 = vpop.permute.xlu0 %2149
      %2151 = vrot.lane.b32.xlu0 %v1704, 115
      %v2152 = vpop.permute.xlu0 %2151
      %2153 = vrot.lane.b32.xlu0 %v1717, 115
      %v2154 = vpop.permute.xlu0 %2153
      %2155 = vrot.lane.b32.xlu0 %v1705, 115
      %v2156 = vpop.permute.xlu0 %2155
      %2157 = vrot.lane.b32.xlu0 %v1718, 115
      %v2158 = vpop.permute.xlu0 %2157
      %2159 = vrot.lane.b32.xlu0 %v1706, 115
      %v2160 = vpop.permute.xlu0 %2159
      %2161 = vrot.lane.b32.xlu0 %v1719, 115
      %v2162 = vpop.permute.xlu0 %2161
      %2163 = vrot.lane.b32.xlu0 %v1707, 115
      %v2164 = vpop.permute.xlu0 %2163
      %2165 = vrot.lane.b32.xlu0 %v1720, 115
      %v2166 = vpop.permute.xlu0 %2165
      %2167 = vrot.lane.b32.xlu0 %v1708, 115
      %v2168 = vpop.permute.xlu0 %2167
      %2169 = vrot.lane.b32.xlu0 %v1721, 115
      %v2170 = vpop.permute.xlu0 %2169
      %v2171 = vsel %vm1686, %v2140, %v2142
      %v2172 = vsel %vm1686, %v2144, %v2146
      %v2173 = vsel %vm1686, %v2148, %v2150
      %v2174 = vsel %vm1686, %v2152, %v2154
      %v2175 = vsel %vm1686, %v2156, %v2158
      %v2176 = vsel %vm1686, %v2160, %v2162
      %v2177 = vsel %vm1686, %v2164, %v2166
      %v2178 = vsel %vm1686, %v2168, %v2170
      %v2188 = vsel %vm414, %v2135, 0
      %v2191 = vsel %vm414, %v2136, 0
      %v2194 = vsel %vm414, %v2137, 0
      %v2197 = vsel %vm414, %v2138, 0
      %2199 = vmatprep.subr.mxu0 0.0
      %2200 = vmatpush1.msra.mxu0 %v2171
      %2201 = vmatprep.subr.mxu0 0.0
      %2202 = vmatpush1.msra.mxu0 %v2172
      %2203 = vmatprep.subr.mxu0 0.0
      %2204 = vmatpush1.msra.mxu0 %v2173
      %2205 = vmatprep.subr.mxu0 0.0
      %2206 = vmatpush1.msra.mxu0 %v2174
      %2207 = vmatprep.subr.mxu0 0.0
      %2208 = vmatpush1.msra.mxu0 %v2175
      %2209 = vmatprep.subr.mxu0 0.0
      %2210 = vmatpush1.msra.mxu0 %v2176
      %2211 = vmatprep.subr.mxu0 0.0
      %2212 = vmatpush1.msra.mxu0 %v2177
      %2213 = vmatprep.subr.mxu0 0.0
      %2214 = vmatpush1.msra.mxu0 %v2178
      %2215 = vmatprep.subr.mxu0 0.0
      %2216 = vmatpush1.msra.mxu0 0.0
      %2217 = vmatprep.subr.mxu0 0.0
      %2218 = vmatpush1.msra.mxu0 0.0
      %2219 = vmatprep.subr.mxu0 0.0
      %2220 = vmatpush1.msra.mxu0 0.0
      %2221 = vmatprep.subr.mxu0 0.0
      %2222 = vmatpush1.msra.mxu0 0.0
      %2223 = vmatprep.subr.mxu0 0.0
      %2224 = vmatpush1.msra.mxu0 0.0
      %2225 = vmatprep.subr.mxu0 0.0
      %2226 = vmatpush1.msra.mxu0 0.0
      %2227 = vmatprep.subr.mxu0 0.0
      %2228 = vmatpush1.msra.mxu0 0.0
      %2229 = vmatprep.subr.mxu0 0.0
      %2230 = vmatpush1.msra.mxu0 0.0
      %2231 = vmatprep.subr.mxu0 0.0
      %2232 = vmatpush1.msra.mxu0 0.0
      %2233 = vmatprep.subr.mxu0 0.0
      %2234 = vmatpush1.msra.mxu0 0.0
      %2235 = vmatprep.subr.mxu0 0.0
      %2236 = vmatpush1.msra.mxu0 0.0
      %2237 = vmatprep.subr.mxu0 0.0
      %2238 = vmatpush1.msra.mxu0 0.0
      %2239 = vmatprep.subr.mxu0 0.0
      %2240 = vmatpush1.msra.mxu0 0.0
      %2241 = vmatprep.subr.mxu0 0.0
      %2242 = vmatpush1.msra.mxu0 0.0
      %2243 = vmatprep.subr.mxu0 0.0
      %2244 = vmatpush1.msra.mxu0 0.0
      %2245 = vmatprep.subr.mxu0 0.0
      %2246 = vmatpush1.msra.mxu0 0.0
      %2247 = vmatprep.subr.mxu0 0.0
      %2248 = vmatpush1.msra.mxu0 0.0
      %2249 = vmatprep.subr.mxu0 0.0
      %2250 = vmatpush1.msra.mxu0 0.0
      %2251 = vmatprep.subr.mxu0 0.0
      %2252 = vmatpush1.msra.mxu0 0.0
      %2253 = vmatprep.subr.mxu0 0.0
      %2254 = vmatpush1.msra.mxu0 0.0
      %2255 = vmatprep.subr.mxu0 0.0
      %2256 = vmatpush1.msra.mxu0 0.0
      %2257 = vmatprep.subr.mxu0 0.0
      %2258 = vmatpush1.msra.mxu0 0.0
      %2259 = vmatprep.subr.mxu0 0.0
      %2260 = vmatpush1.msra.mxu0 0.0
      %2261 = vmatprep.subr.mxu0 0.0
      %2262 = vmatpush1.msra.mxu0 0.0
      %2263 = vmatprep.mubr.f32.mxu0 0.0
      %2264 = vmatmul.mubr.f32.gmra.mrb[0].mxu0 %v2188
      %v2265 = vpop.f32.mrb[0].mxu0
      %v2266 = vadd.f32 0.0, %v2265
      %v2267 = vpop.f32.mrb[0].mxu0
      %2268 = vmatprep.mubr.f32.mxu0 0.0
      %2269 = vmatmul.mubr.f32.gmra.mrb[0].mxu0 %v2191
      %v2270 = vpop.f32.mrb[0].mxu0
      %v2271 = vadd.f32 0.0, %v2270
      %v2272 = vpop.f32.mrb[0].mxu0
      %2273 = vmatprep.mubr.f32.mxu0 0.0
      %2274 = vmatmul.mubr.f32.gmra.mrb[0].mxu0 %v2194
      %v2275 = vpop.f32.mrb[0].mxu0
      %v2276 = vadd.f32 0.0, %v2275
      %v2277 = vpop.f32.mrb[0].mxu0
      %2278 = vmatprep.mubr.f32.mxu0 0.0
      %2279 = vmatmul.mubr.f32.gmra.mrb[0].mxu0 %v2197
      %v2280 = vpop.f32.mrb[0].mxu0
      %v2281 = vadd.f32 0.0, %v2280
      %v2282 = vpop.f32.mrb[0].mxu0
      %2283 = vdwg.mxu0
      %v2284 = vadd.f32 %v2130, %v2266
      %v2285 = vadd.f32 %v2131, %v2271
      %v2286 = vadd.f32 %v2132, %v2276
      %v2287 = vadd.f32 %v2133, %v2281
      %v2288 = vld [vmem:[%s4] sm:$0xff]
      %v2289 = vld [vmem:[%s4 + $0x8] sm:$0xff]
      %v2290 = vld [vmem:[%s4 + $0x10] sm:$0xff]
      %v2291 = vld [vmem:[%s4 + $0x18] sm:$0xff]
      %2293 = vset.pattern.permute.xlu0 0
      %2294 = vperm.xlu0 %2293, %v2288
      %v2295 = vpop.permute.xlu0 %2294
      %2298 = vset.pattern.permute.xlu0 0
      %2299 = vperm.xlu0 %2298, %v2289
      %v2300 = vpop.permute.xlu0 %2299
      %2303 = vset.pattern.permute.xlu0 0
      %2304 = vperm.xlu0 %2303, %v2290
      %v2305 = vpop.permute.xlu0 %2304
      %2308 = vset.pattern.permute.xlu0 0
      %2309 = vperm.xlu0 %2308, %v2291
      %v2310 = vpop.permute.xlu0 %2309
      %v2312 = vadd.f32 %v2284, %v2295
      %v2313 = vadd.f32 %v2285, %v2300
      %v2314 = vadd.f32 %v2286, %v2305
      %v2315 = vadd.f32 %v2287, %v2310
      %v2316 = vmax.f32 %v2312, 0.0
      %v2317 = vmax.f32 %v2313, 0.0
      %v2318 = vmax.f32 %v2314, 0.0
      %v2319 = vmax.f32 %v2315, 0.0
      %v2320 = vpack.c.bf16 %v2317, %v2316
      %v2321 = vpack.c.bf16 %v2319, %v2318
      %v2324 = vunpack.c.l.b16 %v2320
      %v2325 = vunpack.c.h.b16 %v2320
      %v2326 = vunpack.c.l.b16 %v2321
      %v2327 = vunpack.c.h.b16 %v2321
      %v2328 = vpack.c.b16 %v2324, %v2324
      %v2329 = vpack.c.b16 %v2325, %v2325
      %v2330 = vpack.c.b16 %v2326, %v2326
      %v2331 = vpack.c.b16 %v2327, %v2327
      %2336 = vst [vmem:[%s224] sm:$0xf] %v2328
      %2337 = vst [vmem:[%s224 + $0x4] sm:$0xf] %v2329
      %2338 = vst [vmem:[%s224 + $0x8] sm:$0xf] %v2330
      %2339 = vst [vmem:[%s224 + $0xc] sm:$0xf] %v2331
      %p2340 = scmp.lt.s32.totalorder %s16, 1
      %s2341 = scalar_select %p2340, %s16, 1
      %s2342 = smul.addr %s2341, 4
      %s2343 = smul.addr %s2342, 4
      %s2344 = scalar_lea.vmem %s5, %s2343
      // Predicated region
      $region41: #{q_network2_forward.2} parent=39 // pred_check
        %p2345 = pneg %p144
      $region42: #{q_network2_forward.2} parent=39 // pred_check_branch
        %2347 = sbr.rel (%p2345) target = $region44
      $region43: #{q_network2_forward.2} parent=39 // pred_region
        _
      $region44: #{q_network2_forward.2} parent=39 // pred_fallthru
        _
    $region40: #{q_network2_forward.2} parent=5 // pred_fallthru
      _
    %p2348 = scmp.le.s32.totalorder 2, %s11
    // Predicated region
    $region45: #{q_network2_forward.2} parent=5 // pred_check
      %p2349 = pneg %p2348
    $region46: #{q_network2_forward.2} parent=5 // pred_check_branch
      %2351 = sbr.rel (%p2349) target = $region48
    $region47: #{q_network2_forward.2} parent=5 // pred_region
      %s2352 = ssub.s32 %s11, 2
      // Predicated region
      $region49: #{q_network2_forward.2} parent=47 // pred_check
        %p2353 = pneg %p150
      $region50: #{q_network2_forward.2} parent=47 // pred_check_branch
        %2355 = sbr.rel (%p2353) target = $region52
      $region51: #{q_network2_forward.2} parent=47 // pred_region
        %p2356 = scmp.lt.s32.totalorder %s17, 1
        %s2357 = scalar_select %p2356, %s17, 1
        %s2358 = smul.addr %s2357, 4
        %s2359 = smul.addr %s2358, 4
        %s2360 = scalar_lea.vmem %s5, %s2359
      $region52: #{q_network2_forward.2} parent=47 // pred_fallthru
        _
    $region48: #{q_network2_forward.2} parent=5 // pred_fallthru
      _
  $region6: #{q_network2_forward.2} parent=0 // loop_footer
    %s15 = sadd.s32 1, %s11
  $region7: #{q_network2_forward.2} parent=0 // loop_footer_branch
    %10 = sbr.rel target = $region3
  $region8: #{q_network2_forward.2} parent=0 // loop_exit
    _

// kernel: q_network2_forward.3
$region0: #{q_network2_forward.3}
  #allocation0 [shape = 'u32[]', space=smem, size = 0x4, offset = 0x4, fixed_abs, tag = 'smem constant byte address 0x4 - core index']
  #allocation1 [shape = 'u32[144,128]{1,0:T(1,128)}', space=vmem, size = 0x12000, scoped, tag = 'internal scratch']
  %s0 = inlined_call_operand.vmem [shape: bf16[8,4096], index: 0, kind: input, shape index: {}]
  %s1 = inlined_call_operand.vmem [shape: bf16[4096,256], index: 1, kind: input, shape index: {}]
  %s2 = inlined_call_operand.vmem [shape: f32[1,256], index: 2, kind: input, shape index: {}]
  %s3 = inlined_call_operand.vmem [shape: bf16[256,128], index: 3, kind: input, shape index: {}]
  %s4 = inlined_call_operand.vmem [shape: f32[1,128], index: 4, kind: input, shape index: {}]
  %s5 = inlined_call_operand.vmem [shape: f32[8,128], index: 5, kind: output, shape index: {}]
  %s6 = sld [smem:[#allocation0]]
  $region30: #{q_network2_forward.3} parent=0
    _
  %s8 = ssub.s32 1, %s6
  %s9 = scalar_select 0, %s8, %s6
  // Predicated region
  $region2: #{q_network2_forward.3} parent=0 // pred_check
    _
  $region3: #{q_network2_forward.3} parent=0 // pred_check_branch
    %11 = sbr.rel (0) target = $region5
  $region4: #{q_network2_forward.3} parent=0 // pred_region
    _
  $region5: #{q_network2_forward.3} parent=0 // pred_fallthru
    _
  // Predicated region
  $region6: #{q_network2_forward.3} parent=0 // pred_check
    _
  $region7: #{q_network2_forward.3} parent=0 // pred_check_branch
    %13 = sbr.rel (0) target = $region9
  $region8: #{q_network2_forward.3} parent=0 // pred_region
    _
  $region9: #{q_network2_forward.3} parent=0 // pred_fallthru
    _
  // Predicated region
  $region10: #{q_network2_forward.3} parent=0 // pred_check
    _
  $region11: #{q_network2_forward.3} parent=0 // pred_check_branch
    %15 = sbr.rel (0) target = $region13
  $region12: #{q_network2_forward.3} parent=0 // pred_region
    _
  $region13: #{q_network2_forward.3} parent=0 // pred_fallthru
    _
  // Predicated region
  $region14: #{q_network2_forward.3} parent=0 // pred_check
    _
  $region15: #{q_network2_forward.3} parent=0 // pred_check_branch
    %17 = sbr.rel (0) target = $region17
  $region16: #{q_network2_forward.3} parent=0 // pred_region
    _
  $region17: #{q_network2_forward.3} parent=0 // pred_fallthru
    _
  // Predicated region
  $region18: #{q_network2_forward.3} parent=0 // pred_check
    _
  $region19: #{q_network2_forward.3} parent=0 // pred_check_branch
    %19 = sbr.rel (0) target = $region21
  $region20: #{q_network2_forward.3} parent=0 // pred_region
    _
  $region21: #{q_network2_forward.3} parent=0 // pred_fallthru
    _
  %v21 = vld [vmem:[%s0] sm:$0xff]
  %v22 = vld [vmem:[%s0 + $0x8] sm:$0xff]
  %v23 = vld [vmem:[%s0 + $0x10] sm:$0xff]
  %v24 = vld [vmem:[%s0 + $0x18] sm:$0xff]
  %v25 = vld [vmem:[%s0 + $0x20] sm:$0xff]
  %v26 = vld [vmem:[%s0 + $0x28] sm:$0xff]
  %v27 = vld [vmem:[%s0 + $0x30] sm:$0xff]
  %v28 = vld [vmem:[%s0 + $0x38] sm:$0xff]
  %v29 = vld [vmem:[%s0 + $0x40] sm:$0xff]
  %v30 = vld [vmem:[%s0 + $0x48] sm:$0xff]
  %v31 = vld [vmem:[%s0 + $0x50] sm:$0xff]
  %v32 = vld [vmem:[%s0 + $0x58] sm:$0xff]
  %v33 = vld [vmem:[%s0 + $0x60] sm:$0xff]
  %v34 = vld [vmem:[%s0 + $0x68] sm:$0xff]
  %v35 = vld [vmem:[%s0 + $0x70] sm:$0xff]
  %v36 = vld [vmem:[%s0 + $0x78] sm:$0xff]
  %v37 = vld [vmem:[%s1] sm:$0xff]
  %v38 = vld [vmem:[%s1 + $0x8] sm:$0xff]
  %v39 = vld [vmem:[%s1 + $0x10] sm:$0xff]
  %v40 = vld [vmem:[%s1 + $0x18] sm:$0xff]
  %v41 = vld [vmem:[%s1 + $0x20] sm:$0xff]
  %v42 = vld [vmem:[%s1 + $0x28] sm:$0xff]
  %v43 = vld [vmem:[%s1 + $0x30] sm:$0xff]
  %v44 = vld [vmem:[%s1 + $0x38] sm:$0xff]
  %v45 = vld [vmem:[%s1 + $0x40] sm:$0xff]
  %v46 = vld [vmem:[%s1 + $0x48] sm:$0xff]
  %v47 = vld [vmem:[%s1 + $0x50] sm:$0xff]
  %v48 = vld [vmem:[%s1 + $0x58] sm:$0xff]
  %v49 = vld [vmem:[%s1 + $0x60] sm:$0xff]
  %v50 = vld [vmem:[%s1 + $0x68] sm:$0xff]
  %v51 = vld [vmem:[%s1 + $0x70] sm:$0xff]
  %v52 = vld [vmem:[%s1 + $0x78] sm:$0xff]
  %v53 = vld [vmem:[%s1 + $0x80] sm:$0xff]
  %v54 = vld [vmem:[%s1 + $0x88] sm:$0xff]
  %v55 = vld [vmem:[%s1 + $0x90] sm:$0xff]
  %v56 = vld [vmem:[%s1 + $0x98] sm:$0xff]
  %v57 = vld [vmem:[%s1 + $0xa0] sm:$0xff]
  %v58 = vld [vmem:[%s1 + $0xa8] sm:$0xff]
  %v59 = vld [vmem:[%s1 + $0xb0] sm:$0xff]
  %v60 = vld [vmem:[%s1 + $0xb8] sm:$0xff]
  %v61 = vld [vmem:[%s1 + $0xc0] sm:$0xff]
  %v62 = vld [vmem:[%s1 + $0xc8] sm:$0xff]
  %v63 = vld [vmem:[%s1 + $0xd0] sm:$0xff]
  %v64 = vld [vmem:[%s1 + $0xd8] sm:$0xff]
  %v65 = vld [vmem:[%s1 + $0xe0] sm:$0xff]
  %v66 = vld [vmem:[%s1 + $0xe8] sm:$0xff]
  %v67 = vld [vmem:[%s1 + $0xf0] sm:$0xff]
  %v68 = vld [vmem:[%s1 + $0xf8] sm:$0xff]
  %v69 = vld [vmem:[%s1 + $0x100] sm:$0xff]
  %v70 = vld [vmem:[%s1 + $0x108] sm:$0xff]
  %v71 = vld [vmem:[%s1 + $0x110] sm:$0xff]
  %v72 = vld [vmem:[%s1 + $0x118] sm:$0xff]
  %v73 = vld [vmem:[%s1 + $0x120] sm:$0xff]
  %v74 = vld [vmem:[%s1 + $0x128] sm:$0xff]
  %v75 = vld [vmem:[%s1 + $0x130] sm:$0xff]
  %v76 = vld [vmem:[%s1 + $0x138] sm:$0xff]
  %v77 = vld [vmem:[%s1 + $0x140] sm:$0xff]
  %v78 = vld [vmem:[%s1 + $0x148] sm:$0xff]
  %v79 = vld [vmem:[%s1 + $0x150] sm:$0xff]
  %v80 = vld [vmem:[%s1 + $0x158] sm:$0xff]
  %v81 = vld [vmem:[%s1 + $0x160] sm:$0xff]
  %v82 = vld [vmem:[%s1 + $0x168] sm:$0xff]
  %v83 = vld [vmem:[%s1 + $0x170] sm:$0xff]
  %v84 = vld [vmem:[%s1 + $0x178] sm:$0xff]
  %v85 = vld [vmem:[%s1 + $0x180] sm:$0xff]
  %v86 = vld [vmem:[%s1 + $0x188] sm:$0xff]
  %v87 = vld [vmem:[%s1 + $0x190] sm:$0xff]
  %v88 = vld [vmem:[%s1 + $0x198] sm:$0xff]
  %v89 = vld [vmem:[%s1 + $0x1a0] sm:$0xff]
  %v90 = vld [vmem:[%s1 + $0x1a8] sm:$0xff]
  %v91 = vld [vmem:[%s1 + $0x1b0] sm:$0xff]
  %v92 = vld [vmem:[%s1 + $0x1b8] sm:$0xff]
  %v93 = vld [vmem:[%s1 + $0x1c0] sm:$0xff]
  %v94 = vld [vmem:[%s1 + $0x1c8] sm:$0xff]
  %v95 = vld [vmem:[%s1 + $0x1d0] sm:$0xff]
  %v96 = vld [vmem:[%s1 + $0x1d8] sm:$0xff]
  %v97 = vld [vmem:[%s1 + $0x1e0] sm:$0xff]
  %v98 = vld [vmem:[%s1 + $0x1e8] sm:$0xff]
  %v99 = vld [vmem:[%s1 + $0x1f0] sm:$0xff]
  %v100 = vld [vmem:[%s1 + $0x1f8] sm:$0xff]
  %v101 = vld [vmem:[%s1 + $0x200] sm:$0xff]
  %v102 = vld [vmem:[%s1 + $0x208] sm:$0xff]
  %v103 = vld [vmem:[%s1 + $0x210] sm:$0xff]
  %v104 = vld [vmem:[%s1 + $0x218] sm:$0xff]
  %v105 = vld [vmem:[%s1 + $0x220] sm:$0xff]
  %v106 = vld [vmem:[%s1 + $0x228] sm:$0xff]
  %v107 = vld [vmem:[%s1 + $0x230] sm:$0xff]
  %v108 = vld [vmem:[%s1 + $0x238] sm:$0xff]
  %v109 = vld [vmem:[%s1 + $0x240] sm:$0xff]
  %v110 = vld [vmem:[%s1 + $0x248] sm:$0xff]
  %v111 = vld [vmem:[%s1 + $0x250] sm:$0xff]
  %v112 = vld [vmem:[%s1 + $0x258] sm:$0xff]
  %v113 = vld [vmem:[%s1 + $0x260] sm:$0xff]
  %v114 = vld [vmem:[%s1 + $0x268] sm:$0xff]
  %v115 = vld [vmem:[%s1 + $0x270] sm:$0xff]
  %v116 = vld [vmem:[%s1 + $0x278] sm:$0xff]
  %v117 = vld [vmem:[%s1 + $0x280] sm:$0xff]
  %v118 = vld [vmem:[%s1 + $0x288] sm:$0xff]
  %v119 = vld [vmem:[%s1 + $0x290] sm:$0xff]
  %v120 = vld [vmem:[%s1 + $0x298] sm:$0xff]
  %v121 = vld [vmem:[%s1 + $0x2a0] sm:$0xff]
  %v122 = vld [vmem:[%s1 + $0x2a8] sm:$0xff]
  %v123 = vld [vmem:[%s1 + $0x2b0] sm:$0xff]
  %v124 = vld [vmem:[%s1 + $0x2b8] sm:$0xff]
  %v125 = vld [vmem:[%s1 + $0x2c0] sm:$0xff]
  %v126 = vld [vmem:[%s1 + $0x2c8] sm:$0xff]
  %v127 = vld [vmem:[%s1 + $0x2d0] sm:$0xff]
  %v128 = vld [vmem:[%s1 + $0x2d8] sm:$0xff]
  %v129 = vld [vmem:[%s1 + $0x2e0] sm:$0xff]
  %v130 = vld [vmem:[%s1 + $0x2e8] sm:$0xff]
  %v131 = vld [vmem:[%s1 + $0x2f0] sm:$0xff]
  %v132 = vld [vmem:[%s1 + $0x2f8] sm:$0xff]
  %v133 = vld [vmem:[%s1 + $0x300] sm:$0xff]
  %v134 = vld [vmem:[%s1 + $0x308] sm:$0xff]
  %v135 = vld [vmem:[%s1 + $0x310] sm:$0xff]
  %v136 = vld [vmem:[%s1 + $0x318] sm:$0xff]
  %v137 = vld [vmem:[%s1 + $0x320] sm:$0xff]
  %v138 = vld [vmem:[%s1 + $0x328] sm:$0xff]
  %v139 = vld [vmem:[%s1 + $0x330] sm:$0xff]
  %v140 = vld [vmem:[%s1 + $0x338] sm:$0xff]
  %v141 = vld [vmem:[%s1 + $0x340] sm:$0xff]
  %v142 = vld [vmem:[%s1 + $0x348] sm:$0xff]
  %v143 = vld [vmem:[%s1 + $0x350] sm:$0xff]
  %v144 = vld [vmem:[%s1 + $0x358] sm:$0xff]
  %v145 = vld [vmem:[%s1 + $0x360] sm:$0xff]
  %v146 = vld [vmem:[%s1 + $0x368] sm:$0xff]
  %v147 = vld [vmem:[%s1 + $0x370] sm:$0xff]
  %v148 = vld [vmem:[%s1 + $0x378] sm:$0xff]
  %v149 = vld [vmem:[%s1 + $0x380] sm:$0xff]
  %v150 = vld [vmem:[%s1 + $0x388] sm:$0xff]
  %v151 = vld [vmem:[%s1 + $0x390] sm:$0xff]
  %v152 = vld [vmem:[%s1 + $0x398] sm:$0xff]
  %v153 = vld [vmem:[%s1 + $0x3a0] sm:$0xff]
  %v154 = vld [vmem:[%s1 + $0x3a8] sm:$0xff]
  %v155 = vld [vmem:[%s1 + $0x3b0] sm:$0xff]
  %v156 = vld [vmem:[%s1 + $0x3b8] sm:$0xff]
  %v157 = vld [vmem:[%s1 + $0x3c0] sm:$0xff]
  %v158 = vld [vmem:[%s1 + $0x3c8] sm:$0xff]
  %v159 = vld [vmem:[%s1 + $0x3d0] sm:$0xff]
  %v160 = vld [vmem:[%s1 + $0x3d8] sm:$0xff]
  %v161 = vld [vmem:[%s1 + $0x3e0] sm:$0xff]
  %v162 = vld [vmem:[%s1 + $0x3e8] sm:$0xff]
  %v163 = vld [vmem:[%s1 + $0x3f0] sm:$0xff]
  %v164 = vld [vmem:[%s1 + $0x3f8] sm:$0xff]
  %v165 = vld [vmem:[%s1 + $0x400] sm:$0xff]
  %v166 = vld [vmem:[%s1 + $0x408] sm:$0xff]
  %v167 = vld [vmem:[%s1 + $0x410] sm:$0xff]
  %v168 = vld [vmem:[%s1 + $0x418] sm:$0xff]
  %v169 = vld [vmem:[%s1 + $0x420] sm:$0xff]
  %v170 = vld [vmem:[%s1 + $0x428] sm:$0xff]
  %v171 = vld [vmem:[%s1 + $0x430] sm:$0xff]
  %v172 = vld [vmem:[%s1 + $0x438] sm:$0xff]
  %v173 = vld [vmem:[%s1 + $0x440] sm:$0xff]
  %v174 = vld [vmem:[%s1 + $0x448] sm:$0xff]
  %v175 = vld [vmem:[%s1 + $0x450] sm:$0xff]
  %v176 = vld [vmem:[%s1 + $0x458] sm:$0xff]
  %v177 = vld [vmem:[%s1 + $0x460] sm:$0xff]
  %v178 = vld [vmem:[%s1 + $0x468] sm:$0xff]
  %v179 = vld [vmem:[%s1 + $0x470] sm:$0xff]
  %v180 = vld [vmem:[%s1 + $0x478] sm:$0xff]
  %v181 = vld [vmem:[%s1 + $0x480] sm:$0xff]
  %v182 = vld [vmem:[%s1 + $0x488] sm:$0xff]
  %v183 = vld [vmem:[%s1 + $0x490] sm:$0xff]
  %v184 = vld [vmem:[%s1 + $0x498] sm:$0xff]
  %v185 = vld [vmem:[%s1 + $0x4a0] sm:$0xff]
  %v186 = vld [vmem:[%s1 + $0x4a8] sm:$0xff]
  %v187 = vld [vmem:[%s1 + $0x4b0] sm:$0xff]
  %v188 = vld [vmem:[%s1 + $0x4b8] sm:$0xff]
  %v189 = vld [vmem:[%s1 + $0x4c0] sm:$0xff]
  %v190 = vld [vmem:[%s1 + $0x4c8] sm:$0xff]
  %v191 = vld [vmem:[%s1 + $0x4d0] sm:$0xff]
  %v192 = vld [vmem:[%s1 + $0x4d8] sm:$0xff]
  %v193 = vld [vmem:[%s1 + $0x4e0] sm:$0xff]
  %v194 = vld [vmem:[%s1 + $0x4e8] sm:$0xff]
  %v195 = vld [vmem:[%s1 + $0x4f0] sm:$0xff]
  %v196 = vld [vmem:[%s1 + $0x4f8] sm:$0xff]
  %v197 = vld [vmem:[%s1 + $0x500] sm:$0xff]
  %v198 = vld [vmem:[%s1 + $0x508] sm:$0xff]
  %v199 = vld [vmem:[%s1 + $0x510] sm:$0xff]
  %v200 = vld [vmem:[%s1 + $0x518] sm:$0xff]
  %v201 = vld [vmem:[%s1 + $0x520] sm:$0xff]
  %v202 = vld [vmem:[%s1 + $0x528] sm:$0xff]
  %v203 = vld [vmem:[%s1 + $0x530] sm:$0xff]
  %v204 = vld [vmem:[%s1 + $0x538] sm:$0xff]
  %v205 = vld [vmem:[%s1 + $0x540] sm:$0xff]
  %v206 = vld [vmem:[%s1 + $0x548] sm:$0xff]
  %v207 = vld [vmem:[%s1 + $0x550] sm:$0xff]
  %v208 = vld [vmem:[%s1 + $0x558] sm:$0xff]
  %v209 = vld [vmem:[%s1 + $0x560] sm:$0xff]
  %v210 = vld [vmem:[%s1 + $0x568] sm:$0xff]
  %v211 = vld [vmem:[%s1 + $0x570] sm:$0xff]
  %v212 = vld [vmem:[%s1 + $0x578] sm:$0xff]
  %v213 = vld [vmem:[%s1 + $0x580] sm:$0xff]
  %v214 = vld [vmem:[%s1 + $0x588] sm:$0xff]
  %v215 = vld [vmem:[%s1 + $0x590] sm:$0xff]
  %v216 = vld [vmem:[%s1 + $0x598] sm:$0xff]
  %v217 = vld [vmem:[%s1 + $0x5a0] sm:$0xff]
  %v218 = vld [vmem:[%s1 + $0x5a8] sm:$0xff]
  %v219 = vld [vmem:[%s1 + $0x5b0] sm:$0xff]
  %v220 = vld [vmem:[%s1 + $0x5b8] sm:$0xff]
  %v221 = vld [vmem:[%s1 + $0x5c0] sm:$0xff]
  %v222 = vld [vmem:[%s1 + $0x5c8] sm:$0xff]
  %v223 = vld [vmem:[%s1 + $0x5d0] sm:$0xff]
  %v224 = vld [vmem:[%s1 + $0x5d8] sm:$0xff]
  %v225 = vld [vmem:[%s1 + $0x5e0] sm:$0xff]
  %v226 = vld [vmem:[%s1 + $0x5e8] sm:$0xff]
  %v227 = vld [vmem:[%s1 + $0x5f0] sm:$0xff]
  %v228 = vld [vmem:[%s1 + $0x5f8] sm:$0xff]
  %v229 = vld [vmem:[%s1 + $0x600] sm:$0xff]
  %v230 = vld [vmem:[%s1 + $0x608] sm:$0xff]
  %v231 = vld [vmem:[%s1 + $0x610] sm:$0xff]
  %v232 = vld [vmem:[%s1 + $0x618] sm:$0xff]
  %v233 = vld [vmem:[%s1 + $0x620] sm:$0xff]
  %v234 = vld [vmem:[%s1 + $0x628] sm:$0xff]
  %v235 = vld [vmem:[%s1 + $0x630] sm:$0xff]
  %v236 = vld [vmem:[%s1 + $0x638] sm:$0xff]
  %v237 = vld [vmem:[%s1 + $0x640] sm:$0xff]
  %v238 = vld [vmem:[%s1 + $0x648] sm:$0xff]
  %v239 = vld [vmem:[%s1 + $0x650] sm:$0xff]
  %v240 = vld [vmem:[%s1 + $0x658] sm:$0xff]
  %v241 = vld [vmem:[%s1 + $0x660] sm:$0xff]
  %v242 = vld [vmem:[%s1 + $0x668] sm:$0xff]
  %v243 = vld [vmem:[%s1 + $0x670] sm:$0xff]
  %v244 = vld [vmem:[%s1 + $0x678] sm:$0xff]
  %v245 = vld [vmem:[%s1 + $0x680] sm:$0xff]
  %v246 = vld [vmem:[%s1 + $0x688] sm:$0xff]
  %v247 = vld [vmem:[%s1 + $0x690] sm:$0xff]
  %v248 = vld [vmem:[%s1 + $0x698] sm:$0xff]
  %v249 = vld [vmem:[%s1 + $0x6a0] sm:$0xff]
  %v250 = vld [vmem:[%s1 + $0x6a8] sm:$0xff]
  %v251 = vld [vmem:[%s1 + $0x6b0] sm:$0xff]
  %v252 = vld [vmem:[%s1 + $0x6b8] sm:$0xff]
  %v253 = vld [vmem:[%s1 + $0x6c0] sm:$0xff]
  %v254 = vld [vmem:[%s1 + $0x6c8] sm:$0xff]
  %v255 = vld [vmem:[%s1 + $0x6d0] sm:$0xff]
  %v256 = vld [vmem:[%s1 + $0x6d8] sm:$0xff]
  %v257 = vld [vmem:[%s1 + $0x6e0] sm:$0xff]
  %v258 = vld [vmem:[%s1 + $0x6e8] sm:$0xff]
  %v259 = vld [vmem:[%s1 + $0x6f0] sm:$0xff]
  %v260 = vld [vmem:[%s1 + $0x6f8] sm:$0xff]
  %v261 = vld [vmem:[%s1 + $0x700] sm:$0xff]
  %v262 = vld [vmem:[%s1 + $0x708] sm:$0xff]
  %v263 = vld [vmem:[%s1 + $0x710] sm:$0xff]
  %v264 = vld [vmem:[%s1 + $0x718] sm:$0xff]
  %v265 = vld [vmem:[%s1 + $0x720] sm:$0xff]
  %v266 = vld [vmem:[%s1 + $0x728] sm:$0xff]
  %v267 = vld [vmem:[%s1 + $0x730] sm:$0xff]
  %v268 = vld [vmem:[%s1 + $0x738] sm:$0xff]
  %v269 = vld [vmem:[%s1 + $0x740] sm:$0xff]
  %v270 = vld [vmem:[%s1 + $0x748] sm:$0xff]
  %v271 = vld [vmem:[%s1 + $0x750] sm:$0xff]
  %v272 = vld [vmem:[%s1 + $0x758] sm:$0xff]
  %v273 = vld [vmem:[%s1 + $0x760] sm:$0xff]
  %v274 = vld [vmem:[%s1 + $0x768] sm:$0xff]
  %v275 = vld [vmem:[%s1 + $0x770] sm:$0xff]
  %v276 = vld [vmem:[%s1 + $0x778] sm:$0xff]
  %v277 = vld [vmem:[%s1 + $0x780] sm:$0xff]
  %v278 = vld [vmem:[%s1 + $0x788] sm:$0xff]
  %v279 = vld [vmem:[%s1 + $0x790] sm:$0xff]
  %v280 = vld [vmem:[%s1 + $0x798] sm:$0xff]
  %v281 = vld [vmem:[%s1 + $0x7a0] sm:$0xff]
  %v282 = vld [vmem:[%s1 + $0x7a8] sm:$0xff]
  %v283 = vld [vmem:[%s1 + $0x7b0] sm:$0xff]
  %v284 = vld [vmem:[%s1 + $0x7b8] sm:$0xff]
  %v285 = vld [vmem:[%s1 + $0x7c0] sm:$0xff]
  %v286 = vld [vmem:[%s1 + $0x7c8] sm:$0xff]
  %v287 = vld [vmem:[%s1 + $0x7d0] sm:$0xff]
  %v288 = vld [vmem:[%s1 + $0x7d8] sm:$0xff]
  %v289 = vld [vmem:[%s1 + $0x7e0] sm:$0xff]
  %v290 = vld [vmem:[%s1 + $0x7e8] sm:$0xff]
  %v291 = vld [vmem:[%s1 + $0x7f0] sm:$0xff]
  %v292 = vld [vmem:[%s1 + $0x7f8] sm:$0xff]
  %v293 = vld [vmem:[%s1 + $0x800] sm:$0xff]
  %v294 = vld [vmem:[%s1 + $0x808] sm:$0xff]
  %v295 = vld [vmem:[%s1 + $0x810] sm:$0xff]
  %v296 = vld [vmem:[%s1 + $0x818] sm:$0xff]
  %v297 = vld [vmem:[%s1 + $0x820] sm:$0xff]
  %v298 = vld [vmem:[%s1 + $0x828] sm:$0xff]
  %v299 = vld [vmem:[%s1 + $0x830] sm:$0xff]
  %v300 = vld [vmem:[%s1 + $0x838] sm:$0xff]
  %v301 = vld [vmem:[%s1 + $0x840] sm:$0xff]
  %v302 = vld [vmem:[%s1 + $0x848] sm:$0xff]
  %v303 = vld [vmem:[%s1 + $0x850] sm:$0xff]
  %v304 = vld [vmem:[%s1 + $0x858] sm:$0xff]
  %v305 = vld [vmem:[%s1 + $0x860] sm:$0xff]
  %v306 = vld [vmem:[%s1 + $0x868] sm:$0xff]
  %v307 = vld [vmem:[%s1 + $0x870] sm:$0xff]
  %v308 = vld [vmem:[%s1 + $0x878] sm:$0xff]
  %v309 = vld [vmem:[%s1 + $0x880] sm:$0xff]
  %v310 = vld [vmem:[%s1 + $0x888] sm:$0xff]
  %v311 = vld [vmem:[%s1 + $0x890] sm:$0xff]
  %v312 = vld [vmem:[%s1 + $0x898] sm:$0xff]
  %v313 = vld [vmem:[%s1 + $0x8a0] sm:$0xff]
  %v314 = vld [vmem:[%s1 + $0x8a8] sm:$0xff]
  %v315 = vld [vmem:[%s1 + $0x8b0] sm:$0xff]
  %v316 = vld [vmem:[%s1 + $0x8b8] sm:$0xff]
  %v317 = vld [vmem:[%s1 + $0x8c0] sm:$0xff]
  %v318 = vld [vmem:[%s1 + $0x8c8] sm:$0xff]
  %v319 = vld [vmem:[%s1 + $0x8d0] sm:$0xff]
  %v320 = vld [vmem:[%s1 + $0x8d8] sm:$0xff]
  %v321 = vld [vmem:[%s1 + $0x8e0] sm:$0xff]
  %v322 = vld [vmem:[%s1 + $0x8e8] sm:$0xff]
  %v323 = vld [vmem:[%s1 + $0x8f0] sm:$0xff]
  %v324 = vld [vmem:[%s1 + $0x8f8] sm:$0xff]
  %v325 = vld [vmem:[%s1 + $0x900] sm:$0xff]
  %v326 = vld [vmem:[%s1 + $0x908] sm:$0xff]
  %v327 = vld [vmem:[%s1 + $0x910] sm:$0xff]
  %v328 = vld [vmem:[%s1 + $0x918] sm:$0xff]
  %v329 = vld [vmem:[%s1 + $0x920] sm:$0xff]
  %v330 = vld [vmem:[%s1 + $0x928] sm:$0xff]
  %v331 = vld [vmem:[%s1 + $0x930] sm:$0xff]
  %v332 = vld [vmem:[%s1 + $0x938] sm:$0xff]
  %v333 = vld [vmem:[%s1 + $0x940] sm:$0xff]
  %v334 = vld [vmem:[%s1 + $0x948] sm:$0xff]
  %v335 = vld [vmem:[%s1 + $0x950] sm:$0xff]
  %v336 = vld [vmem:[%s1 + $0x958] sm:$0xff]
  %v337 = vld [vmem:[%s1 + $0x960] sm:$0xff]
  %v338 = vld [vmem:[%s1 + $0x968] sm:$0xff]
  %v339 = vld [vmem:[%s1 + $0x970] sm:$0xff]
  %v340 = vld [vmem:[%s1 + $0x978] sm:$0xff]
  %v341 = vld [vmem:[%s1 + $0x980] sm:$0xff]
  %v342 = vld [vmem:[%s1 + $0x988] sm:$0xff]
  %v343 = vld [vmem:[%s1 + $0x990] sm:$0xff]
  %v344 = vld [vmem:[%s1 + $0x998] sm:$0xff]
  %v345 = vld [vmem:[%s1 + $0x9a0] sm:$0xff]
  %v346 = vld [vmem:[%s1 + $0x9a8] sm:$0xff]
  %v347 = vld [vmem:[%s1 + $0x9b0] sm:$0xff]
  %v348 = vld [vmem:[%s1 + $0x9b8] sm:$0xff]
  %v349 = vld [vmem:[%s1 + $0x9c0] sm:$0xff]
  %v350 = vld [vmem:[%s1 + $0x9c8] sm:$0xff]
  %v351 = vld [vmem:[%s1 + $0x9d0] sm:$0xff]
  %v352 = vld [vmem:[%s1 + $0x9d8] sm:$0xff]
  %v353 = vld [vmem:[%s1 + $0x9e0] sm:$0xff]
  %v354 = vld [vmem:[%s1 + $0x9e8] sm:$0xff]
  %v355 = vld [vmem:[%s1 + $0x9f0] sm:$0xff]
  %v356 = vld [vmem:[%s1 + $0x9f8] sm:$0xff]
  %v357 = vld [vmem:[%s1 + $0xa00] sm:$0xff]
  %v358 = vld [vmem:[%s1 + $0xa08] sm:$0xff]
  %v359 = vld [vmem:[%s1 + $0xa10] sm:$0xff]
  %v360 = vld [vmem:[%s1 + $0xa18] sm:$0xff]
  %v361 = vld [vmem:[%s1 + $0xa20] sm:$0xff]
  %v362 = vld [vmem:[%s1 + $0xa28] sm:$0xff]
  %v363 = vld [vmem:[%s1 + $0xa30] sm:$0xff]
  %v364 = vld [vmem:[%s1 + $0xa38] sm:$0xff]
  %v365 = vld [vmem:[%s1 + $0xa40] sm:$0xff]
  %v366 = vld [vmem:[%s1 + $0xa48] sm:$0xff]
  %v367 = vld [vmem:[%s1 + $0xa50] sm:$0xff]
  %v368 = vld [vmem:[%s1 + $0xa58] sm:$0xff]
  %v369 = vld [vmem:[%s1 + $0xa60] sm:$0xff]
  %v370 = vld [vmem:[%s1 + $0xa68] sm:$0xff]
  %v371 = vld [vmem:[%s1 + $0xa70] sm:$0xff]
  %v372 = vld [vmem:[%s1 + $0xa78] sm:$0xff]
  %v373 = vld [vmem:[%s1 + $0xa80] sm:$0xff]
  %v374 = vld [vmem:[%s1 + $0xa88] sm:$0xff]
  %v375 = vld [vmem:[%s1 + $0xa90] sm:$0xff]
  %v376 = vld [vmem:[%s1 + $0xa98] sm:$0xff]
  %v377 = vld [vmem:[%s1 + $0xaa0] sm:$0xff]
  %v378 = vld [vmem:[%s1 + $0xaa8] sm:$0xff]
  %v379 = vld [vmem:[%s1 + $0xab0] sm:$0xff]
  %v380 = vld [vmem:[%s1 + $0xab8] sm:$0xff]
  %v381 = vld [vmem:[%s1 + $0xac0] sm:$0xff]
  %v382 = vld [vmem:[%s1 + $0xac8] sm:$0xff]
  %v383 = vld [vmem:[%s1 + $0xad0] sm:$0xff]
  %v384 = vld [vmem:[%s1 + $0xad8] sm:$0xff]
  %v385 = vld [vmem:[%s1 + $0xae0] sm:$0xff]
  %v386 = vld [vmem:[%s1 + $0xae8] sm:$0xff]
  %v387 = vld [vmem:[%s1 + $0xaf0] sm:$0xff]
  %v388 = vld [vmem:[%s1 + $0xaf8] sm:$0xff]
  %v389 = vld [vmem:[%s1 + $0xb00] sm:$0xff]
  %v390 = vld [vmem:[%s1 + $0xb08] sm:$0xff]
  %v391 = vld [vmem:[%s1 + $0xb10] sm:$0xff]
  %v392 = vld [vmem:[%s1 + $0xb18] sm:$0xff]
  %v393 = vld [vmem:[%s1 + $0xb20] sm:$0xff]
  %v394 = vld [vmem:[%s1 + $0xb28] sm:$0xff]
  %v395 = vld [vmem:[%s1 + $0xb30] sm:$0xff]
  %v396 = vld [vmem:[%s1 + $0xb38] sm:$0xff]
  %v397 = vld [vmem:[%s1 + $0xb40] sm:$0xff]
  %v398 = vld [vmem:[%s1 + $0xb48] sm:$0xff]
  %v399 = vld [vmem:[%s1 + $0xb50] sm:$0xff]
  %v400 = vld [vmem:[%s1 + $0xb58] sm:$0xff]
  %v401 = vld [vmem:[%s1 + $0xb60] sm:$0xff]
  %v402 = vld [vmem:[%s1 + $0xb68] sm:$0xff]
  %v403 = vld [vmem:[%s1 + $0xb70] sm:$0xff]
  %v404 = vld [vmem:[%s1 + $0xb78] sm:$0xff]
  %v405 = vld [vmem:[%s1 + $0xb80] sm:$0xff]
  %v406 = vld [vmem:[%s1 + $0xb88] sm:$0xff]
  %v407 = vld [vmem:[%s1 + $0xb90] sm:$0xff]
  %v408 = vld [vmem:[%s1 + $0xb98] sm:$0xff]
  %v409 = vld [vmem:[%s1 + $0xba0] sm:$0xff]
  %v410 = vld [vmem:[%s1 + $0xba8] sm:$0xff]
  %v411 = vld [vmem:[%s1 + $0xbb0] sm:$0xff]
  %v412 = vld [vmem:[%s1 + $0xbb8] sm:$0xff]
  %v413 = vld [vmem:[%s1 + $0xbc0] sm:$0xff]
  %v414 = vld [vmem:[%s1 + $0xbc8] sm:$0xff]
  %v415 = vld [vmem:[%s1 + $0xbd0] sm:$0xff]
  %v416 = vld [vmem:[%s1 + $0xbd8] sm:$0xff]
  %v417 = vld [vmem:[%s1 + $0xbe0] sm:$0xff]
  %v418 = vld [vmem:[%s1 + $0xbe8] sm:$0xff]
  %v419 = vld [vmem:[%s1 + $0xbf0] sm:$0xff]
  %v420 = vld [vmem:[%s1 + $0xbf8] sm:$0xff]
  %v421 = vld [vmem:[%s1 + $0xc00] sm:$0xff]
  %v422 = vld [vmem:[%s1 + $0xc08] sm:$0xff]
  %v423 = vld [vmem:[%s1 + $0xc10] sm:$0xff]
  %v424 = vld [vmem:[%s1 + $0xc18] sm:$0xff]
  %v425 = vld [vmem:[%s1 + $0xc20] sm:$0xff]
  %v426 = vld [vmem:[%s1 + $0xc28] sm:$0xff]
  %v427 = vld [vmem:[%s1 + $0xc30] sm:$0xff]
  %v428 = vld [vmem:[%s1 + $0xc38] sm:$0xff]
  %v429 = vld [vmem:[%s1 + $0xc40] sm:$0xff]
  %v430 = vld [vmem:[%s1 + $0xc48] sm:$0xff]
  %v431 = vld [vmem:[%s1 + $0xc50] sm:$0xff]
  %v432 = vld [vmem:[%s1 + $0xc58] sm:$0xff]
  %v433 = vld [vmem:[%s1 + $0xc60] sm:$0xff]
  %v434 = vld [vmem:[%s1 + $0xc68] sm:$0xff]
  %v435 = vld [vmem:[%s1 + $0xc70] sm:$0xff]
  %v436 = vld [vmem:[%s1 + $0xc78] sm:$0xff]
  %v437 = vld [vmem:[%s1 + $0xc80] sm:$0xff]
  %v438 = vld [vmem:[%s1 + $0xc88] sm:$0xff]
  %v439 = vld [vmem:[%s1 + $0xc90] sm:$0xff]
  %v440 = vld [vmem:[%s1 + $0xc98] sm:$0xff]
  %v441 = vld [vmem:[%s1 + $0xca0] sm:$0xff]
  %v442 = vld [vmem:[%s1 + $0xca8] sm:$0xff]
  %v443 = vld [vmem:[%s1 + $0xcb0] sm:$0xff]
  %v444 = vld [vmem:[%s1 + $0xcb8] sm:$0xff]
  %v445 = vld [vmem:[%s1 + $0xcc0] sm:$0xff]
  %v446 = vld [vmem:[%s1 + $0xcc8] sm:$0xff]
  %v447 = vld [vmem:[%s1 + $0xcd0] sm:$0xff]
  %v448 = vld [vmem:[%s1 + $0xcd8] sm:$0xff]
  %v449 = vld [vmem:[%s1 + $0xce0] sm:$0xff]
  %v450 = vld [vmem:[%s1 + $0xce8] sm:$0xff]
  %v451 = vld [vmem:[%s1 + $0xcf0] sm:$0xff]
  %v452 = vld [vmem:[%s1 + $0xcf8] sm:$0xff]
  %v453 = vld [vmem:[%s1 + $0xd00] sm:$0xff]
  %v454 = vld [vmem:[%s1 + $0xd08] sm:$0xff]
  %v455 = vld [vmem:[%s1 + $0xd10] sm:$0xff]
  %v456 = vld [vmem:[%s1 + $0xd18] sm:$0xff]
  %v457 = vld [vmem:[%s1 + $0xd20] sm:$0xff]
  %v458 = vld [vmem:[%s1 + $0xd28] sm:$0xff]
  %v459 = vld [vmem:[%s1 + $0xd30] sm:$0xff]
  %v460 = vld [vmem:[%s1 + $0xd38] sm:$0xff]
  %v461 = vld [vmem:[%s1 + $0xd40] sm:$0xff]
  %v462 = vld [vmem:[%s1 + $0xd48] sm:$0xff]
  %v463 = vld [vmem:[%s1 + $0xd50] sm:$0xff]
  %v464 = vld [vmem:[%s1 + $0xd58] sm:$0xff]
  %v465 = vld [vmem:[%s1 + $0xd60] sm:$0xff]
  %v466 = vld [vmem:[%s1 + $0xd68] sm:$0xff]
  %v467 = vld [vmem:[%s1 + $0xd70] sm:$0xff]
  %v468 = vld [vmem:[%s1 + $0xd78] sm:$0xff]
  %v469 = vld [vmem:[%s1 + $0xd80] sm:$0xff]
  %v470 = vld [vmem:[%s1 + $0xd88] sm:$0xff]
  %v471 = vld [vmem:[%s1 + $0xd90] sm:$0xff]
  %v472 = vld [vmem:[%s1 + $0xd98] sm:$0xff]
  %v473 = vld [vmem:[%s1 + $0xda0] sm:$0xff]
  %v474 = vld [vmem:[%s1 + $0xda8] sm:$0xff]
  %v475 = vld [vmem:[%s1 + $0xdb0] sm:$0xff]
  %v476 = vld [vmem:[%s1 + $0xdb8] sm:$0xff]
  %v477 = vld [vmem:[%s1 + $0xdc0] sm:$0xff]
  %v478 = vld [vmem:[%s1 + $0xdc8] sm:$0xff]
  %v479 = vld [vmem:[%s1 + $0xdd0] sm:$0xff]
  %v480 = vld [vmem:[%s1 + $0xdd8] sm:$0xff]
  %v481 = vld [vmem:[%s1 + $0xde0] sm:$0xff]
  %v482 = vld [vmem:[%s1 + $0xde8] sm:$0xff]
  %v483 = vld [vmem:[%s1 + $0xdf0] sm:$0xff]
  %v484 = vld [vmem:[%s1 + $0xdf8] sm:$0xff]
  %v485 = vld [vmem:[%s1 + $0xe00] sm:$0xff]
  %v486 = vld [vmem:[%s1 + $0xe08] sm:$0xff]
  %v487 = vld [vmem:[%s1 + $0xe10] sm:$0xff]
  %v488 = vld [vmem:[%s1 + $0xe18] sm:$0xff]
  %v489 = vld [vmem:[%s1 + $0xe20] sm:$0xff]
  %v490 = vld [vmem:[%s1 + $0xe28] sm:$0xff]
  %v491 = vld [vmem:[%s1 + $0xe30] sm:$0xff]
  %v492 = vld [vmem:[%s1 + $0xe38] sm:$0xff]
  %v493 = vld [vmem:[%s1 + $0xe40] sm:$0xff]
  %v494 = vld [vmem:[%s1 + $0xe48] sm:$0xff]
  %v495 = vld [vmem:[%s1 + $0xe50] sm:$0xff]
  %v496 = vld [vmem:[%s1 + $0xe58] sm:$0xff]
  %v497 = vld [vmem:[%s1 + $0xe60] sm:$0xff]
  %v498 = vld [vmem:[%s1 + $0xe68] sm:$0xff]
  %v499 = vld [vmem:[%s1 + $0xe70] sm:$0xff]
  %v500 = vld [vmem:[%s1 + $0xe78] sm:$0xff]
  %v501 = vld [vmem:[%s1 + $0xe80] sm:$0xff]
  %v502 = vld [vmem:[%s1 + $0xe88] sm:$0xff]
  %v503 = vld [vmem:[%s1 + $0xe90] sm:$0xff]
  %v504 = vld [vmem:[%s1 + $0xe98] sm:$0xff]
  %v505 = vld [vmem:[%s1 + $0xea0] sm:$0xff]
  %v506 = vld [vmem:[%s1 + $0xea8] sm:$0xff]
  %v507 = vld [vmem:[%s1 + $0xeb0] sm:$0xff]
  %v508 = vld [vmem:[%s1 + $0xeb8] sm:$0xff]
  %v509 = vld [vmem:[%s1 + $0xec0] sm:$0xff]
  %v510 = vld [vmem:[%s1 + $0xec8] sm:$0xff]
  %v511 = vld [vmem:[%s1 + $0xed0] sm:$0xff]
  %v512 = vld [vmem:[%s1 + $0xed8] sm:$0xff]
  %v513 = vld [vmem:[%s1 + $0xee0] sm:$0xff]
  %v514 = vld [vmem:[%s1 + $0xee8] sm:$0xff]
  %v515 = vld [vmem:[%s1 + $0xef0] sm:$0xff]
  %v516 = vld [vmem:[%s1 + $0xef8] sm:$0xff]
  %v517 = vld [vmem:[%s1 + $0xf00] sm:$0xff]
  %v518 = vld [vmem:[%s1 + $0xf08] sm:$0xff]
  %v519 = vld [vmem:[%s1 + $0xf10] sm:$0xff]
  %v520 = vld [vmem:[%s1 + $0xf18] sm:$0xff]
  %v521 = vld [vmem:[%s1 + $0xf20] sm:$0xff]
  %v522 = vld [vmem:[%s1 + $0xf28] sm:$0xff]
  %v523 = vld [vmem:[%s1 + $0xf30] sm:$0xff]
  %v524 = vld [vmem:[%s1 + $0xf38] sm:$0xff]
  %v525 = vld [vmem:[%s1 + $0xf40] sm:$0xff]
  %v526 = vld [vmem:[%s1 + $0xf48] sm:$0xff]
  %v527 = vld [vmem:[%s1 + $0xf50] sm:$0xff]
  %v528 = vld [vmem:[%s1 + $0xf58] sm:$0xff]
  %v529 = vld [vmem:[%s1 + $0xf60] sm:$0xff]
  %v530 = vld [vmem:[%s1 + $0xf68] sm:$0xff]
  %v531 = vld [vmem:[%s1 + $0xf70] sm:$0xff]
  %v532 = vld [vmem:[%s1 + $0xf78] sm:$0xff]
  %v533 = vld [vmem:[%s1 + $0xf80] sm:$0xff]
  %v534 = vld [vmem:[%s1 + $0xf88] sm:$0xff]
  %v535 = vld [vmem:[%s1 + $0xf90] sm:$0xff]
  %v536 = vld [vmem:[%s1 + $0xf98] sm:$0xff]
  %v537 = vld [vmem:[%s1 + $0xfa0] sm:$0xff]
  %v538 = vld [vmem:[%s1 + $0xfa8] sm:$0xff]
  %v539 = vld [vmem:[%s1 + $0xfb0] sm:$0xff]
  %v540 = vld [vmem:[%s1 + $0xfb8] sm:$0xff]
  %v541 = vld [vmem:[%s1 + $0xfc0] sm:$0xff]
  %v542 = vld [vmem:[%s1 + $0xfc8] sm:$0xff]
  %v543 = vld [vmem:[%s1 + $0xfd0] sm:$0xff]
  %v544 = vld [vmem:[%s1 + $0xfd8] sm:$0xff]
  %v545 = vld [vmem:[%s1 + $0xfe0] sm:$0xff]
  %v546 = vld [vmem:[%s1 + $0xfe8] sm:$0xff]
  %v547 = vld [vmem:[%s1 + $0xff0] sm:$0xff]
  %v548 = vld [vmem:[%s1 + $0xff8] sm:$0xff]
  %v549 = vld [vmem:[%s2] sm:$0x3]
  %v551 = vlaneseq
  %v552 = vshrl.u32 %v551, 7
  %v553 = vsub.s32 0, %v552
  %v554 = vrot.slane %v549, %v553
  %v555 = vlaneseq
  %v556 = vshrl.u32 %v555, 7
  %v557 = vsub.s32 1, %v556
  %v558 = vrot.slane %v549, %v557
  %v577 = vunpack.c.l.b16 %v21
  %v578 = vunpack.c.h.b16 %v21
  %v579 = vunpack.c.l.b16 %v22
  %v580 = vunpack.c.h.b16 %v22
  %v581 = vunpack.c.l.b16 %v23
  %v582 = vunpack.c.h.b16 %v23
  %v583 = vunpack.c.l.b16 %v24
  %v584 = vunpack.c.h.b16 %v24
  %v585 = vunpack.c.l.b16 %v25
  %v586 = vunpack.c.h.b16 %v25
  %v587 = vunpack.c.l.b16 %v26
  %v588 = vunpack.c.h.b16 %v26
  %v589 = vunpack.c.l.b16 %v27
  %v590 = vunpack.c.h.b16 %v27
  %v591 = vunpack.c.l.b16 %v28
  %v592 = vunpack.c.h.b16 %v28
  %v593 = vunpack.c.l.b16 %v29
  %v594 = vunpack.c.h.b16 %v29
  %v595 = vunpack.c.l.b16 %v30
  %v596 = vunpack.c.h.b16 %v30
  %v597 = vunpack.c.l.b16 %v31
  %v598 = vunpack.c.h.b16 %v31
  %v599 = vunpack.c.l.b16 %v32
  %v600 = vunpack.c.h.b16 %v32
  %v601 = vunpack.c.l.b16 %v33
  %v602 = vunpack.c.h.b16 %v33
  %v603 = vunpack.c.l.b16 %v34
  %v604 = vunpack.c.h.b16 %v34
  %v605 = vunpack.c.l.b16 %v35
  %v606 = vunpack.c.h.b16 %v35
  %v607 = vunpack.c.l.b16 %v36
  %v608 = vunpack.c.h.b16 %v36
  %v609 = vpack.c.b16 %v577, %v577
  %v610 = vpack.c.b16 %v578, %v578
  %v611 = vpack.c.b16 %v579, %v579
  %v612 = vpack.c.b16 %v580, %v580
  %v613 = vpack.c.b16 %v581, %v581
  %v614 = vpack.c.b16 %v582, %v582
  %v615 = vpack.c.b16 %v583, %v583
  %v616 = vpack.c.b16 %v584, %v584
  %v617 = vpack.c.b16 %v585, %v585
  %v618 = vpack.c.b16 %v586, %v586
  %v619 = vpack.c.b16 %v587, %v587
  %v620 = vpack.c.b16 %v588, %v588
  %v621 = vpack.c.b16 %v589, %v589
  %v622 = vpack.c.b16 %v590, %v590
  %v623 = vpack.c.b16 %v591, %v591
  %v624 = vpack.c.b16 %v592, %v592
  %v625 = vpack.c.b16 %v593, %v593
  %v626 = vpack.c.b16 %v594, %v594
  %v627 = vpack.c.b16 %v595, %v595
  %v628 = vpack.c.b16 %v596, %v596
  %v629 = vpack.c.b16 %v597, %v597
  %v630 = vpack.c.b16 %v598, %v598
  %v631 = vpack.c.b16 %v599, %v599
  %v632 = vpack.c.b16 %v600, %v600
  %v633 = vpack.c.b16 %v601, %v601
  %v634 = vpack.c.b16 %v602, %v602
  %v635 = vpack.c.b16 %v603, %v603
  %v636 = vpack.c.b16 %v604, %v604
  %v637 = vpack.c.b16 %v605, %v605
  %v638 = vpack.c.b16 %v606, %v606
  %v639 = vpack.c.b16 %v607, %v607
  %v640 = vpack.c.b16 %v608, %v608
  %v1185 = vunpack.c.l.b16 %v37
  %v1186 = vunpack.c.h.b16 %v37
  %v1187 = vunpack.c.l.b16 %v38
  %v1188 = vunpack.c.h.b16 %v38
  %v1189 = vunpack.c.l.b16 %v39
  %v1190 = vunpack.c.h.b16 %v39
  %v1191 = vunpack.c.l.b16 %v40
  %v1192 = vunpack.c.h.b16 %v40
  %v1193 = vunpack.c.l.b16 %v41
  %v1194 = vunpack.c.h.b16 %v41
  %v1195 = vunpack.c.l.b16 %v42
  %v1196 = vunpack.c.h.b16 %v42
  %v1197 = vunpack.c.l.b16 %v43
  %v1198 = vunpack.c.h.b16 %v43
  %v1199 = vunpack.c.l.b16 %v44
  %v1200 = vunpack.c.h.b16 %v44
  %v1201 = vunpack.c.l.b16 %v45
  %v1202 = vunpack.c.h.b16 %v45
  %v1203 = vunpack.c.l.b16 %v46
  %v1204 = vunpack.c.h.b16 %v46
  %v1205 = vunpack.c.l.b16 %v47
  %v1206 = vunpack.c.h.b16 %v47
  %v1207 = vunpack.c.l.b16 %v48
  %v1208 = vunpack.c.h.b16 %v48
  %v1209 = vunpack.c.l.b16 %v49
  %v1210 = vunpack.c.h.b16 %v49
  %v1211 = vunpack.c.l.b16 %v50
  %v1212 = vunpack.c.h.b16 %v50
  %v1213 = vunpack.c.l.b16 %v51
  %v1214 = vunpack.c.h.b16 %v51
  %v1215 = vunpack.c.l.b16 %v52
  %v1216 = vunpack.c.h.b16 %v52
  %v1217 = vunpack.c.l.b16 %v53
  %v1218 = vunpack.c.h.b16 %v53
  %v1219 = vunpack.c.l.b16 %v54
  %v1220 = vunpack.c.h.b16 %v54
  %v1221 = vunpack.c.l.b16 %v55
  %v1222 = vunpack.c.h.b16 %v55
  %v1223 = vunpack.c.l.b16 %v56
  %v1224 = vunpack.c.h.b16 %v56
  %v1225 = vunpack.c.l.b16 %v57
  %v1226 = vunpack.c.h.b16 %v57
  %v1227 = vunpack.c.l.b16 %v58
  %v1228 = vunpack.c.h.b16 %v58
  %v1229 = vunpack.c.l.b16 %v59
  %v1230 = vunpack.c.h.b16 %v59
  %v1231 = vunpack.c.l.b16 %v60
  %v1232 = vunpack.c.h.b16 %v60
  %v1233 = vunpack.c.l.b16 %v61
  %v1234 = vunpack.c.h.b16 %v61
  %v1235 = vunpack.c.l.b16 %v62
  %v1236 = vunpack.c.h.b16 %v62
  %v1237 = vunpack.c.l.b16 %v63
  %v1238 = vunpack.c.h.b16 %v63
  %v1239 = vunpack.c.l.b16 %v64
  %v1240 = vunpack.c.h.b16 %v64
  %v1241 = vunpack.c.l.b16 %v65
  %v1242 = vunpack.c.h.b16 %v65
  %v1243 = vunpack.c.l.b16 %v66
  %v1244 = vunpack.c.h.b16 %v66
  %v1245 = vunpack.c.l.b16 %v67
  %v1246 = vunpack.c.h.b16 %v67
  %v1247 = vunpack.c.l.b16 %v68
  %v1248 = vunpack.c.h.b16 %v68
  %v1249 = vunpack.c.l.b16 %v69
  %v1250 = vunpack.c.h.b16 %v69
  %v1251 = vunpack.c.l.b16 %v70
  %v1252 = vunpack.c.h.b16 %v70
  %v1253 = vunpack.c.l.b16 %v71
  %v1254 = vunpack.c.h.b16 %v71
  %v1255 = vunpack.c.l.b16 %v72
  %v1256 = vunpack.c.h.b16 %v72
  %v1257 = vunpack.c.l.b16 %v73
  %v1258 = vunpack.c.h.b16 %v73
  %v1259 = vunpack.c.l.b16 %v74
  %v1260 = vunpack.c.h.b16 %v74
  %v1261 = vunpack.c.l.b16 %v75
  %v1262 = vunpack.c.h.b16 %v75
  %v1263 = vunpack.c.l.b16 %v76
  %v1264 = vunpack.c.h.b16 %v76
  %v1265 = vunpack.c.l.b16 %v77
  %v1266 = vunpack.c.h.b16 %v77
  %v1267 = vunpack.c.l.b16 %v78
  %v1268 = vunpack.c.h.b16 %v78
  %v1269 = vunpack.c.l.b16 %v79
  %v1270 = vunpack.c.h.b16 %v79
  %v1271 = vunpack.c.l.b16 %v80
  %v1272 = vunpack.c.h.b16 %v80
  %v1273 = vunpack.c.l.b16 %v81
  %v1274 = vunpack.c.h.b16 %v81
  %v1275 = vunpack.c.l.b16 %v82
  %v1276 = vunpack.c.h.b16 %v82
  %v1277 = vunpack.c.l.b16 %v83
  %v1278 = vunpack.c.h.b16 %v83
  %v1279 = vunpack.c.l.b16 %v84
  %v1280 = vunpack.c.h.b16 %v84
  %v1281 = vunpack.c.l.b16 %v85
  %v1282 = vunpack.c.h.b16 %v85
  %v1283 = vunpack.c.l.b16 %v86
  %v1284 = vunpack.c.h.b16 %v86
  %v1285 = vunpack.c.l.b16 %v87
  %v1286 = vunpack.c.h.b16 %v87
  %v1287 = vunpack.c.l.b16 %v88
  %v1288 = vunpack.c.h.b16 %v88
  %v1289 = vunpack.c.l.b16 %v89
  %v1290 = vunpack.c.h.b16 %v89
  %v1291 = vunpack.c.l.b16 %v90
  %v1292 = vunpack.c.h.b16 %v90
  %v1293 = vunpack.c.l.b16 %v91
  %v1294 = vunpack.c.h.b16 %v91
  %v1295 = vunpack.c.l.b16 %v92
  %v1296 = vunpack.c.h.b16 %v92
  %v1297 = vunpack.c.l.b16 %v93
  %v1298 = vunpack.c.h.b16 %v93
  %v1299 = vunpack.c.l.b16 %v94
  %v1300 = vunpack.c.h.b16 %v94
  %v1301 = vunpack.c.l.b16 %v95
  %v1302 = vunpack.c.h.b16 %v95
  %v1303 = vunpack.c.l.b16 %v96
  %v1304 = vunpack.c.h.b16 %v96
  %v1305 = vunpack.c.l.b16 %v97
  %v1306 = vunpack.c.h.b16 %v97
  %v1307 = vunpack.c.l.b16 %v98
  %v1308 = vunpack.c.h.b16 %v98
  %v1309 = vunpack.c.l.b16 %v99
  %v1310 = vunpack.c.h.b16 %v99
  %v1311 = vunpack.c.l.b16 %v100
  %v1312 = vunpack.c.h.b16 %v100
  %v1313 = vunpack.c.l.b16 %v101
  %v1314 = vunpack.c.h.b16 %v101
  %v1315 = vunpack.c.l.b16 %v102
  %v1316 = vunpack.c.h.b16 %v102
  %v1317 = vunpack.c.l.b16 %v103
  %v1318 = vunpack.c.h.b16 %v103
  %v1319 = vunpack.c.l.b16 %v104
  %v1320 = vunpack.c.h.b16 %v104
  %v1321 = vunpack.c.l.b16 %v105
  %v1322 = vunpack.c.h.b16 %v105
  %v1323 = vunpack.c.l.b16 %v106
  %v1324 = vunpack.c.h.b16 %v106
  %v1325 = vunpack.c.l.b16 %v107
  %v1326 = vunpack.c.h.b16 %v107
  %v1327 = vunpack.c.l.b16 %v108
  %v1328 = vunpack.c.h.b16 %v108
  %v1329 = vunpack.c.l.b16 %v109
  %v1330 = vunpack.c.h.b16 %v109
  %v1331 = vunpack.c.l.b16 %v110
  %v1332 = vunpack.c.h.b16 %v110
  %v1333 = vunpack.c.l.b16 %v111
  %v1334 = vunpack.c.h.b16 %v111
  %v1335 = vunpack.c.l.b16 %v112
  %v1336 = vunpack.c.h.b16 %v112
  %v1337 = vunpack.c.l.b16 %v113
  %v1338 = vunpack.c.h.b16 %v113
  %v1339 = vunpack.c.l.b16 %v114
  %v1340 = vunpack.c.h.b16 %v114
  %v1341 = vunpack.c.l.b16 %v115
  %v1342 = vunpack.c.h.b16 %v115
  %v1343 = vunpack.c.l.b16 %v116
  %v1344 = vunpack.c.h.b16 %v116
  %v1345 = vunpack.c.l.b16 %v117
  %v1346 = vunpack.c.h.b16 %v117
  %v1347 = vunpack.c.l.b16 %v118
  %v1348 = vunpack.c.h.b16 %v118
  %v1349 = vunpack.c.l.b16 %v119
  %v1350 = vunpack.c.h.b16 %v119
  %v1351 = vunpack.c.l.b16 %v120
  %v1352 = vunpack.c.h.b16 %v120
  %v1353 = vunpack.c.l.b16 %v121
  %v1354 = vunpack.c.h.b16 %v121
  %v1355 = vunpack.c.l.b16 %v122
  %v1356 = vunpack.c.h.b16 %v122
  %v1357 = vunpack.c.l.b16 %v123
  %v1358 = vunpack.c.h.b16 %v123
  %v1359 = vunpack.c.l.b16 %v124
  %v1360 = vunpack.c.h.b16 %v124
  %v1361 = vunpack.c.l.b16 %v125
  %v1362 = vunpack.c.h.b16 %v125
  %v1363 = vunpack.c.l.b16 %v126
  %v1364 = vunpack.c.h.b16 %v126
  %v1365 = vunpack.c.l.b16 %v127
  %v1366 = vunpack.c.h.b16 %v127
  %v1367 = vunpack.c.l.b16 %v128
  %v1368 = vunpack.c.h.b16 %v128
  %v1369 = vunpack.c.l.b16 %v129
  %v1370 = vunpack.c.h.b16 %v129
  %v1371 = vunpack.c.l.b16 %v130
  %v1372 = vunpack.c.h.b16 %v130
  %v1373 = vunpack.c.l.b16 %v131
  %v1374 = vunpack.c.h.b16 %v131
  %v1375 = vunpack.c.l.b16 %v132
  %v1376 = vunpack.c.h.b16 %v132
  %v1377 = vunpack.c.l.b16 %v133
  %v1378 = vunpack.c.h.b16 %v133
  %v1379 = vunpack.c.l.b16 %v134
  %v1380 = vunpack.c.h.b16 %v134
  %v1381 = vunpack.c.l.b16 %v135
  %v1382 = vunpack.c.h.b16 %v135
  %v1383 = vunpack.c.l.b16 %v136
  %v1384 = vunpack.c.h.b16 %v136
  %v1385 = vunpack.c.l.b16 %v137
  %v1386 = vunpack.c.h.b16 %v137
  %v1387 = vunpack.c.l.b16 %v138
  %v1388 = vunpack.c.h.b16 %v138
  %v1389 = vunpack.c.l.b16 %v139
  %v1390 = vunpack.c.h.b16 %v139
  %v1391 = vunpack.c.l.b16 %v140
  %v1392 = vunpack.c.h.b16 %v140
  %v1393 = vunpack.c.l.b16 %v141
  %v1394 = vunpack.c.h.b16 %v141
  %v1395 = vunpack.c.l.b16 %v142
  %v1396 = vunpack.c.h.b16 %v142
  %v1397 = vunpack.c.l.b16 %v143
  %v1398 = vunpack.c.h.b16 %v143
  %v1399 = vunpack.c.l.b16 %v144
  %v1400 = vunpack.c.h.b16 %v144
  %v1401 = vunpack.c.l.b16 %v145
  %v1402 = vunpack.c.h.b16 %v145
  %v1403 = vunpack.c.l.b16 %v146
  %v1404 = vunpack.c.h.b16 %v146
  %v1405 = vunpack.c.l.b16 %v147
  %v1406 = vunpack.c.h.b16 %v147
  %v1407 = vunpack.c.l.b16 %v148
  %v1408 = vunpack.c.h.b16 %v148
  %v1409 = vunpack.c.l.b16 %v149
  %v1410 = vunpack.c.h.b16 %v149
  %v1411 = vunpack.c.l.b16 %v150
  %v1412 = vunpack.c.h.b16 %v150
  %v1413 = vunpack.c.l.b16 %v151
  %v1414 = vunpack.c.h.b16 %v151
  %v1415 = vunpack.c.l.b16 %v152
  %v1416 = vunpack.c.h.b16 %v152
  %v1417 = vunpack.c.l.b16 %v153
  %v1418 = vunpack.c.h.b16 %v153
  %v1419 = vunpack.c.l.b16 %v154
  %v1420 = vunpack.c.h.b16 %v154
  %v1421 = vunpack.c.l.b16 %v155
  %v1422 = vunpack.c.h.b16 %v155
  %v1423 = vunpack.c.l.b16 %v156
  %v1424 = vunpack.c.h.b16 %v156
  %v1425 = vunpack.c.l.b16 %v157
  %v1426 = vunpack.c.h.b16 %v157
  %v1427 = vunpack.c.l.b16 %v158
  %v1428 = vunpack.c.h.b16 %v158
  %v1429 = vunpack.c.l.b16 %v159
  %v1430 = vunpack.c.h.b16 %v159
  %v1431 = vunpack.c.l.b16 %v160
  %v1432 = vunpack.c.h.b16 %v160
  %v1433 = vunpack.c.l.b16 %v161
  %v1434 = vunpack.c.h.b16 %v161
  %v1435 = vunpack.c.l.b16 %v162
  %v1436 = vunpack.c.h.b16 %v162
  %v1437 = vunpack.c.l.b16 %v163
  %v1438 = vunpack.c.h.b16 %v163
  %v1439 = vunpack.c.l.b16 %v164
  %v1440 = vunpack.c.h.b16 %v164
  %v1441 = vunpack.c.l.b16 %v165
  %v1442 = vunpack.c.h.b16 %v165
  %v1443 = vunpack.c.l.b16 %v166
  %v1444 = vunpack.c.h.b16 %v166
  %v1445 = vunpack.c.l.b16 %v167
  %v1446 = vunpack.c.h.b16 %v167
  %v1447 = vunpack.c.l.b16 %v168
  %v1448 = vunpack.c.h.b16 %v168
  %v1449 = vunpack.c.l.b16 %v169
  %v1450 = vunpack.c.h.b16 %v169
  %v1451 = vunpack.c.l.b16 %v170
  %v1452 = vunpack.c.h.b16 %v170
  %v1453 = vunpack.c.l.b16 %v171
  %v1454 = vunpack.c.h.b16 %v171
  %v1455 = vunpack.c.l.b16 %v172
  %v1456 = vunpack.c.h.b16 %v172
  %v1457 = vunpack.c.l.b16 %v173
  %v1458 = vunpack.c.h.b16 %v173
  %v1459 = vunpack.c.l.b16 %v174
  %v1460 = vunpack.c.h.b16 %v174
  %v1461 = vunpack.c.l.b16 %v175
  %v1462 = vunpack.c.h.b16 %v175
  %v1463 = vunpack.c.l.b16 %v176
  %v1464 = vunpack.c.h.b16 %v176
  %v1465 = vunpack.c.l.b16 %v177
  %v1466 = vunpack.c.h.b16 %v177
  %v1467 = vunpack.c.l.b16 %v178
  %v1468 = vunpack.c.h.b16 %v178
  %v1469 = vunpack.c.l.b16 %v179
  %v1470 = vunpack.c.h.b16 %v179
  %v1471 = vunpack.c.l.b16 %v180
  %v1472 = vunpack.c.h.b16 %v180
  %v1473 = vunpack.c.l.b16 %v181
  %v1474 = vunpack.c.h.b16 %v181
  %v1475 = vunpack.c.l.b16 %v182
  %v1476 = vunpack.c.h.b16 %v182
  %v1477 = vunpack.c.l.b16 %v183
  %v1478 = vunpack.c.h.b16 %v183
  %v1479 = vunpack.c.l.b16 %v184
  %v1480 = vunpack.c.h.b16 %v184
  %v1481 = vunpack.c.l.b16 %v185
  %v1482 = vunpack.c.h.b16 %v185
  %v1483 = vunpack.c.l.b16 %v186
  %v1484 = vunpack.c.h.b16 %v186
  %v1485 = vunpack.c.l.b16 %v187
  %v1486 = vunpack.c.h.b16 %v187
  %v1487 = vunpack.c.l.b16 %v188
  %v1488 = vunpack.c.h.b16 %v188
  %v1489 = vunpack.c.l.b16 %v189
  %v1490 = vunpack.c.h.b16 %v189
  %v1491 = vunpack.c.l.b16 %v190
  %v1492 = vunpack.c.h.b16 %v190
  %v1493 = vunpack.c.l.b16 %v191
  %v1494 = vunpack.c.h.b16 %v191
  %v1495 = vunpack.c.l.b16 %v192
  %v1496 = vunpack.c.h.b16 %v192
  %v1497 = vunpack.c.l.b16 %v193
  %v1498 = vunpack.c.h.b16 %v193
  %v1499 = vunpack.c.l.b16 %v194
  %v1500 = vunpack.c.h.b16 %v194
  %v1501 = vunpack.c.l.b16 %v195
  %v1502 = vunpack.c.h.b16 %v195
  %v1503 = vunpack.c.l.b16 %v196
  %v1504 = vunpack.c.h.b16 %v196
  %v1505 = vunpack.c.l.b16 %v197
  %v1506 = vunpack.c.h.b16 %v197
  %v1507 = vunpack.c.l.b16 %v198
  %v1508 = vunpack.c.h.b16 %v198
  %v1509 = vunpack.c.l.b16 %v199
  %v1510 = vunpack.c.h.b16 %v199
  %v1511 = vunpack.c.l.b16 %v200
  %v1512 = vunpack.c.h.b16 %v200
  %v1513 = vunpack.c.l.b16 %v201
  %v1514 = vunpack.c.h.b16 %v201
  %v1515 = vunpack.c.l.b16 %v202
  %v1516 = vunpack.c.h.b16 %v202
  %v1517 = vunpack.c.l.b16 %v203
  %v1518 = vunpack.c.h.b16 %v203
  %v1519 = vunpack.c.l.b16 %v204
  %v1520 = vunpack.c.h.b16 %v204
  %v1521 = vunpack.c.l.b16 %v205
  %v1522 = vunpack.c.h.b16 %v205
  %v1523 = vunpack.c.l.b16 %v206
  %v1524 = vunpack.c.h.b16 %v206
  %v1525 = vunpack.c.l.b16 %v207
  %v1526 = vunpack.c.h.b16 %v207
  %v1527 = vunpack.c.l.b16 %v208
  %v1528 = vunpack.c.h.b16 %v208
  %v1529 = vunpack.c.l.b16 %v209
  %v1530 = vunpack.c.h.b16 %v209
  %v1531 = vunpack.c.l.b16 %v210
  %v1532 = vunpack.c.h.b16 %v210
  %v1533 = vunpack.c.l.b16 %v211
  %v1534 = vunpack.c.h.b16 %v211
  %v1535 = vunpack.c.l.b16 %v212
  %v1536 = vunpack.c.h.b16 %v212
  %v1537 = vunpack.c.l.b16 %v213
  %v1538 = vunpack.c.h.b16 %v213
  %v1539 = vunpack.c.l.b16 %v214
  %v1540 = vunpack.c.h.b16 %v214
  %v1541 = vunpack.c.l.b16 %v215
  %v1542 = vunpack.c.h.b16 %v215
  %v1543 = vunpack.c.l.b16 %v216
  %v1544 = vunpack.c.h.b16 %v216
  %v1545 = vunpack.c.l.b16 %v217
  %v1546 = vunpack.c.h.b16 %v217
  %v1547 = vunpack.c.l.b16 %v218
  %v1548 = vunpack.c.h.b16 %v218
  %v1549 = vunpack.c.l.b16 %v219
  %v1550 = vunpack.c.h.b16 %v219
  %v1551 = vunpack.c.l.b16 %v220
  %v1552 = vunpack.c.h.b16 %v220
  %v1553 = vunpack.c.l.b16 %v221
  %v1554 = vunpack.c.h.b16 %v221
  %v1555 = vunpack.c.l.b16 %v222
  %v1556 = vunpack.c.h.b16 %v222
  %v1557 = vunpack.c.l.b16 %v223
  %v1558 = vunpack.c.h.b16 %v223
  %v1559 = vunpack.c.l.b16 %v224
  %v1560 = vunpack.c.h.b16 %v224
  %v1561 = vunpack.c.l.b16 %v225
  %v1562 = vunpack.c.h.b16 %v225
  %v1563 = vunpack.c.l.b16 %v226
  %v1564 = vunpack.c.h.b16 %v226
  %v1565 = vunpack.c.l.b16 %v227
  %v1566 = vunpack.c.h.b16 %v227
  %v1567 = vunpack.c.l.b16 %v228
  %v1568 = vunpack.c.h.b16 %v228
  %v1569 = vunpack.c.l.b16 %v229
  %v1570 = vunpack.c.h.b16 %v229
  %v1571 = vunpack.c.l.b16 %v230
  %v1572 = vunpack.c.h.b16 %v230
  %v1573 = vunpack.c.l.b16 %v231
  %v1574 = vunpack.c.h.b16 %v231
  %v1575 = vunpack.c.l.b16 %v232
  %v1576 = vunpack.c.h.b16 %v232
  %v1577 = vunpack.c.l.b16 %v233
  %v1578 = vunpack.c.h.b16 %v233
  %v1579 = vunpack.c.l.b16 %v234
  %v1580 = vunpack.c.h.b16 %v234
  %v1581 = vunpack.c.l.b16 %v235
  %v1582 = vunpack.c.h.b16 %v235
  %v1583 = vunpack.c.l.b16 %v236
  %v1584 = vunpack.c.h.b16 %v236
  %v1585 = vunpack.c.l.b16 %v237
  %v1586 = vunpack.c.h.b16 %v237
  %v1587 = vunpack.c.l.b16 %v238
  %v1588 = vunpack.c.h.b16 %v238
  %v1589 = vunpack.c.l.b16 %v239
  %v1590 = vunpack.c.h.b16 %v239
  %v1591 = vunpack.c.l.b16 %v240
  %v1592 = vunpack.c.h.b16 %v240
  %v1593 = vunpack.c.l.b16 %v241
  %v1594 = vunpack.c.h.b16 %v241
  %v1595 = vunpack.c.l.b16 %v242
  %v1596 = vunpack.c.h.b16 %v242
  %v1597 = vunpack.c.l.b16 %v243
  %v1598 = vunpack.c.h.b16 %v243
  %v1599 = vunpack.c.l.b16 %v244
  %v1600 = vunpack.c.h.b16 %v244
  %v1601 = vunpack.c.l.b16 %v245
  %v1602 = vunpack.c.h.b16 %v245
  %v1603 = vunpack.c.l.b16 %v246
  %v1604 = vunpack.c.h.b16 %v246
  %v1605 = vunpack.c.l.b16 %v247
  %v1606 = vunpack.c.h.b16 %v247
  %v1607 = vunpack.c.l.b16 %v248
  %v1608 = vunpack.c.h.b16 %v248
  %v1609 = vunpack.c.l.b16 %v249
  %v1610 = vunpack.c.h.b16 %v249
  %v1611 = vunpack.c.l.b16 %v250
  %v1612 = vunpack.c.h.b16 %v250
  %v1613 = vunpack.c.l.b16 %v251
  %v1614 = vunpack.c.h.b16 %v251
  %v1615 = vunpack.c.l.b16 %v252
  %v1616 = vunpack.c.h.b16 %v252
  %v1617 = vunpack.c.l.b16 %v253
  %v1618 = vunpack.c.h.b16 %v253
  %v1619 = vunpack.c.l.b16 %v254
  %v1620 = vunpack.c.h.b16 %v254
  %v1621 = vunpack.c.l.b16 %v255
  %v1622 = vunpack.c.h.b16 %v255
  %v1623 = vunpack.c.l.b16 %v256
  %v1624 = vunpack.c.h.b16 %v256
  %v1625 = vunpack.c.l.b16 %v257
  %v1626 = vunpack.c.h.b16 %v257
  %v1627 = vunpack.c.l.b16 %v258
  %v1628 = vunpack.c.h.b16 %v258
  %v1629 = vunpack.c.l.b16 %v259
  %v1630 = vunpack.c.h.b16 %v259
  %v1631 = vunpack.c.l.b16 %v260
  %v1632 = vunpack.c.h.b16 %v260
  %v1633 = vunpack.c.l.b16 %v261
  %v1634 = vunpack.c.h.b16 %v261
  %v1635 = vunpack.c.l.b16 %v262
  %v1636 = vunpack.c.h.b16 %v262
  %v1637 = vunpack.c.l.b16 %v263
  %v1638 = vunpack.c.h.b16 %v263
  %v1639 = vunpack.c.l.b16 %v264
  %v1640 = vunpack.c.h.b16 %v264
  %v1641 = vunpack.c.l.b16 %v265
  %v1642 = vunpack.c.h.b16 %v265
  %v1643 = vunpack.c.l.b16 %v266
  %v1644 = vunpack.c.h.b16 %v266
  %v1645 = vunpack.c.l.b16 %v267
  %v1646 = vunpack.c.h.b16 %v267
  %v1647 = vunpack.c.l.b16 %v268
  %v1648 = vunpack.c.h.b16 %v268
  %v1649 = vunpack.c.l.b16 %v269
  %v1650 = vunpack.c.h.b16 %v269
  %v1651 = vunpack.c.l.b16 %v270
  %v1652 = vunpack.c.h.b16 %v270
  %v1653 = vunpack.c.l.b16 %v271
  %v1654 = vunpack.c.h.b16 %v271
  %v1655 = vunpack.c.l.b16 %v272
  %v1656 = vunpack.c.h.b16 %v272
  %v1657 = vunpack.c.l.b16 %v273
  %v1658 = vunpack.c.h.b16 %v273
  %v1659 = vunpack.c.l.b16 %v274
  %v1660 = vunpack.c.h.b16 %v274
  %v1661 = vunpack.c.l.b16 %v275
  %v1662 = vunpack.c.h.b16 %v275
  %v1663 = vunpack.c.l.b16 %v276
  %v1664 = vunpack.c.h.b16 %v276
  %v1665 = vunpack.c.l.b16 %v277
  %v1666 = vunpack.c.h.b16 %v277
  %v1667 = vunpack.c.l.b16 %v278
  %v1668 = vunpack.c.h.b16 %v278
  %v1669 = vunpack.c.l.b16 %v279
  %v1670 = vunpack.c.h.b16 %v279
  %v1671 = vunpack.c.l.b16 %v280
  %v1672 = vunpack.c.h.b16 %v280
  %v1673 = vunpack.c.l.b16 %v281
  %v1674 = vunpack.c.h.b16 %v281
  %v1675 = vunpack.c.l.b16 %v282
  %v1676 = vunpack.c.h.b16 %v282
  %v1677 = vunpack.c.l.b16 %v283
  %v1678 = vunpack.c.h.b16 %v283
  %v1679 = vunpack.c.l.b16 %v284
  %v1680 = vunpack.c.h.b16 %v284
  %v1681 = vunpack.c.l.b16 %v285
  %v1682 = vunpack.c.h.b16 %v285
  %v1683 = vunpack.c.l.b16 %v286
  %v1684 = vunpack.c.h.b16 %v286
  %v1685 = vunpack.c.l.b16 %v287
  %v1686 = vunpack.c.h.b16 %v287
  %v1687 = vunpack.c.l.b16 %v288
  %v1688 = vunpack.c.h.b16 %v288
  %v1689 = vunpack.c.l.b16 %v289
  %v1690 = vunpack.c.h.b16 %v289
  %v1691 = vunpack.c.l.b16 %v290
  %v1692 = vunpack.c.h.b16 %v290
  %v1693 = vunpack.c.l.b16 %v291
  %v1694 = vunpack.c.h.b16 %v291
  %v1695 = vunpack.c.l.b16 %v292
  %v1696 = vunpack.c.h.b16 %v292
  %v1697 = vunpack.c.l.b16 %v293
  %v1698 = vunpack.c.h.b16 %v293
  %v1699 = vunpack.c.l.b16 %v294
  %v1700 = vunpack.c.h.b16 %v294
  %v1701 = vunpack.c.l.b16 %v295
  %v1702 = vunpack.c.h.b16 %v295
  %v1703 = vunpack.c.l.b16 %v296
  %v1704 = vunpack.c.h.b16 %v296
  %v1705 = vunpack.c.l.b16 %v297
  %v1706 = vunpack.c.h.b16 %v297
  %v1707 = vunpack.c.l.b16 %v298
  %v1708 = vunpack.c.h.b16 %v298
  %v1709 = vunpack.c.l.b16 %v299
  %v1710 = vunpack.c.h.b16 %v299
  %v1711 = vunpack.c.l.b16 %v300
  %v1712 = vunpack.c.h.b16 %v300
  %v1713 = vunpack.c.l.b16 %v301
  %v1714 = vunpack.c.h.b16 %v301
  %v1715 = vunpack.c.l.b16 %v302
  %v1716 = vunpack.c.h.b16 %v302
  %v1717 = vunpack.c.l.b16 %v303
  %v1718 = vunpack.c.h.b16 %v303
  %v1719 = vunpack.c.l.b16 %v304
  %v1720 = vunpack.c.h.b16 %v304
  %v1721 = vunpack.c.l.b16 %v305
  %v1722 = vunpack.c.h.b16 %v305
  %v1723 = vunpack.c.l.b16 %v306
  %v1724 = vunpack.c.h.b16 %v306
  %v1725 = vunpack.c.l.b16 %v307
  %v1726 = vunpack.c.h.b16 %v307
  %v1727 = vunpack.c.l.b16 %v308
  %v1728 = vunpack.c.h.b16 %v308
  %v1729 = vunpack.c.l.b16 %v309
  %v1730 = vunpack.c.h.b16 %v309
  %v1731 = vunpack.c.l.b16 %v310
  %v1732 = vunpack.c.h.b16 %v310
  %v1733 = vunpack.c.l.b16 %v311
  %v1734 = vunpack.c.h.b16 %v311
  %v1735 = vunpack.c.l.b16 %v312
  %v1736 = vunpack.c.h.b16 %v312
  %v1737 = vunpack.c.l.b16 %v313
  %v1738 = vunpack.c.h.b16 %v313
  %v1739 = vunpack.c.l.b16 %v314
  %v1740 = vunpack.c.h.b16 %v314
  %v1741 = vunpack.c.l.b16 %v315
  %v1742 = vunpack.c.h.b16 %v315
  %v1743 = vunpack.c.l.b16 %v316
  %v1744 = vunpack.c.h.b16 %v316
  %v1745 = vunpack.c.l.b16 %v317
  %v1746 = vunpack.c.h.b16 %v317
  %v1747 = vunpack.c.l.b16 %v318
  %v1748 = vunpack.c.h.b16 %v318
  %v1749 = vunpack.c.l.b16 %v319
  %v1750 = vunpack.c.h.b16 %v319
  %v1751 = vunpack.c.l.b16 %v320
  %v1752 = vunpack.c.h.b16 %v320
  %v1753 = vunpack.c.l.b16 %v321
  %v1754 = vunpack.c.h.b16 %v321
  %v1755 = vunpack.c.l.b16 %v322
  %v1756 = vunpack.c.h.b16 %v322
  %v1757 = vunpack.c.l.b16 %v323
  %v1758 = vunpack.c.h.b16 %v323
  %v1759 = vunpack.c.l.b16 %v324
  %v1760 = vunpack.c.h.b16 %v324
  %v1761 = vunpack.c.l.b16 %v325
  %v1762 = vunpack.c.h.b16 %v325
  %v1763 = vunpack.c.l.b16 %v326
  %v1764 = vunpack.c.h.b16 %v326
  %v1765 = vunpack.c.l.b16 %v327
  %v1766 = vunpack.c.h.b16 %v327
  %v1767 = vunpack.c.l.b16 %v328
  %v1768 = vunpack.c.h.b16 %v328
  %v1769 = vunpack.c.l.b16 %v329
  %v1770 = vunpack.c.h.b16 %v329
  %v1771 = vunpack.c.l.b16 %v330
  %v1772 = vunpack.c.h.b16 %v330
  %v1773 = vunpack.c.l.b16 %v331
  %v1774 = vunpack.c.h.b16 %v331
  %v1775 = vunpack.c.l.b16 %v332
  %v1776 = vunpack.c.h.b16 %v332
  %v1777 = vunpack.c.l.b16 %v333
  %v1778 = vunpack.c.h.b16 %v333
  %v1779 = vunpack.c.l.b16 %v334
  %v1780 = vunpack.c.h.b16 %v334
  %v1781 = vunpack.c.l.b16 %v335
  %v1782 = vunpack.c.h.b16 %v335
  %v1783 = vunpack.c.l.b16 %v336
  %v1784 = vunpack.c.h.b16 %v336
  %v1785 = vunpack.c.l.b16 %v337
  %v1786 = vunpack.c.h.b16 %v337
  %v1787 = vunpack.c.l.b16 %v338
  %v1788 = vunpack.c.h.b16 %v338
  %v1789 = vunpack.c.l.b16 %v339
  %v1790 = vunpack.c.h.b16 %v339
  %v1791 = vunpack.c.l.b16 %v340
  %v1792 = vunpack.c.h.b16 %v340
  %v1793 = vunpack.c.l.b16 %v341
  %v1794 = vunpack.c.h.b16 %v341
  %v1795 = vunpack.c.l.b16 %v342
  %v1796 = vunpack.c.h.b16 %v342
  %v1797 = vunpack.c.l.b16 %v343
  %v1798 = vunpack.c.h.b16 %v343
  %v1799 = vunpack.c.l.b16 %v344
  %v1800 = vunpack.c.h.b16 %v344
  %v1801 = vunpack.c.l.b16 %v345
  %v1802 = vunpack.c.h.b16 %v345
  %v1803 = vunpack.c.l.b16 %v346
  %v1804 = vunpack.c.h.b16 %v346
  %v1805 = vunpack.c.l.b16 %v347
  %v1806 = vunpack.c.h.b16 %v347
  %v1807 = vunpack.c.l.b16 %v348
  %v1808 = vunpack.c.h.b16 %v348
  %v1809 = vunpack.c.l.b16 %v349
  %v1810 = vunpack.c.h.b16 %v349
  %v1811 = vunpack.c.l.b16 %v350
  %v1812 = vunpack.c.h.b16 %v350
  %v1813 = vunpack.c.l.b16 %v351
  %v1814 = vunpack.c.h.b16 %v351
  %v1815 = vunpack.c.l.b16 %v352
  %v1816 = vunpack.c.h.b16 %v352
  %v1817 = vunpack.c.l.b16 %v353
  %v1818 = vunpack.c.h.b16 %v353
  %v1819 = vunpack.c.l.b16 %v354
  %v1820 = vunpack.c.h.b16 %v354
  %v1821 = vunpack.c.l.b16 %v355
  %v1822 = vunpack.c.h.b16 %v355
  %v1823 = vunpack.c.l.b16 %v356
  %v1824 = vunpack.c.h.b16 %v356
  %v1825 = vunpack.c.l.b16 %v357
  %v1826 = vunpack.c.h.b16 %v357
  %v1827 = vunpack.c.l.b16 %v358
  %v1828 = vunpack.c.h.b16 %v358
  %v1829 = vunpack.c.l.b16 %v359
  %v1830 = vunpack.c.h.b16 %v359
  %v1831 = vunpack.c.l.b16 %v360
  %v1832 = vunpack.c.h.b16 %v360
  %v1833 = vunpack.c.l.b16 %v361
  %v1834 = vunpack.c.h.b16 %v361
  %v1835 = vunpack.c.l.b16 %v362
  %v1836 = vunpack.c.h.b16 %v362
  %v1837 = vunpack.c.l.b16 %v363
  %v1838 = vunpack.c.h.b16 %v363
  %v1839 = vunpack.c.l.b16 %v364
  %v1840 = vunpack.c.h.b16 %v364
  %v1841 = vunpack.c.l.b16 %v365
  %v1842 = vunpack.c.h.b16 %v365
  %v1843 = vunpack.c.l.b16 %v366
  %v1844 = vunpack.c.h.b16 %v366
  %v1845 = vunpack.c.l.b16 %v367
  %v1846 = vunpack.c.h.b16 %v367
  %v1847 = vunpack.c.l.b16 %v368
  %v1848 = vunpack.c.h.b16 %v368
  %v1849 = vunpack.c.l.b16 %v369
  %v1850 = vunpack.c.h.b16 %v369
  %v1851 = vunpack.c.l.b16 %v370
  %v1852 = vunpack.c.h.b16 %v370
  %v1853 = vunpack.c.l.b16 %v371
  %v1854 = vunpack.c.h.b16 %v371
  %v1855 = vunpack.c.l.b16 %v372
  %v1856 = vunpack.c.h.b16 %v372
  %v1857 = vunpack.c.l.b16 %v373
  %v1858 = vunpack.c.h.b16 %v373
  %v1859 = vunpack.c.l.b16 %v374
  %v1860 = vunpack.c.h.b16 %v374
  %v1861 = vunpack.c.l.b16 %v375
  %v1862 = vunpack.c.h.b16 %v375
  %v1863 = vunpack.c.l.b16 %v376
  %v1864 = vunpack.c.h.b16 %v376
  %v1865 = vunpack.c.l.b16 %v377
  %v1866 = vunpack.c.h.b16 %v377
  %v1867 = vunpack.c.l.b16 %v378
  %v1868 = vunpack.c.h.b16 %v378
  %v1869 = vunpack.c.l.b16 %v379
  %v1870 = vunpack.c.h.b16 %v379
  %v1871 = vunpack.c.l.b16 %v380
  %v1872 = vunpack.c.h.b16 %v380
  %v1873 = vunpack.c.l.b16 %v381
  %v1874 = vunpack.c.h.b16 %v381
  %v1875 = vunpack.c.l.b16 %v382
  %v1876 = vunpack.c.h.b16 %v382
  %v1877 = vunpack.c.l.b16 %v383
  %v1878 = vunpack.c.h.b16 %v383
  %v1879 = vunpack.c.l.b16 %v384
  %v1880 = vunpack.c.h.b16 %v384
  %v1881 = vunpack.c.l.b16 %v385
  %v1882 = vunpack.c.h.b16 %v385
  %v1883 = vunpack.c.l.b16 %v386
  %v1884 = vunpack.c.h.b16 %v386
  %v1885 = vunpack.c.l.b16 %v387
  %v1886 = vunpack.c.h.b16 %v387
  %v1887 = vunpack.c.l.b16 %v388
  %v1888 = vunpack.c.h.b16 %v388
  %v1889 = vunpack.c.l.b16 %v389
  %v1890 = vunpack.c.h.b16 %v389
  %v1891 = vunpack.c.l.b16 %v390
  %v1892 = vunpack.c.h.b16 %v390
  %v1893 = vunpack.c.l.b16 %v391
  %v1894 = vunpack.c.h.b16 %v391
  %v1895 = vunpack.c.l.b16 %v392
  %v1896 = vunpack.c.h.b16 %v392
  %v1897 = vunpack.c.l.b16 %v393
  %v1898 = vunpack.c.h.b16 %v393
  %v1899 = vunpack.c.l.b16 %v394
  %v1900 = vunpack.c.h.b16 %v394
  %v1901 = vunpack.c.l.b16 %v395
  %v1902 = vunpack.c.h.b16 %v395
  %v1903 = vunpack.c.l.b16 %v396
  %v1904 = vunpack.c.h.b16 %v396
  %v1905 = vunpack.c.l.b16 %v397
  %v1906 = vunpack.c.h.b16 %v397
  %v1907 = vunpack.c.l.b16 %v398
  %v1908 = vunpack.c.h.b16 %v398
  %v1909 = vunpack.c.l.b16 %v399
  %v1910 = vunpack.c.h.b16 %v399
  %v1911 = vunpack.c.l.b16 %v400
  %v1912 = vunpack.c.h.b16 %v400
  %v1913 = vunpack.c.l.b16 %v401
  %v1914 = vunpack.c.h.b16 %v401
  %v1915 = vunpack.c.l.b16 %v402
  %v1916 = vunpack.c.h.b16 %v402
  %v1917 = vunpack.c.l.b16 %v403
  %v1918 = vunpack.c.h.b16 %v403
  %v1919 = vunpack.c.l.b16 %v404
  %v1920 = vunpack.c.h.b16 %v404
  %v1921 = vunpack.c.l.b16 %v405
  %v1922 = vunpack.c.h.b16 %v405
  %v1923 = vunpack.c.l.b16 %v406
  %v1924 = vunpack.c.h.b16 %v406
  %v1925 = vunpack.c.l.b16 %v407
  %v1926 = vunpack.c.h.b16 %v407
  %v1927 = vunpack.c.l.b16 %v408
  %v1928 = vunpack.c.h.b16 %v408
  %v1929 = vunpack.c.l.b16 %v409
  %v1930 = vunpack.c.h.b16 %v409
  %v1931 = vunpack.c.l.b16 %v410
  %v1932 = vunpack.c.h.b16 %v410
  %v1933 = vunpack.c.l.b16 %v411
  %v1934 = vunpack.c.h.b16 %v411
  %v1935 = vunpack.c.l.b16 %v412
  %v1936 = vunpack.c.h.b16 %v412
  %v1937 = vunpack.c.l.b16 %v413
  %v1938 = vunpack.c.h.b16 %v413
  %v1939 = vunpack.c.l.b16 %v414
  %v1940 = vunpack.c.h.b16 %v414
  %v1941 = vunpack.c.l.b16 %v415
  %v1942 = vunpack.c.h.b16 %v415
  %v1943 = vunpack.c.l.b16 %v416
  %v1944 = vunpack.c.h.b16 %v416
  %v1945 = vunpack.c.l.b16 %v417
  %v1946 = vunpack.c.h.b16 %v417
  %v1947 = vunpack.c.l.b16 %v418
  %v1948 = vunpack.c.h.b16 %v418
  %v1949 = vunpack.c.l.b16 %v419
  %v1950 = vunpack.c.h.b16 %v419
  %v1951 = vunpack.c.l.b16 %v420
  %v1952 = vunpack.c.h.b16 %v420
  %v1953 = vunpack.c.l.b16 %v421
  %v1954 = vunpack.c.h.b16 %v421
  %v1955 = vunpack.c.l.b16 %v422
  %v1956 = vunpack.c.h.b16 %v422
  %v1957 = vunpack.c.l.b16 %v423
  %v1958 = vunpack.c.h.b16 %v423
  %v1959 = vunpack.c.l.b16 %v424
  %v1960 = vunpack.c.h.b16 %v424
  %v1961 = vunpack.c.l.b16 %v425
  %v1962 = vunpack.c.h.b16 %v425
  %v1963 = vunpack.c.l.b16 %v426
  %v1964 = vunpack.c.h.b16 %v426
  %v1965 = vunpack.c.l.b16 %v427
  %v1966 = vunpack.c.h.b16 %v427
  %v1967 = vunpack.c.l.b16 %v428
  %v1968 = vunpack.c.h.b16 %v428
  %v1969 = vunpack.c.l.b16 %v429
  %v1970 = vunpack.c.h.b16 %v429
  %v1971 = vunpack.c.l.b16 %v430
  %v1972 = vunpack.c.h.b16 %v430
  %v1973 = vunpack.c.l.b16 %v431
  %v1974 = vunpack.c.h.b16 %v431
  %v1975 = vunpack.c.l.b16 %v432
  %v1976 = vunpack.c.h.b16 %v432
  %v1977 = vunpack.c.l.b16 %v433
  %v1978 = vunpack.c.h.b16 %v433
  %v1979 = vunpack.c.l.b16 %v434
  %v1980 = vunpack.c.h.b16 %v434
  %v1981 = vunpack.c.l.b16 %v435
  %v1982 = vunpack.c.h.b16 %v435
  %v1983 = vunpack.c.l.b16 %v436
  %v1984 = vunpack.c.h.b16 %v436
  %v1985 = vunpack.c.l.b16 %v437
  %v1986 = vunpack.c.h.b16 %v437
  %v1987 = vunpack.c.l.b16 %v438
  %v1988 = vunpack.c.h.b16 %v438
  %v1989 = vunpack.c.l.b16 %v439
  %v1990 = vunpack.c.h.b16 %v439
  %v1991 = vunpack.c.l.b16 %v440
  %v1992 = vunpack.c.h.b16 %v440
  %v1993 = vunpack.c.l.b16 %v441
  %v1994 = vunpack.c.h.b16 %v441
  %v1995 = vunpack.c.l.b16 %v442
  %v1996 = vunpack.c.h.b16 %v442
  %v1997 = vunpack.c.l.b16 %v443
  %v1998 = vunpack.c.h.b16 %v443
  %v1999 = vunpack.c.l.b16 %v444
  %v2000 = vunpack.c.h.b16 %v444
  %v2001 = vunpack.c.l.b16 %v445
  %v2002 = vunpack.c.h.b16 %v445
  %v2003 = vunpack.c.l.b16 %v446
  %v2004 = vunpack.c.h.b16 %v446
  %v2005 = vunpack.c.l.b16 %v447
  %v2006 = vunpack.c.h.b16 %v447
  %v2007 = vunpack.c.l.b16 %v448
  %v2008 = vunpack.c.h.b16 %v448
  %v2009 = vunpack.c.l.b16 %v449
  %v2010 = vunpack.c.h.b16 %v449
  %v2011 = vunpack.c.l.b16 %v450
  %v2012 = vunpack.c.h.b16 %v450
  %v2013 = vunpack.c.l.b16 %v451
  %v2014 = vunpack.c.h.b16 %v451
  %v2015 = vunpack.c.l.b16 %v452
  %v2016 = vunpack.c.h.b16 %v452
  %v2017 = vunpack.c.l.b16 %v453
  %v2018 = vunpack.c.h.b16 %v453
  %v2019 = vunpack.c.l.b16 %v454
  %v2020 = vunpack.c.h.b16 %v454
  %v2021 = vunpack.c.l.b16 %v455
  %v2022 = vunpack.c.h.b16 %v455
  %v2023 = vunpack.c.l.b16 %v456
  %v2024 = vunpack.c.h.b16 %v456
  %v2025 = vunpack.c.l.b16 %v457
  %v2026 = vunpack.c.h.b16 %v457
  %v2027 = vunpack.c.l.b16 %v458
  %v2028 = vunpack.c.h.b16 %v458
  %v2029 = vunpack.c.l.b16 %v459
  %v2030 = vunpack.c.h.b16 %v459
  %v2031 = vunpack.c.l.b16 %v460
  %v2032 = vunpack.c.h.b16 %v460
  %v2033 = vunpack.c.l.b16 %v461
  %v2034 = vunpack.c.h.b16 %v461
  %v2035 = vunpack.c.l.b16 %v462
  %v2036 = vunpack.c.h.b16 %v462
  %v2037 = vunpack.c.l.b16 %v463
  %v2038 = vunpack.c.h.b16 %v463
  %v2039 = vunpack.c.l.b16 %v464
  %v2040 = vunpack.c.h.b16 %v464
  %v2041 = vunpack.c.l.b16 %v465
  %v2042 = vunpack.c.h.b16 %v465
  %v2043 = vunpack.c.l.b16 %v466
  %v2044 = vunpack.c.h.b16 %v466
  %v2045 = vunpack.c.l.b16 %v467
  %v2046 = vunpack.c.h.b16 %v467
  %v2047 = vunpack.c.l.b16 %v468
  %v2048 = vunpack.c.h.b16 %v468
  %v2049 = vunpack.c.l.b16 %v469
  %v2050 = vunpack.c.h.b16 %v469
  %v2051 = vunpack.c.l.b16 %v470
  %v2052 = vunpack.c.h.b16 %v470
  %v2053 = vunpack.c.l.b16 %v471
  %v2054 = vunpack.c.h.b16 %v471
  %v2055 = vunpack.c.l.b16 %v472
  %v2056 = vunpack.c.h.b16 %v472
  %v2057 = vunpack.c.l.b16 %v473
  %v2058 = vunpack.c.h.b16 %v473
  %v2059 = vunpack.c.l.b16 %v474
  %v2060 = vunpack.c.h.b16 %v474
  %v2061 = vunpack.c.l.b16 %v475
  %v2062 = vunpack.c.h.b16 %v475
  %v2063 = vunpack.c.l.b16 %v476
  %v2064 = vunpack.c.h.b16 %v476
  %v2065 = vunpack.c.l.b16 %v477
  %v2066 = vunpack.c.h.b16 %v477
  %v2067 = vunpack.c.l.b16 %v478
  %v2068 = vunpack.c.h.b16 %v478
  %v2069 = vunpack.c.l.b16 %v479
  %v2070 = vunpack.c.h.b16 %v479
  %v2071 = vunpack.c.l.b16 %v480
  %v2072 = vunpack.c.h.b16 %v480
  %v2073 = vunpack.c.l.b16 %v481
  %v2074 = vunpack.c.h.b16 %v481
  %v2075 = vunpack.c.l.b16 %v482
  %v2076 = vunpack.c.h.b16 %v482
  %v2077 = vunpack.c.l.b16 %v483
  %v2078 = vunpack.c.h.b16 %v483
  %v2079 = vunpack.c.l.b16 %v484
  %v2080 = vunpack.c.h.b16 %v484
  %v2081 = vunpack.c.l.b16 %v485
  %v2082 = vunpack.c.h.b16 %v485
  %v2083 = vunpack.c.l.b16 %v486
  %v2084 = vunpack.c.h.b16 %v486
  %v2085 = vunpack.c.l.b16 %v487
  %v2086 = vunpack.c.h.b16 %v487
  %v2087 = vunpack.c.l.b16 %v488
  %v2088 = vunpack.c.h.b16 %v488
  %v2089 = vunpack.c.l.b16 %v489
  %v2090 = vunpack.c.h.b16 %v489
  %v2091 = vunpack.c.l.b16 %v490
  %v2092 = vunpack.c.h.b16 %v490
  %v2093 = vunpack.c.l.b16 %v491
  %v2094 = vunpack.c.h.b16 %v491
  %v2095 = vunpack.c.l.b16 %v492
  %v2096 = vunpack.c.h.b16 %v492
  %v2097 = vunpack.c.l.b16 %v493
  %v2098 = vunpack.c.h.b16 %v493
  %v2099 = vunpack.c.l.b16 %v494
  %v2100 = vunpack.c.h.b16 %v494
  %v2101 = vunpack.c.l.b16 %v495
  %v2102 = vunpack.c.h.b16 %v495
  %v2103 = vunpack.c.l.b16 %v496
  %v2104 = vunpack.c.h.b16 %v496
  %v2105 = vunpack.c.l.b16 %v497
  %v2106 = vunpack.c.h.b16 %v497
  %v2107 = vunpack.c.l.b16 %v498
  %v2108 = vunpack.c.h.b16 %v498
  %v2109 = vunpack.c.l.b16 %v499
  %v2110 = vunpack.c.h.b16 %v499
  %v2111 = vunpack.c.l.b16 %v500
  %v2112 = vunpack.c.h.b16 %v500
  %v2113 = vunpack.c.l.b16 %v501
  %v2114 = vunpack.c.h.b16 %v501
  %v2115 = vunpack.c.l.b16 %v502
  %v2116 = vunpack.c.h.b16 %v502
  %v2117 = vunpack.c.l.b16 %v503
  %v2118 = vunpack.c.h.b16 %v503
  %v2119 = vunpack.c.l.b16 %v504
  %v2120 = vunpack.c.h.b16 %v504
  %v2121 = vunpack.c.l.b16 %v505
  %v2122 = vunpack.c.h.b16 %v505
  %v2123 = vunpack.c.l.b16 %v506
  %v2124 = vunpack.c.h.b16 %v506
  %v2125 = vunpack.c.l.b16 %v507
  %v2126 = vunpack.c.h.b16 %v507
  %v2127 = vunpack.c.l.b16 %v508
  %v2128 = vunpack.c.h.b16 %v508
  %v2129 = vunpack.c.l.b16 %v509
  %v2130 = vunpack.c.h.b16 %v509
  %v2131 = vunpack.c.l.b16 %v510
  %v2132 = vunpack.c.h.b16 %v510
  %v2133 = vunpack.c.l.b16 %v511
  %v2134 = vunpack.c.h.b16 %v511
  %v2135 = vunpack.c.l.b16 %v512
  %v2136 = vunpack.c.h.b16 %v512
  %v2137 = vunpack.c.l.b16 %v513
  %v2138 = vunpack.c.h.b16 %v513
  %v2139 = vunpack.c.l.b16 %v514
  %v2140 = vunpack.c.h.b16 %v514
  %v2141 = vunpack.c.l.b16 %v515
  %v2142 = vunpack.c.h.b16 %v515
  %v2143 = vunpack.c.l.b16 %v516
  %v2144 = vunpack.c.h.b16 %v516
  %v2145 = vunpack.c.l.b16 %v517
  %v2146 = vunpack.c.h.b16 %v517
  %v2147 = vunpack.c.l.b16 %v518
  %v2148 = vunpack.c.h.b16 %v518
  %v2149 = vunpack.c.l.b16 %v519
  %v2150 = vunpack.c.h.b16 %v519
  %v2151 = vunpack.c.l.b16 %v520
  %v2152 = vunpack.c.h.b16 %v520
  %v2153 = vunpack.c.l.b16 %v521
  %v2154 = vunpack.c.h.b16 %v521
  %v2155 = vunpack.c.l.b16 %v522
  %v2156 = vunpack.c.h.b16 %v522
  %v2157 = vunpack.c.l.b16 %v523
  %v2158 = vunpack.c.h.b16 %v523
  %v2159 = vunpack.c.l.b16 %v524
  %v2160 = vunpack.c.h.b16 %v524
  %v2161 = vunpack.c.l.b16 %v525
  %v2162 = vunpack.c.h.b16 %v525
  %v2163 = vunpack.c.l.b16 %v526
  %v2164 = vunpack.c.h.b16 %v526
  %v2165 = vunpack.c.l.b16 %v527
  %v2166 = vunpack.c.h.b16 %v527
  %v2167 = vunpack.c.l.b16 %v528
  %v2168 = vunpack.c.h.b16 %v528
  %v2169 = vunpack.c.l.b16 %v529
  %v2170 = vunpack.c.h.b16 %v529
  %v2171 = vunpack.c.l.b16 %v530
  %v2172 = vunpack.c.h.b16 %v530
  %v2173 = vunpack.c.l.b16 %v531
  %v2174 = vunpack.c.h.b16 %v531
  %v2175 = vunpack.c.l.b16 %v532
  %v2176 = vunpack.c.h.b16 %v532
  %v2177 = vunpack.c.l.b16 %v533
  %v2178 = vunpack.c.h.b16 %v533
  %v2179 = vunpack.c.l.b16 %v534
  %v2180 = vunpack.c.h.b16 %v534
  %v2181 = vunpack.c.l.b16 %v535
  %v2182 = vunpack.c.h.b16 %v535
  %v2183 = vunpack.c.l.b16 %v536
  %v2184 = vunpack.c.h.b16 %v536
  %v2185 = vunpack.c.l.b16 %v537
  %v2186 = vunpack.c.h.b16 %v537
  %v2187 = vunpack.c.l.b16 %v538
  %v2188 = vunpack.c.h.b16 %v538
  %v2189 = vunpack.c.l.b16 %v539
  %v2190 = vunpack.c.h.b16 %v539
  %v2191 = vunpack.c.l.b16 %v540
  %v2192 = vunpack.c.h.b16 %v540
  %v2193 = vunpack.c.l.b16 %v541
  %v2194 = vunpack.c.h.b16 %v541
  %v2195 = vunpack.c.l.b16 %v542
  %v2196 = vunpack.c.h.b16 %v542
  %v2197 = vunpack.c.l.b16 %v543
  %v2198 = vunpack.c.h.b16 %v543
  %v2199 = vunpack.c.l.b16 %v544
  %v2200 = vunpack.c.h.b16 %v544
  %v2201 = vunpack.c.l.b16 %v545
  %v2202 = vunpack.c.h.b16 %v545
  %v2203 = vunpack.c.l.b16 %v546
  %v2204 = vunpack.c.h.b16 %v546
  %v2205 = vunpack.c.l.b16 %v547
  %v2206 = vunpack.c.h.b16 %v547
  %v2207 = vunpack.c.l.b16 %v548
  %v2208 = vunpack.c.h.b16 %v548
  %v2209 = vpack.c.b16 %v1187, %v1185
  %v2210 = vpack.c.b16 %v1188, %v1186
  %v2211 = vpack.c.b16 %v1191, %v1189
  %v2212 = vpack.c.b16 %v1192, %v1190
  %v2213 = vpack.c.b16 %v1195, %v1193
  %v2214 = vpack.c.b16 %v1196, %v1194
  %v2215 = vpack.c.b16 %v1199, %v1197
  %v2216 = vpack.c.b16 %v1200, %v1198
  %v2217 = vpack.c.b16 %v1203, %v1201
  %v2218 = vpack.c.b16 %v1204, %v1202
  %v2219 = vpack.c.b16 %v1207, %v1205
  %v2220 = vpack.c.b16 %v1208, %v1206
  %v2221 = vpack.c.b16 %v1211, %v1209
  %v2222 = vpack.c.b16 %v1212, %v1210
  %v2223 = vpack.c.b16 %v1215, %v1213
  %v2224 = vpack.c.b16 %v1216, %v1214
  %v2225 = vpack.c.b16 %v1219, %v1217
  %v2226 = vpack.c.b16 %v1220, %v1218
  %v2227 = vpack.c.b16 %v1223, %v1221
  %v2228 = vpack.c.b16 %v1224, %v1222
  %v2229 = vpack.c.b16 %v1227, %v1225
  %v2230 = vpack.c.b16 %v1228, %v1226
  %v2231 = vpack.c.b16 %v1231, %v1229
  %v2232 = vpack.c.b16 %v1232, %v1230
  %v2233 = vpack.c.b16 %v1235, %v1233
  %v2234 = vpack.c.b16 %v1236, %v1234
  %v2235 = vpack.c.b16 %v1239, %v1237
  %v2236 = vpack.c.b16 %v1240, %v1238
  %v2237 = vpack.c.b16 %v1243, %v1241
  %v2238 = vpack.c.b16 %v1244, %v1242
  %v2239 = vpack.c.b16 %v1247, %v1245
  %v2240 = vpack.c.b16 %v1248, %v1246
  %v2241 = vpack.c.b16 %v1251, %v1249
  %v2242 = vpack.c.b16 %v1252, %v1250
  %v2243 = vpack.c.b16 %v1255, %v1253
  %v2244 = vpack.c.b16 %v1256, %v1254
  %v2245 = vpack.c.b16 %v1259, %v1257
  %v2246 = vpack.c.b16 %v1260, %v1258
  %v2247 = vpack.c.b16 %v1263, %v1261
  %v2248 = vpack.c.b16 %v1264, %v1262
  %v2249 = vpack.c.b16 %v1267, %v1265
  %v2250 = vpack.c.b16 %v1268, %v1266
  %v2251 = vpack.c.b16 %v1271, %v1269
  %v2252 = vpack.c.b16 %v1272, %v1270
  %v2253 = vpack.c.b16 %v1275, %v1273
  %v2254 = vpack.c.b16 %v1276, %v1274
  %v2255 = vpack.c.b16 %v1279, %v1277
  %v2256 = vpack.c.b16 %v1280, %v1278
  %v2257 = vpack.c.b16 %v1283, %v1281
  %v2258 = vpack.c.b16 %v1284, %v1282
  %v2259 = vpack.c.b16 %v1287, %v1285
  %v2260 = vpack.c.b16 %v1288, %v1286
  %v2261 = vpack.c.b16 %v1291, %v1289
  %v2262 = vpack.c.b16 %v1292, %v1290
  %v2263 = vpack.c.b16 %v1295, %v1293
  %v2264 = vpack.c.b16 %v1296, %v1294
  %v2265 = vpack.c.b16 %v1299, %v1297
  %v2266 = vpack.c.b16 %v1300, %v1298
  %v2267 = vpack.c.b16 %v1303, %v1301
  %v2268 = vpack.c.b16 %v1304, %v1302
  %v2269 = vpack.c.b16 %v1307, %v1305
  %v2270 = vpack.c.b16 %v1308, %v1306
  %v2271 = vpack.c.b16 %v1311, %v1309
  %v2272 = vpack.c.b16 %v1312, %v1310
  %v2273 = vpack.c.b16 %v1315, %v1313
  %v2274 = vpack.c.b16 %v1316, %v1314
  %v2275 = vpack.c.b16 %v1319, %v1317
  %v2276 = vpack.c.b16 %v1320, %v1318
  %v2277 = vpack.c.b16 %v1323, %v1321
  %v2278 = vpack.c.b16 %v1324, %v1322
  %v2279 = vpack.c.b16 %v1327, %v1325
  %v2280 = vpack.c.b16 %v1328, %v1326
  %v2281 = vpack.c.b16 %v1331, %v1329
  %v2282 = vpack.c.b16 %v1332, %v1330
  %v2283 = vpack.c.b16 %v1335, %v1333
  %v2284 = vpack.c.b16 %v1336, %v1334
  %v2285 = vpack.c.b16 %v1339, %v1337
  %v2286 = vpack.c.b16 %v1340, %v1338
  %v2287 = vpack.c.b16 %v1343, %v1341
  %v2288 = vpack.c.b16 %v1344, %v1342
  %v2289 = vpack.c.b16 %v1347, %v1345
  %v2290 = vpack.c.b16 %v1348, %v1346
  %v2291 = vpack.c.b16 %v1351, %v1349
  %v2292 = vpack.c.b16 %v1352, %v1350
  %v2293 = vpack.c.b16 %v1355, %v1353
  %v2294 = vpack.c.b16 %v1356, %v1354
  %v2295 = vpack.c.b16 %v1359, %v1357
  %v2296 = vpack.c.b16 %v1360, %v1358
  %v2297 = vpack.c.b16 %v1363, %v1361
  %v2298 = vpack.c.b16 %v1364, %v1362
  %v2299 = vpack.c.b16 %v1367, %v1365
  %v2300 = vpack.c.b16 %v1368, %v1366
  %v2301 = vpack.c.b16 %v1371, %v1369
  %v2302 = vpack.c.b16 %v1372, %v1370
  %v2303 = vpack.c.b16 %v1375, %v1373
  %v2304 = vpack.c.b16 %v1376, %v1374
  %v2305 = vpack.c.b16 %v1379, %v1377
  %v2306 = vpack.c.b16 %v1380, %v1378
  %v2307 = vpack.c.b16 %v1383, %v1381
  %v2308 = vpack.c.b16 %v1384, %v1382
  %v2309 = vpack.c.b16 %v1387, %v1385
  %v2310 = vpack.c.b16 %v1388, %v1386
  %v2311 = vpack.c.b16 %v1391, %v1389
  %v2312 = vpack.c.b16 %v1392, %v1390
  %v2313 = vpack.c.b16 %v1395, %v1393
  %v2314 = vpack.c.b16 %v1396, %v1394
  %v2315 = vpack.c.b16 %v1399, %v1397
  %v2316 = vpack.c.b16 %v1400, %v1398
  %v2317 = vpack.c.b16 %v1403, %v1401
  %v2318 = vpack.c.b16 %v1404, %v1402
  %v2319 = vpack.c.b16 %v1407, %v1405
  %v2320 = vpack.c.b16 %v1408, %v1406
  %v2321 = vpack.c.b16 %v1411, %v1409
  %v2322 = vpack.c.b16 %v1412, %v1410
  %v2323 = vpack.c.b16 %v1415, %v1413
  %v2324 = vpack.c.b16 %v1416, %v1414
  %v2325 = vpack.c.b16 %v1419, %v1417
  %v2326 = vpack.c.b16 %v1420, %v1418
  %v2327 = vpack.c.b16 %v1423, %v1421
  %v2328 = vpack.c.b16 %v1424, %v1422
  %v2329 = vpack.c.b16 %v1427, %v1425
  %v2330 = vpack.c.b16 %v1428, %v1426
  %v2331 = vpack.c.b16 %v1431, %v1429
  %v2332 = vpack.c.b16 %v1432, %v1430
  %v2333 = vpack.c.b16 %v1435, %v1433
  %v2334 = vpack.c.b16 %v1436, %v1434
  %v2335 = vpack.c.b16 %v1439, %v1437
  %v2336 = vpack.c.b16 %v1440, %v1438
  %v2337 = vpack.c.b16 %v1443, %v1441
  %v2338 = vpack.c.b16 %v1444, %v1442
  %v2339 = vpack.c.b16 %v1447, %v1445
  %v2340 = vpack.c.b16 %v1448, %v1446
  %v2341 = vpack.c.b16 %v1451, %v1449
  %v2342 = vpack.c.b16 %v1452, %v1450
  %v2343 = vpack.c.b16 %v1455, %v1453
  %v2344 = vpack.c.b16 %v1456, %v1454
  %v2345 = vpack.c.b16 %v1459, %v1457
  %v2346 = vpack.c.b16 %v1460, %v1458
  %v2347 = vpack.c.b16 %v1463, %v1461
  %v2348 = vpack.c.b16 %v1464, %v1462
  %v2349 = vpack.c.b16 %v1467, %v1465
  %v2350 = vpack.c.b16 %v1468, %v1466
  %v2351 = vpack.c.b16 %v1471, %v1469
  %v2352 = vpack.c.b16 %v1472, %v1470
  %v2353 = vpack.c.b16 %v1475, %v1473
  %v2354 = vpack.c.b16 %v1476, %v1474
  %v2355 = vpack.c.b16 %v1479, %v1477
  %v2356 = vpack.c.b16 %v1480, %v1478
  %v2357 = vpack.c.b16 %v1483, %v1481
  %v2358 = vpack.c.b16 %v1484, %v1482
  %v2359 = vpack.c.b16 %v1487, %v1485
  %v2360 = vpack.c.b16 %v1488, %v1486
  %v2361 = vpack.c.b16 %v1491, %v1489
  %v2362 = vpack.c.b16 %v1492, %v1490
  %v2363 = vpack.c.b16 %v1495, %v1493
  %v2364 = vpack.c.b16 %v1496, %v1494
  %v2365 = vpack.c.b16 %v1499, %v1497
  %v2366 = vpack.c.b16 %v1500, %v1498
  %v2367 = vpack.c.b16 %v1503, %v1501
  %v2368 = vpack.c.b16 %v1504, %v1502
  %v2369 = vpack.c.b16 %v1507, %v1505
  %v2370 = vpack.c.b16 %v1508, %v1506
  %v2371 = vpack.c.b16 %v1511, %v1509
  %v2372 = vpack.c.b16 %v1512, %v1510
  %v2373 = vpack.c.b16 %v1515, %v1513
  %v2374 = vpack.c.b16 %v1516, %v1514
  %v2375 = vpack.c.b16 %v1519, %v1517
  %v2376 = vpack.c.b16 %v1520, %v1518
  %v2377 = vpack.c.b16 %v1523, %v1521
  %v2378 = vpack.c.b16 %v1524, %v1522
  %v2379 = vpack.c.b16 %v1527, %v1525
  %v2380 = vpack.c.b16 %v1528, %v1526
  %v2381 = vpack.c.b16 %v1531, %v1529
  %v2382 = vpack.c.b16 %v1532, %v1530
  %v2383 = vpack.c.b16 %v1535, %v1533
  %v2384 = vpack.c.b16 %v1536, %v1534
  %v2385 = vpack.c.b16 %v1539, %v1537
  %v2386 = vpack.c.b16 %v1540, %v1538
  %v2387 = vpack.c.b16 %v1543, %v1541
  %v2388 = vpack.c.b16 %v1544, %v1542
  %v2389 = vpack.c.b16 %v1547, %v1545
  %v2390 = vpack.c.b16 %v1548, %v1546
  %v2391 = vpack.c.b16 %v1551, %v1549
  %v2392 = vpack.c.b16 %v1552, %v1550
  %v2393 = vpack.c.b16 %v1555, %v1553
  %v2394 = vpack.c.b16 %v1556, %v1554
  %v2395 = vpack.c.b16 %v1559, %v1557
  %v2396 = vpack.c.b16 %v1560, %v1558
  %v2397 = vpack.c.b16 %v1563, %v1561
  %v2398 = vpack.c.b16 %v1564, %v1562
  %v2399 = vpack.c.b16 %v1567, %v1565
  %v2400 = vpack.c.b16 %v1568, %v1566
  %v2401 = vpack.c.b16 %v1571, %v1569
  %v2402 = vpack.c.b16 %v1572, %v1570
  %v2403 = vpack.c.b16 %v1575, %v1573
  %v2404 = vpack.c.b16 %v1576, %v1574
  %v2405 = vpack.c.b16 %v1579, %v1577
  %v2406 = vpack.c.b16 %v1580, %v1578
  %v2407 = vpack.c.b16 %v1583, %v1581
  %v2408 = vpack.c.b16 %v1584, %v1582
  %v2409 = vpack.c.b16 %v1587, %v1585
  %v2410 = vpack.c.b16 %v1588, %v1586
  %v2411 = vpack.c.b16 %v1591, %v1589
  %v2412 = vpack.c.b16 %v1592, %v1590
  %v2413 = vpack.c.b16 %v1595, %v1593
  %v2414 = vpack.c.b16 %v1596, %v1594
  %v2415 = vpack.c.b16 %v1599, %v1597
  %v2416 = vpack.c.b16 %v1600, %v1598
  %v2417 = vpack.c.b16 %v1603, %v1601
  %v2418 = vpack.c.b16 %v1604, %v1602
  %v2419 = vpack.c.b16 %v1607, %v1605
  %v2420 = vpack.c.b16 %v1608, %v1606
  %v2421 = vpack.c.b16 %v1611, %v1609
  %v2422 = vpack.c.b16 %v1612, %v1610
  %v2423 = vpack.c.b16 %v1615, %v1613
  %v2424 = vpack.c.b16 %v1616, %v1614
  %v2425 = vpack.c.b16 %v1619, %v1617
  %v2426 = vpack.c.b16 %v1620, %v1618
  %v2427 = vpack.c.b16 %v1623, %v1621
  %v2428 = vpack.c.b16 %v1624, %v1622
  %v2429 = vpack.c.b16 %v1627, %v1625
  %v2430 = vpack.c.b16 %v1628, %v1626
  %v2431 = vpack.c.b16 %v1631, %v1629
  %v2432 = vpack.c.b16 %v1632, %v1630
  %v2433 = vpack.c.b16 %v1635, %v1633
  %v2434 = vpack.c.b16 %v1636, %v1634
  %v2435 = vpack.c.b16 %v1639, %v1637
  %v2436 = vpack.c.b16 %v1640, %v1638
  %v2437 = vpack.c.b16 %v1643, %v1641
  %v2438 = vpack.c.b16 %v1644, %v1642
  %v2439 = vpack.c.b16 %v1647, %v1645
  %v2440 = vpack.c.b16 %v1648, %v1646
  %v2441 = vpack.c.b16 %v1651, %v1649
  %v2442 = vpack.c.b16 %v1652, %v1650
  %v2443 = vpack.c.b16 %v1655, %v1653
  %v2444 = vpack.c.b16 %v1656, %v1654
  %v2445 = vpack.c.b16 %v1659, %v1657
  %v2446 = vpack.c.b16 %v1660, %v1658
  %v2447 = vpack.c.b16 %v1663, %v1661
  %v2448 = vpack.c.b16 %v1664, %v1662
  %v2449 = vpack.c.b16 %v1667, %v1665
  %v2450 = vpack.c.b16 %v1668, %v1666
  %v2451 = vpack.c.b16 %v1671, %v1669
  %v2452 = vpack.c.b16 %v1672, %v1670
  %v2453 = vpack.c.b16 %v1675, %v1673
  %v2454 = vpack.c.b16 %v1676, %v1674
  %v2455 = vpack.c.b16 %v1679, %v1677
  %v2456 = vpack.c.b16 %v1680, %v1678
  %v2457 = vpack.c.b16 %v1683, %v1681
  %v2458 = vpack.c.b16 %v1684, %v1682
  %v2459 = vpack.c.b16 %v1687, %v1685
  %v2460 = vpack.c.b16 %v1688, %v1686
  %v2461 = vpack.c.b16 %v1691, %v1689
  %v2462 = vpack.c.b16 %v1692, %v1690
  %v2463 = vpack.c.b16 %v1695, %v1693
  %v2464 = vpack.c.b16 %v1696, %v1694
  %v2465 = vpack.c.b16 %v1699, %v1697
  %v2466 = vpack.c.b16 %v1700, %v1698
  %v2467 = vpack.c.b16 %v1703, %v1701
  %v2468 = vpack.c.b16 %v1704, %v1702
  %v2469 = vpack.c.b16 %v1707, %v1705
  %v2470 = vpack.c.b16 %v1708, %v1706
  %v2471 = vpack.c.b16 %v1711, %v1709
  %v2472 = vpack.c.b16 %v1712, %v1710
  %v2473 = vpack.c.b16 %v1715, %v1713
  %v2474 = vpack.c.b16 %v1716, %v1714
  %v2475 = vpack.c.b16 %v1719, %v1717
  %v2476 = vpack.c.b16 %v1720, %v1718
  %v2477 = vpack.c.b16 %v1723, %v1721
  %v2478 = vpack.c.b16 %v1724, %v1722
  %v2479 = vpack.c.b16 %v1727, %v1725
  %v2480 = vpack.c.b16 %v1728, %v1726
  %v2481 = vpack.c.b16 %v1731, %v1729
  %v2482 = vpack.c.b16 %v1732, %v1730
  %v2483 = vpack.c.b16 %v1735, %v1733
  %v2484 = vpack.c.b16 %v1736, %v1734
  %v2485 = vpack.c.b16 %v1739, %v1737
  %v2486 = vpack.c.b16 %v1740, %v1738
  %v2487 = vpack.c.b16 %v1743, %v1741
  %v2488 = vpack.c.b16 %v1744, %v1742
  %v2489 = vpack.c.b16 %v1747, %v1745
  %v2490 = vpack.c.b16 %v1748, %v1746
  %v2491 = vpack.c.b16 %v1751, %v1749
  %v2492 = vpack.c.b16 %v1752, %v1750
  %v2493 = vpack.c.b16 %v1755, %v1753
  %v2494 = vpack.c.b16 %v1756, %v1754
  %v2495 = vpack.c.b16 %v1759, %v1757
  %v2496 = vpack.c.b16 %v1760, %v1758
  %v2497 = vpack.c.b16 %v1763, %v1761
  %v2498 = vpack.c.b16 %v1764, %v1762
  %v2499 = vpack.c.b16 %v1767, %v1765
  %v2500 = vpack.c.b16 %v1768, %v1766
  %v2501 = vpack.c.b16 %v1771, %v1769
  %v2502 = vpack.c.b16 %v1772, %v1770
  %v2503 = vpack.c.b16 %v1775, %v1773
  %v2504 = vpack.c.b16 %v1776, %v1774
  %v2505 = vpack.c.b16 %v1779, %v1777
  %v2506 = vpack.c.b16 %v1780, %v1778
  %v2507 = vpack.c.b16 %v1783, %v1781
  %v2508 = vpack.c.b16 %v1784, %v1782
  %v2509 = vpack.c.b16 %v1787, %v1785
  %v2510 = vpack.c.b16 %v1788, %v1786
  %v2511 = vpack.c.b16 %v1791, %v1789
  %v2512 = vpack.c.b16 %v1792, %v1790
  %v2513 = vpack.c.b16 %v1795, %v1793
  %v2514 = vpack.c.b16 %v1796, %v1794
  %v2515 = vpack.c.b16 %v1799, %v1797
  %v2516 = vpack.c.b16 %v1800, %v1798
  %v2517 = vpack.c.b16 %v1803, %v1801
  %v2518 = vpack.c.b16 %v1804, %v1802
  %v2519 = vpack.c.b16 %v1807, %v1805
  %v2520 = vpack.c.b16 %v1808, %v1806
  %v2521 = vpack.c.b16 %v1811, %v1809
  %v2522 = vpack.c.b16 %v1812, %v1810
  %v2523 = vpack.c.b16 %v1815, %v1813
  %v2524 = vpack.c.b16 %v1816, %v1814
  %v2525 = vpack.c.b16 %v1819, %v1817
  %v2526 = vpack.c.b16 %v1820, %v1818
  %v2527 = vpack.c.b16 %v1823, %v1821
  %v2528 = vpack.c.b16 %v1824, %v1822
  %v2529 = vpack.c.b16 %v1827, %v1825
  %v2530 = vpack.c.b16 %v1828, %v1826
  %v2531 = vpack.c.b16 %v1831, %v1829
  %v2532 = vpack.c.b16 %v1832, %v1830
  %v2533 = vpack.c.b16 %v1835, %v1833
  %v2534 = vpack.c.b16 %v1836, %v1834
  %v2535 = vpack.c.b16 %v1839, %v1837
  %v2536 = vpack.c.b16 %v1840, %v1838
  %v2537 = vpack.c.b16 %v1843, %v1841
  %v2538 = vpack.c.b16 %v1844, %v1842
  %v2539 = vpack.c.b16 %v1847, %v1845
  %v2540 = vpack.c.b16 %v1848, %v1846
  %v2541 = vpack.c.b16 %v1851, %v1849
  %v2542 = vpack.c.b16 %v1852, %v1850
  %v2543 = vpack.c.b16 %v1855, %v1853
  %v2544 = vpack.c.b16 %v1856, %v1854
  %v2545 = vpack.c.b16 %v1859, %v1857
  %v2546 = vpack.c.b16 %v1860, %v1858
  %v2547 = vpack.c.b16 %v1863, %v1861
  %v2548 = vpack.c.b16 %v1864, %v1862
  %v2549 = vpack.c.b16 %v1867, %v1865
  %v2550 = vpack.c.b16 %v1868, %v1866
  %v2551 = vpack.c.b16 %v1871, %v1869
  %v2552 = vpack.c.b16 %v1872, %v1870
  %v2553 = vpack.c.b16 %v1875, %v1873
  %v2554 = vpack.c.b16 %v1876, %v1874
  %v2555 = vpack.c.b16 %v1879, %v1877
  %v2556 = vpack.c.b16 %v1880, %v1878
  %v2557 = vpack.c.b16 %v1883, %v1881
  %v2558 = vpack.c.b16 %v1884, %v1882
  %v2559 = vpack.c.b16 %v1887, %v1885
  %v2560 = vpack.c.b16 %v1888, %v1886
  %v2561 = vpack.c.b16 %v1891, %v1889
  %v2562 = vpack.c.b16 %v1892, %v1890
  %v2563 = vpack.c.b16 %v1895, %v1893
  %v2564 = vpack.c.b16 %v1896, %v1894
  %v2565 = vpack.c.b16 %v1899, %v1897
  %v2566 = vpack.c.b16 %v1900, %v1898
  %v2567 = vpack.c.b16 %v1903, %v1901
  %v2568 = vpack.c.b16 %v1904, %v1902
  %v2569 = vpack.c.b16 %v1907, %v1905
  %v2570 = vpack.c.b16 %v1908, %v1906
  %v2571 = vpack.c.b16 %v1911, %v1909
  %v2572 = vpack.c.b16 %v1912, %v1910
  %v2573 = vpack.c.b16 %v1915, %v1913
  %v2574 = vpack.c.b16 %v1916, %v1914
  %v2575 = vpack.c.b16 %v1919, %v1917
  %v2576 = vpack.c.b16 %v1920, %v1918
  %v2577 = vpack.c.b16 %v1923, %v1921
  %v2578 = vpack.c.b16 %v1924, %v1922
  %v2579 = vpack.c.b16 %v1927, %v1925
  %v2580 = vpack.c.b16 %v1928, %v1926
  %v2581 = vpack.c.b16 %v1931, %v1929
  %v2582 = vpack.c.b16 %v1932, %v1930
  %v2583 = vpack.c.b16 %v1935, %v1933
  %v2584 = vpack.c.b16 %v1936, %v1934
  %v2585 = vpack.c.b16 %v1939, %v1937
  %v2586 = vpack.c.b16 %v1940, %v1938
  %v2587 = vpack.c.b16 %v1943, %v1941
  %v2588 = vpack.c.b16 %v1944, %v1942
  %v2589 = vpack.c.b16 %v1947, %v1945
  %v2590 = vpack.c.b16 %v1948, %v1946
  %v2591 = vpack.c.b16 %v1951, %v1949
  %v2592 = vpack.c.b16 %v1952, %v1950
  %v2593 = vpack.c.b16 %v1955, %v1953
  %v2594 = vpack.c.b16 %v1956, %v1954
  %v2595 = vpack.c.b16 %v1959, %v1957
  %v2596 = vpack.c.b16 %v1960, %v1958
  %v2597 = vpack.c.b16 %v1963, %v1961
  %v2598 = vpack.c.b16 %v1964, %v1962
  %v2599 = vpack.c.b16 %v1967, %v1965
  %v2600 = vpack.c.b16 %v1968, %v1966
  %v2601 = vpack.c.b16 %v1971, %v1969
  %v2602 = vpack.c.b16 %v1972, %v1970
  %v2603 = vpack.c.b16 %v1975, %v1973
  %v2604 = vpack.c.b16 %v1976, %v1974
  %v2605 = vpack.c.b16 %v1979, %v1977
  %v2606 = vpack.c.b16 %v1980, %v1978
  %v2607 = vpack.c.b16 %v1983, %v1981
  %v2608 = vpack.c.b16 %v1984, %v1982
  %v2609 = vpack.c.b16 %v1987, %v1985
  %v2610 = vpack.c.b16 %v1988, %v1986
  %v2611 = vpack.c.b16 %v1991, %v1989
  %v2612 = vpack.c.b16 %v1992, %v1990
  %v2613 = vpack.c.b16 %v1995, %v1993
  %v2614 = vpack.c.b16 %v1996, %v1994
  %v2615 = vpack.c.b16 %v1999, %v1997
  %v2616 = vpack.c.b16 %v2000, %v1998
  %v2617 = vpack.c.b16 %v2003, %v2001
  %v2618 = vpack.c.b16 %v2004, %v2002
  %v2619 = vpack.c.b16 %v2007, %v2005
  %v2620 = vpack.c.b16 %v2008, %v2006
  %v2621 = vpack.c.b16 %v2011, %v2009
  %v2622 = vpack.c.b16 %v2012, %v2010
  %v2623 = vpack.c.b16 %v2015, %v2013
  %v2624 = vpack.c.b16 %v2016, %v2014
  %v2625 = vpack.c.b16 %v2019, %v2017
  %v2626 = vpack.c.b16 %v2020, %v2018
  %v2627 = vpack.c.b16 %v2023, %v2021
  %v2628 = vpack.c.b16 %v2024, %v2022
  %v2629 = vpack.c.b16 %v2027, %v2025
  %v2630 = vpack.c.b16 %v2028, %v2026
  %v2631 = vpack.c.b16 %v2031, %v2029
  %v2632 = vpack.c.b16 %v2032, %v2030
  %v2633 = vpack.c.b16 %v2035, %v2033
  %v2634 = vpack.c.b16 %v2036, %v2034
  %v2635 = vpack.c.b16 %v2039, %v2037
  %v2636 = vpack.c.b16 %v2040, %v2038
  %v2637 = vpack.c.b16 %v2043, %v2041
  %v2638 = vpack.c.b16 %v2044, %v2042
  %v2639 = vpack.c.b16 %v2047, %v2045
  %v2640 = vpack.c.b16 %v2048, %v2046
  %v2641 = vpack.c.b16 %v2051, %v2049
  %v2642 = vpack.c.b16 %v2052, %v2050
  %v2643 = vpack.c.b16 %v2055, %v2053
  %v2644 = vpack.c.b16 %v2056, %v2054
  %v2645 = vpack.c.b16 %v2059, %v2057
  %v2646 = vpack.c.b16 %v2060, %v2058
  %v2647 = vpack.c.b16 %v2063, %v2061
  %v2648 = vpack.c.b16 %v2064, %v2062
  %v2649 = vpack.c.b16 %v2067, %v2065
  %v2650 = vpack.c.b16 %v2068, %v2066
  %v2651 = vpack.c.b16 %v2071, %v2069
  %v2652 = vpack.c.b16 %v2072, %v2070
  %v2653 = vpack.c.b16 %v2075, %v2073
  %v2654 = vpack.c.b16 %v2076, %v2074
  %v2655 = vpack.c.b16 %v2079, %v2077
  %v2656 = vpack.c.b16 %v2080, %v2078
  %v2657 = vpack.c.b16 %v2083, %v2081
  %v2658 = vpack.c.b16 %v2084, %v2082
  %v2659 = vpack.c.b16 %v2087, %v2085
  %v2660 = vpack.c.b16 %v2088, %v2086
  %v2661 = vpack.c.b16 %v2091, %v2089
  %v2662 = vpack.c.b16 %v2092, %v2090
  %v2663 = vpack.c.b16 %v2095, %v2093
  %v2664 = vpack.c.b16 %v2096, %v2094
  %v2665 = vpack.c.b16 %v2099, %v2097
  %v2666 = vpack.c.b16 %v2100, %v2098
  %v2667 = vpack.c.b16 %v2103, %v2101
  %v2668 = vpack.c.b16 %v2104, %v2102
  %v2669 = vpack.c.b16 %v2107, %v2105
  %v2670 = vpack.c.b16 %v2108, %v2106
  %v2671 = vpack.c.b16 %v2111, %v2109
  %v2672 = vpack.c.b16 %v2112, %v2110
  %v2673 = vpack.c.b16 %v2115, %v2113
  %v2674 = vpack.c.b16 %v2116, %v2114
  %v2675 = vpack.c.b16 %v2119, %v2117
  %v2676 = vpack.c.b16 %v2120, %v2118
  %v2677 = vpack.c.b16 %v2123, %v2121
  %v2678 = vpack.c.b16 %v2124, %v2122
  %v2679 = vpack.c.b16 %v2127, %v2125
  %v2680 = vpack.c.b16 %v2128, %v2126
  %v2681 = vpack.c.b16 %v2131, %v2129
  %v2682 = vpack.c.b16 %v2132, %v2130
  %v2683 = vpack.c.b16 %v2135, %v2133
  %v2684 = vpack.c.b16 %v2136, %v2134
  %v2685 = vpack.c.b16 %v2139, %v2137
  %v2686 = vpack.c.b16 %v2140, %v2138
  %v2687 = vpack.c.b16 %v2143, %v2141
  %v2688 = vpack.c.b16 %v2144, %v2142
  %v2689 = vpack.c.b16 %v2147, %v2145
  %v2690 = vpack.c.b16 %v2148, %v2146
  %v2691 = vpack.c.b16 %v2151, %v2149
  %v2692 = vpack.c.b16 %v2152, %v2150
  %v2693 = vpack.c.b16 %v2155, %v2153
  %v2694 = vpack.c.b16 %v2156, %v2154
  %v2695 = vpack.c.b16 %v2159, %v2157
  %v2696 = vpack.c.b16 %v2160, %v2158
  %v2697 = vpack.c.b16 %v2163, %v2161
  %v2698 = vpack.c.b16 %v2164, %v2162
  %v2699 = vpack.c.b16 %v2167, %v2165
  %v2700 = vpack.c.b16 %v2168, %v2166
  %v2701 = vpack.c.b16 %v2171, %v2169
  %v2702 = vpack.c.b16 %v2172, %v2170
  %v2703 = vpack.c.b16 %v2175, %v2173
  %v2704 = vpack.c.b16 %v2176, %v2174
  %v2705 = vpack.c.b16 %v2179, %v2177
  %v2706 = vpack.c.b16 %v2180, %v2178
  %v2707 = vpack.c.b16 %v2183, %v2181
  %v2708 = vpack.c.b16 %v2184, %v2182
  %v2709 = vpack.c.b16 %v2187, %v2185
  %v2710 = vpack.c.b16 %v2188, %v2186
  %v2711 = vpack.c.b16 %v2191, %v2189
  %v2712 = vpack.c.b16 %v2192, %v2190
  %v2713 = vpack.c.b16 %v2195, %v2193
  %v2714 = vpack.c.b16 %v2196, %v2194
  %v2715 = vpack.c.b16 %v2199, %v2197
  %v2716 = vpack.c.b16 %v2200, %v2198
  %v2717 = vpack.c.b16 %v2203, %v2201
  %v2718 = vpack.c.b16 %v2204, %v2202
  %v2719 = vpack.c.b16 %v2207, %v2205
  %v2720 = vpack.c.b16 %v2208, %v2206
  %3233 = vmatprep.subr.bf16.mxu0 %v2210
  %3234 = vmatpush1.bf16.msra.mxu0 %v2209
  %3235 = vmatprep.subr.bf16.mxu0 %v2212
  %3236 = vmatpush1.bf16.msra.mxu0 %v2211
  %3237 = vmatprep.subr.bf16.mxu0 %v2214
  %3238 = vmatpush1.bf16.msra.mxu0 %v2213
  %3239 = vmatprep.subr.bf16.mxu0 %v2216
  %3240 = vmatpush1.bf16.msra.mxu0 %v2215
  %3241 = vmatprep.subr.bf16.mxu0 %v2218
  %3242 = vmatpush1.bf16.msra.mxu0 %v2217
  %3243 = vmatprep.subr.bf16.mxu0 %v2220
  %3244 = vmatpush1.bf16.msra.mxu0 %v2219
  %3245 = vmatprep.subr.bf16.mxu0 %v2222
  %3246 = vmatpush1.bf16.msra.mxu0 %v2221
  %3247 = vmatprep.subr.bf16.mxu0 %v2224
  %3248 = vmatpush1.bf16.msra.mxu0 %v2223
  %3249 = vmatprep.subr.bf16.mxu0 %v2226
  %3250 = vmatpush1.bf16.msra.mxu0 %v2225
  %3251 = vmatprep.subr.bf16.mxu0 %v2228
  %3252 = vmatpush1.bf16.msra.mxu0 %v2227
  %3253 = vmatprep.subr.bf16.mxu0 %v2230
  %3254 = vmatpush1.bf16.msra.mxu0 %v2229
  %3255 = vmatprep.subr.bf16.mxu0 %v2232
  %3256 = vmatpush1.bf16.msra.mxu0 %v2231
  %3257 = vmatprep.subr.bf16.mxu0 %v2234
  %3258 = vmatpush1.bf16.msra.mxu0 %v2233
  %3259 = vmatprep.subr.bf16.mxu0 %v2236
  %3260 = vmatpush1.bf16.msra.mxu0 %v2235
  %3261 = vmatprep.subr.bf16.mxu0 %v2238
  %3262 = vmatpush1.bf16.msra.mxu0 %v2237
  %3263 = vmatprep.subr.bf16.mxu0 %v2240
  %3264 = vmatpush1.bf16.msra.mxu0 %v2239
  %3265 = vmatprep.mubr.bf16.mxu0 %v610
  %3266 = vmatmul.mubr.bf16.gmra.mrb[0].mxu0 %v609
  %v3267 = vpop.f32.mrb[0].mxu0
  %v3268 = vadd.f32 %v554, %v3267
  %v3269 = vpop.f32.mrb[0].mxu0
  %v3270 = vadd.f32 %v558, %v3269
  %v3271 = vpop.f32.mrb[0].mxu0
  %v3272 = vpop.f32.mrb[0].mxu0
  %3273 = vdwg.mxu0
  %3274 = vmatprep.subr.bf16.mxu0 %v2242
  %3275 = vmatpush1.bf16.msra.mxu0 %v2241
  %3276 = vmatprep.subr.bf16.mxu0 %v2244
  %3277 = vmatpush1.bf16.msra.mxu0 %v2243
  %3278 = vmatprep.subr.bf16.mxu0 %v2246
  %3279 = vmatpush1.bf16.msra.mxu0 %v2245
  %3280 = vmatprep.subr.bf16.mxu0 %v2248
  %3281 = vmatpush1.bf16.msra.mxu0 %v2247
  %3282 = vmatprep.subr.bf16.mxu0 %v2250
  %3283 = vmatpush1.bf16.msra.mxu0 %v2249
  %3284 = vmatprep.subr.bf16.mxu0 %v2252
  %3285 = vmatpush1.bf16.msra.mxu0 %v2251
  %3286 = vmatprep.subr.bf16.mxu0 %v2254
  %3287 = vmatpush1.bf16.msra.mxu0 %v2253
  %3288 = vmatprep.subr.bf16.mxu0 %v2256
  %3289 = vmatpush1.bf16.msra.mxu0 %v2255
  %3290 = vmatprep.subr.bf16.mxu0 %v2258
  %3291 = vmatpush1.bf16.msra.mxu0 %v2257
  %3292 = vmatprep.subr.bf16.mxu0 %v2260
  %3293 = vmatpush1.bf16.msra.mxu0 %v2259
  %3294 = vmatprep.subr.bf16.mxu0 %v2262
  %3295 = vmatpush1.bf16.msra.mxu0 %v2261
  %3296 = vmatprep.subr.bf16.mxu0 %v2264
  %3297 = vmatpush1.bf16.msra.mxu0 %v2263
  %3298 = vmatprep.subr.bf16.mxu0 %v2266
  %3299 = vmatpush1.bf16.msra.mxu0 %v2265
  %3300 = vmatprep.subr.bf16.mxu0 %v2268
  %3301 = vmatpush1.bf16.msra.mxu0 %v2267
  %3302 = vmatprep.subr.bf16.mxu0 %v2270
  %3303 = vmatpush1.bf16.msra.mxu0 %v2269
  %3304 = vmatprep.subr.bf16.mxu0 %v2272
  %3305 = vmatpush1.bf16.msra.mxu0 %v2271
  %3306 = vmatprep.mubr.bf16.mxu0 %v612
  %3307 = vmatmul.mubr.bf16.gmra.mrb[0].mxu0 %v611
  %v3308 = vpop.f32.mrb[0].mxu0
  %v3309 = vadd.f32 %v3268, %v3308
  %v3310 = vpop.f32.mrb[0].mxu0
  %v3311 = vadd.f32 %v3270, %v3310
  %v3312 = vpop.f32.mrb[0].mxu0
  %v3313 = vpop.f32.mrb[0].mxu0
  %3314 = vdwg.mxu0
  %3315 = vmatprep.subr.bf16.mxu0 %v2274
  %3316 = vmatpush1.bf16.msra.mxu0 %v2273
  %3317 = vmatprep.subr.bf16.mxu0 %v2276
  %3318 = vmatpush1.bf16.msra.mxu0 %v2275
  %3319 = vmatprep.subr.bf16.mxu0 %v2278
  %3320 = vmatpush1.bf16.msra.mxu0 %v2277
  %3321 = vmatprep.subr.bf16.mxu0 %v2280
  %3322 = vmatpush1.bf16.msra.mxu0 %v2279
  %3323 = vmatprep.subr.bf16.mxu0 %v2282
  %3324 = vmatpush1.bf16.msra.mxu0 %v2281
  %3325 = vmatprep.subr.bf16.mxu0 %v2284
  %3326 = vmatpush1.bf16.msra.mxu0 %v2283
  %3327 = vmatprep.subr.bf16.mxu0 %v2286
  %3328 = vmatpush1.bf16.msra.mxu0 %v2285
  %3329 = vmatprep.subr.bf16.mxu0 %v2288
  %3330 = vmatpush1.bf16.msra.mxu0 %v2287
  %3331 = vmatprep.subr.bf16.mxu0 %v2290
  %3332 = vmatpush1.bf16.msra.mxu0 %v2289
  %3333 = vmatprep.subr.bf16.mxu0 %v2292
  %3334 = vmatpush1.bf16.msra.mxu0 %v2291
  %3335 = vmatprep.subr.bf16.mxu0 %v2294
  %3336 = vmatpush1.bf16.msra.mxu0 %v2293
  %3337 = vmatprep.subr.bf16.mxu0 %v2296
  %3338 = vmatpush1.bf16.msra.mxu0 %v2295
  %3339 = vmatprep.subr.bf16.mxu0 %v2298
  %3340 = vmatpush1.bf16.msra.mxu0 %v2297
  %3341 = vmatprep.subr.bf16.mxu0 %v2300
  %3342 = vmatpush1.bf16.msra.mxu0 %v2299
  %3343 = vmatprep.subr.bf16.mxu0 %v2302
  %3344 = vmatpush1.bf16.msra.mxu0 %v2301
  %3345 = vmatprep.subr.bf16.mxu0 %v2304
  %3346 = vmatpush1.bf16.msra.mxu0 %v2303
  %3347 = vmatprep.mubr.bf16.mxu0 %v614
  %3348 = vmatmul.mubr.bf16.gmra.mrb[0].mxu0 %v613
  %v3349 = vpop.f32.mrb[0].mxu0
  %v3350 = vadd.f32 %v3309, %v3349
  %v3351 = vpop.f32.mrb[0].mxu0
  %v3352 = vadd.f32 %v3311, %v3351
  %v3353 = vpop.f32.mrb[0].mxu0
  %v3354 = vpop.f32.mrb[0].mxu0
  %3355 = vdwg.mxu0
  %3356 = vmatprep.subr.bf16.mxu0 %v2306
  %3357 = vmatpush1.bf16.msra.mxu0 %v2305
  %3358 = vmatprep.subr.bf16.mxu0 %v2308
  %3359 = vmatpush1.bf16.msra.mxu0 %v2307
  %3360 = vmatprep.subr.bf16.mxu0 %v2310
  %3361 = vmatpush1.bf16.msra.mxu0 %v2309
  %3362 = vmatprep.subr.bf16.mxu0 %v2312
  %3363 = vmatpush1.bf16.msra.mxu0 %v2311
  %3364 = vmatprep.subr.bf16.mxu0 %v2314
  %3365 = vmatpush1.bf16.msra.mxu0 %v2313
  %3366 = vmatprep.subr.bf16.mxu0 %v2316
  %3367 = vmatpush1.bf16.msra.mxu0 %v2315
  %3368 = vmatprep.subr.bf16.mxu0 %v2318
  %3369 = vmatpush1.bf16.msra.mxu0 %v2317
  %3370 = vmatprep.subr.bf16.mxu0 %v2320
  %3371 = vmatpush1.bf16.msra.mxu0 %v2319
  %3372 = vmatprep.subr.bf16.mxu0 %v2322
  %3373 = vmatpush1.bf16.msra.mxu0 %v2321
  %3374 = vmatprep.subr.bf16.mxu0 %v2324
  %3375 = vmatpush1.bf16.msra.mxu0 %v2323
  %3376 = vmatprep.subr.bf16.mxu0 %v2326
  %3377 = vmatpush1.bf16.msra.mxu0 %v2325
  %3378 = vmatprep.subr.bf16.mxu0 %v2328
  %3379 = vmatpush1.bf16.msra.mxu0 %v2327
  %3380 = vmatprep.subr.bf16.mxu0 %v2330
  %3381 = vmatpush1.bf16.msra.mxu0 %v2329
  %3382 = vmatprep.subr.bf16.mxu0 %v2332
  %3383 = vmatpush1.bf16.msra.mxu0 %v2331
  %3384 = vmatprep.subr.bf16.mxu0 %v2334
  %3385 = vmatpush1.bf16.msra.mxu0 %v2333
  %3386 = vmatprep.subr.bf16.mxu0 %v2336
  %3387 = vmatpush1.bf16.msra.mxu0 %v2335
  %3388 = vmatprep.mubr.bf16.mxu0 %v616
  %3389 = vmatmul.mubr.bf16.gmra.mrb[0].mxu0 %v615
  %v3390 = vpop.f32.mrb[0].mxu0
  %v3391 = vadd.f32 %v3350, %v3390
  %v3392 = vpop.f32.mrb[0].mxu0
  %v3393 = vadd.f32 %v3352, %v3392
  %v3394 = vpop.f32.mrb[0].mxu0
  %v3395 = vpop.f32.mrb[0].mxu0
  %3396 = vdwg.mxu0
  %3397 = vmatprep.subr.bf16.mxu0 %v2338
  %3398 = vmatpush1.bf16.msra.mxu0 %v2337
  %3399 = vmatprep.subr.bf16.mxu0 %v2340
  %3400 = vmatpush1.bf16.msra.mxu0 %v2339
  %3401 = vmatprep.subr.bf16.mxu0 %v2342
  %3402 = vmatpush1.bf16.msra.mxu0 %v2341
  %3403 = vmatprep.subr.bf16.mxu0 %v2344
  %3404 = vmatpush1.bf16.msra.mxu0 %v2343
  %3405 = vmatprep.subr.bf16.mxu0 %v2346
  %3406 = vmatpush1.bf16.msra.mxu0 %v2345
  %3407 = vmatprep.subr.bf16.mxu0 %v2348
  %3408 = vmatpush1.bf16.msra.mxu0 %v2347
  %3409 = vmatprep.subr.bf16.mxu0 %v2350
  %3410 = vmatpush1.bf16.msra.mxu0 %v2349
  %3411 = vmatprep.subr.bf16.mxu0 %v2352
  %3412 = vmatpush1.bf16.msra.mxu0 %v2351
  %3413 = vmatprep.subr.bf16.mxu0 %v2354
  %3414 = vmatpush1.bf16.msra.mxu0 %v2353
  %3415 = vmatprep.subr.bf16.mxu0 %v2356
  %3416 = vmatpush1.bf16.msra.mxu0 %v2355
  %3417 = vmatprep.subr.bf16.mxu0 %v2358
  %3418 = vmatpush1.bf16.msra.mxu0 %v2357
  %3419 = vmatprep.subr.bf16.mxu0 %v2360
  %3420 = vmatpush1.bf16.msra.mxu0 %v2359
  %3421 = vmatprep.subr.bf16.mxu0 %v2362
  %3422 = vmatpush1.bf16.msra.mxu0 %v2361
  %3423 = vmatprep.subr.bf16.mxu0 %v2364
  %3424 = vmatpush1.bf16.msra.mxu0 %v2363
  %3425 = vmatprep.subr.bf16.mxu0 %v2366
  %3426 = vmatpush1.bf16.msra.mxu0 %v2365
  %3427 = vmatprep.subr.bf16.mxu0 %v2368
  %3428 = vmatpush1.bf16.msra.mxu0 %v2367
  %3429 = vmatprep.mubr.bf16.mxu0 %v618
  %3430 = vmatmul.mubr.bf16.gmra.mrb[0].mxu0 %v617
  %v3431 = vpop.f32.mrb[0].mxu0
  %v3432 = vadd.f32 %v3391, %v3431
  %v3433 = vpop.f32.mrb[0].mxu0
  %v3434 = vadd.f32 %v3393, %v3433
  %v3435 = vpop.f32.mrb[0].mxu0
  %v3436 = vpop.f32.mrb[0].mxu0
  %3437 = vdwg.mxu0
  %3438 = vmatprep.subr.bf16.mxu0 %v2370
  %3439 = vmatpush1.bf16.msra.mxu0 %v2369
  %3440 = vmatprep.subr.bf16.mxu0 %v2372
  %3441 = vmatpush1.bf16.msra.mxu0 %v2371
  %3442 = vmatprep.subr.bf16.mxu0 %v2374
  %3443 = vmatpush1.bf16.msra.mxu0 %v2373
  %3444 = vmatprep.subr.bf16.mxu0 %v2376
  %3445 = vmatpush1.bf16.msra.mxu0 %v2375
  %3446 = vmatprep.subr.bf16.mxu0 %v2378
  %3447 = vmatpush1.bf16.msra.mxu0 %v2377
  %3448 = vmatprep.subr.bf16.mxu0 %v2380
  %3449 = vmatpush1.bf16.msra.mxu0 %v2379
  %3450 = vmatprep.subr.bf16.mxu0 %v2382
  %3451 = vmatpush1.bf16.msra.mxu0 %v2381
  %3452 = vmatprep.subr.bf16.mxu0 %v2384
  %3453 = vmatpush1.bf16.msra.mxu0 %v2383
  %3454 = vmatprep.subr.bf16.mxu0 %v2386
  %3455 = vmatpush1.bf16.msra.mxu0 %v2385
  %3456 = vmatprep.subr.bf16.mxu0 %v2388
  %3457 = vmatpush1.bf16.msra.mxu0 %v2387
  %3458 = vmatprep.subr.bf16.mxu0 %v2390
  %3459 = vmatpush1.bf16.msra.mxu0 %v2389
  %3460 = vmatprep.subr.bf16.mxu0 %v2392
  %3461 = vmatpush1.bf16.msra.mxu0 %v2391
  %3462 = vmatprep.subr.bf16.mxu0 %v2394
  %3463 = vmatpush1.bf16.msra.mxu0 %v2393
  %3464 = vmatprep.subr.bf16.mxu0 %v2396
  %3465 = vmatpush1.bf16.msra.mxu0 %v2395
  %3466 = vmatprep.subr.bf16.mxu0 %v2398
  %3467 = vmatpush1.bf16.msra.mxu0 %v2397
  %3468 = vmatprep.subr.bf16.mxu0 %v2400
  %3469 = vmatpush1.bf16.msra.mxu0 %v2399
  %3470 = vmatprep.mubr.bf16.mxu0 %v620
  %3471 = vmatmul.mubr.bf16.gmra.mrb[0].mxu0 %v619
  %v3472 = vpop.f32.mrb[0].mxu0
  %v3473 = vadd.f32 %v3432, %v3472
  %v3474 = vpop.f32.mrb[0].mxu0
  %v3475 = vadd.f32 %v3434, %v3474
  %v3476 = vpop.f32.mrb[0].mxu0
  %v3477 = vpop.f32.mrb[0].mxu0
  %3478 = vdwg.mxu0
  %3479 = vmatprep.subr.bf16.mxu0 %v2402
  %3480 = vmatpush1.bf16.msra.mxu0 %v2401
  %3481 = vmatprep.subr.bf16.mxu0 %v2404
  %3482 = vmatpush1.bf16.msra.mxu0 %v2403
  %3483 = vmatprep.subr.bf16.mxu0 %v2406
  %3484 = vmatpush1.bf16.msra.mxu0 %v2405
  %3485 = vmatprep.subr.bf16.mxu0 %v2408
  %3486 = vmatpush1.bf16.msra.mxu0 %v2407
  %3487 = vmatprep.subr.bf16.mxu0 %v2410
  %3488 = vmatpush1.bf16.msra.mxu0 %v2409
  %3489 = vmatprep.subr.bf16.mxu0 %v2412
  %3490 = vmatpush1.bf16.msra.mxu0 %v2411
  %3491 = vmatprep.subr.bf16.mxu0 %v2414
  %3492 = vmatpush1.bf16.msra.mxu0 %v2413
  %3493 = vmatprep.subr.bf16.mxu0 %v2416
  %3494 = vmatpush1.bf16.msra.mxu0 %v2415
  %3495 = vmatprep.subr.bf16.mxu0 %v2418
  %3496 = vmatpush1.bf16.msra.mxu0 %v2417
  %3497 = vmatprep.subr.bf16.mxu0 %v2420
  %3498 = vmatpush1.bf16.msra.mxu0 %v2419
  %3499 = vmatprep.subr.bf16.mxu0 %v2422
  %3500 = vmatpush1.bf16.msra.mxu0 %v2421
  %3501 = vmatprep.subr.bf16.mxu0 %v2424
  %3502 = vmatpush1.bf16.msra.mxu0 %v2423
  %3503 = vmatprep.subr.bf16.mxu0 %v2426
  %3504 = vmatpush1.bf16.msra.mxu0 %v2425
  %3505 = vmatprep.subr.bf16.mxu0 %v2428
  %3506 = vmatpush1.bf16.msra.mxu0 %v2427
  %3507 = vmatprep.subr.bf16.mxu0 %v2430
  %3508 = vmatpush1.bf16.msra.mxu0 %v2429
  %3509 = vmatprep.subr.bf16.mxu0 %v2432
  %3510 = vmatpush1.bf16.msra.mxu0 %v2431
  %3511 = vmatprep.mubr.bf16.mxu0 %v622
  %3512 = vmatmul.mubr.bf16.gmra.mrb[0].mxu0 %v621
  %v3513 = vpop.f32.mrb[0].mxu0
  %v3514 = vadd.f32 %v3473, %v3513
  %v3515 = vpop.f32.mrb[0].mxu0
  %v3516 = vadd.f32 %v3475, %v3515
  %v3517 = vpop.f32.mrb[0].mxu0
  %v3518 = vpop.f32.mrb[0].mxu0
  %3519 = vdwg.mxu0
  %3520 = vmatprep.subr.bf16.mxu0 %v2434
  %3521 = vmatpush1.bf16.msra.mxu0 %v2433
  %3522 = vmatprep.subr.bf16.mxu0 %v2436
  %3523 = vmatpush1.bf16.msra.mxu0 %v2435
  %3524 = vmatprep.subr.bf16.mxu0 %v2438
  %3525 = vmatpush1.bf16.msra.mxu0 %v2437
  %3526 = vmatprep.subr.bf16.mxu0 %v2440
  %3527 = vmatpush1.bf16.msra.mxu0 %v2439
  %3528 = vmatprep.subr.bf16.mxu0 %v2442
  %3529 = vmatpush1.bf16.msra.mxu0 %v2441
  %3530 = vmatprep.subr.bf16.mxu0 %v2444
  %3531 = vmatpush1.bf16.msra.mxu0 %v2443
  %3532 = vmatprep.subr.bf16.mxu0 %v2446
  %3533 = vmatpush1.bf16.msra.mxu0 %v2445
  %3534 = vmatprep.subr.bf16.mxu0 %v2448
  %3535 = vmatpush1.bf16.msra.mxu0 %v2447
  %3536 = vmatprep.subr.bf16.mxu0 %v2450
  %3537 = vmatpush1.bf16.msra.mxu0 %v2449
  %3538 = vmatprep.subr.bf16.mxu0 %v2452
  %3539 = vmatpush1.bf16.msra.mxu0 %v2451
  %3540 = vmatprep.subr.bf16.mxu0 %v2454
  %3541 = vmatpush1.bf16.msra.mxu0 %v2453
  %3542 = vmatprep.subr.bf16.mxu0 %v2456
  %3543 = vmatpush1.bf16.msra.mxu0 %v2455
  %3544 = vmatprep.subr.bf16.mxu0 %v2458
  %3545 = vmatpush1.bf16.msra.mxu0 %v2457
  %3546 = vmatprep.subr.bf16.mxu0 %v2460
  %3547 = vmatpush1.bf16.msra.mxu0 %v2459
  %3548 = vmatprep.subr.bf16.mxu0 %v2462
  %3549 = vmatpush1.bf16.msra.mxu0 %v2461
  %3550 = vmatprep.subr.bf16.mxu0 %v2464
  %3551 = vmatpush1.bf16.msra.mxu0 %v2463
  %3552 = vmatprep.mubr.bf16.mxu0 %v624
  %3553 = vmatmul.mubr.bf16.gmra.mrb[0].mxu0 %v623
  %v3554 = vpop.f32.mrb[0].mxu0
  %v3555 = vadd.f32 %v3514, %v3554
  %v3556 = vpop.f32.mrb[0].mxu0
  %v3557 = vadd.f32 %v3516, %v3556
  %v3558 = vpop.f32.mrb[0].mxu0
  %v3559 = vpop.f32.mrb[0].mxu0
  %3560 = vdwg.mxu0
  %3561 = vmatprep.subr.bf16.mxu0 %v2466
  %3562 = vmatpush1.bf16.msra.mxu0 %v2465
  %3563 = vmatprep.subr.bf16.mxu0 %v2468
  %3564 = vmatpush1.bf16.msra.mxu0 %v2467
  %3565 = vmatprep.subr.bf16.mxu0 %v2470
  %3566 = vmatpush1.bf16.msra.mxu0 %v2469
  %3567 = vmatprep.subr.bf16.mxu0 %v2472
  %3568 = vmatpush1.bf16.msra.mxu0 %v2471
  %3569 = vmatprep.subr.bf16.mxu0 %v2474
  %3570 = vmatpush1.bf16.msra.mxu0 %v2473
  %3571 = vmatprep.subr.bf16.mxu0 %v2476
  %3572 = vmatpush1.bf16.msra.mxu0 %v2475
  %3573 = vmatprep.subr.bf16.mxu0 %v2478
  %3574 = vmatpush1.bf16.msra.mxu0 %v2477
  %3575 = vmatprep.subr.bf16.mxu0 %v2480
  %3576 = vmatpush1.bf16.msra.mxu0 %v2479
  %3577 = vmatprep.subr.bf16.mxu0 %v2482
  %3578 = vmatpush1.bf16.msra.mxu0 %v2481
  %3579 = vmatprep.subr.bf16.mxu0 %v2484
  %3580 = vmatpush1.bf16.msra.mxu0 %v2483
  %3581 = vmatprep.subr.bf16.mxu0 %v2486
  %3582 = vmatpush1.bf16.msra.mxu0 %v2485
  %3583 = vmatprep.subr.bf16.mxu0 %v2488
  %3584 = vmatpush1.bf16.msra.mxu0 %v2487
  %3585 = vmatprep.subr.bf16.mxu0 %v2490
  %3586 = vmatpush1.bf16.msra.mxu0 %v2489
  %3587 = vmatprep.subr.bf16.mxu0 %v2492
  %3588 = vmatpush1.bf16.msra.mxu0 %v2491
  %3589 = vmatprep.subr.bf16.mxu0 %v2494
  %3590 = vmatpush1.bf16.msra.mxu0 %v2493
  %3591 = vmatprep.subr.bf16.mxu0 %v2496
  %3592 = vmatpush1.bf16.msra.mxu0 %v2495
  %3593 = vmatprep.mubr.bf16.mxu0 %v626
  %3594 = vmatmul.mubr.bf16.gmra.mrb[0].mxu0 %v625
  %v3595 = vpop.f32.mrb[0].mxu0
  %v3596 = vadd.f32 %v3555, %v3595
  %v3597 = vpop.f32.mrb[0].mxu0
  %v3598 = vadd.f32 %v3557, %v3597
  %v3599 = vpop.f32.mrb[0].mxu0
  %v3600 = vpop.f32.mrb[0].mxu0
  %3601 = vdwg.mxu0
  %3602 = vmatprep.subr.bf16.mxu0 %v2498
  %3603 = vmatpush1.bf16.msra.mxu0 %v2497
  %3604 = vmatprep.subr.bf16.mxu0 %v2500
  %3605 = vmatpush1.bf16.msra.mxu0 %v2499
  %3606 = vmatprep.subr.bf16.mxu0 %v2502
  %3607 = vmatpush1.bf16.msra.mxu0 %v2501
  %3608 = vmatprep.subr.bf16.mxu0 %v2504
  %3609 = vmatpush1.bf16.msra.mxu0 %v2503
  %3610 = vmatprep.subr.bf16.mxu0 %v2506
  %3611 = vmatpush1.bf16.msra.mxu0 %v2505
  %3612 = vmatprep.subr.bf16.mxu0 %v2508
  %3613 = vmatpush1.bf16.msra.mxu0 %v2507
  %3614 = vmatprep.subr.bf16.mxu0 %v2510
  %3615 = vmatpush1.bf16.msra.mxu0 %v2509
  %3616 = vmatprep.subr.bf16.mxu0 %v2512
  %3617 = vmatpush1.bf16.msra.mxu0 %v2511
  %3618 = vmatprep.subr.bf16.mxu0 %v2514
  %3619 = vmatpush1.bf16.msra.mxu0 %v2513
  %3620 = vmatprep.subr.bf16.mxu0 %v2516
  %3621 = vmatpush1.bf16.msra.mxu0 %v2515
  %3622 = vmatprep.subr.bf16.mxu0 %v2518
  %3623 = vmatpush1.bf16.msra.mxu0 %v2517
  %3624 = vmatprep.subr.bf16.mxu0 %v2520
  %3625 = vmatpush1.bf16.msra.mxu0 %v2519
  %3626 = vmatprep.subr.bf16.mxu0 %v2522
  %3627 = vmatpush1.bf16.msra.mxu0 %v2521
  %3628 = vmatprep.subr.bf16.mxu0 %v2524
  %3629 = vmatpush1.bf16.msra.mxu0 %v2523
  %3630 = vmatprep.subr.bf16.mxu0 %v2526
  %3631 = vmatpush1.bf16.msra.mxu0 %v2525
  %3632 = vmatprep.subr.bf16.mxu0 %v2528
  %3633 = vmatpush1.bf16.msra.mxu0 %v2527
  %3634 = vmatprep.mubr.bf16.mxu0 %v628
  %3635 = vmatmul.mubr.bf16.gmra.mrb[0].mxu0 %v627
  %v3636 = vpop.f32.mrb[0].mxu0
  %v3637 = vadd.f32 %v3596, %v3636
  %v3638 = vpop.f32.mrb[0].mxu0
  %v3639 = vadd.f32 %v3598, %v3638
  %v3640 = vpop.f32.mrb[0].mxu0
  %v3641 = vpop.f32.mrb[0].mxu0
  %3642 = vdwg.mxu0
  %3643 = vmatprep.subr.bf16.mxu0 %v2530
  %3644 = vmatpush1.bf16.msra.mxu0 %v2529
  %3645 = vmatprep.subr.bf16.mxu0 %v2532
  %3646 = vmatpush1.bf16.msra.mxu0 %v2531
  %3647 = vmatprep.subr.bf16.mxu0 %v2534
  %3648 = vmatpush1.bf16.msra.mxu0 %v2533
  %3649 = vmatprep.subr.bf16.mxu0 %v2536
  %3650 = vmatpush1.bf16.msra.mxu0 %v2535
  %3651 = vmatprep.subr.bf16.mxu0 %v2538
  %3652 = vmatpush1.bf16.msra.mxu0 %v2537
  %3653 = vmatprep.subr.bf16.mxu0 %v2540
  %3654 = vmatpush1.bf16.msra.mxu0 %v2539
  %3655 = vmatprep.subr.bf16.mxu0 %v2542
  %3656 = vmatpush1.bf16.msra.mxu0 %v2541
  %3657 = vmatprep.subr.bf16.mxu0 %v2544
  %3658 = vmatpush1.bf16.msra.mxu0 %v2543
  %3659 = vmatprep.subr.bf16.mxu0 %v2546
  %3660 = vmatpush1.bf16.msra.mxu0 %v2545
  %3661 = vmatprep.subr.bf16.mxu0 %v2548
  %3662 = vmatpush1.bf16.msra.mxu0 %v2547
  %3663 = vmatprep.subr.bf16.mxu0 %v2550
  %3664 = vmatpush1.bf16.msra.mxu0 %v2549
  %3665 = vmatprep.subr.bf16.mxu0 %v2552
  %3666 = vmatpush1.bf16.msra.mxu0 %v2551
  %3667 = vmatprep.subr.bf16.mxu0 %v2554
  %3668 = vmatpush1.bf16.msra.mxu0 %v2553
  %3669 = vmatprep.subr.bf16.mxu0 %v2556
  %3670 = vmatpush1.bf16.msra.mxu0 %v2555
  %3671 = vmatprep.subr.bf16.mxu0 %v2558
  %3672 = vmatpush1.bf16.msra.mxu0 %v2557
  %3673 = vmatprep.subr.bf16.mxu0 %v2560
  %3674 = vmatpush1.bf16.msra.mxu0 %v2559
  %3675 = vmatprep.mubr.bf16.mxu0 %v630
  %3676 = vmatmul.mubr.bf16.gmra.mrb[0].mxu0 %v629
  %v3677 = vpop.f32.mrb[0].mxu0
  %v3678 = vadd.f32 %v3637, %v3677
  %v3679 = vpop.f32.mrb[0].mxu0
  %v3680 = vadd.f32 %v3639, %v3679
  %v3681 = vpop.f32.mrb[0].mxu0
  %v3682 = vpop.f32.mrb[0].mxu0
  %3683 = vdwg.mxu0
  %3684 = vmatprep.subr.bf16.mxu0 %v2562
  %3685 = vmatpush1.bf16.msra.mxu0 %v2561
  %3686 = vmatprep.subr.bf16.mxu0 %v2564
  %3687 = vmatpush1.bf16.msra.mxu0 %v2563
  %3688 = vmatprep.subr.bf16.mxu0 %v2566
  %3689 = vmatpush1.bf16.msra.mxu0 %v2565
  %3690 = vmatprep.subr.bf16.mxu0 %v2568
  %3691 = vmatpush1.bf16.msra.mxu0 %v2567
  %3692 = vmatprep.subr.bf16.mxu0 %v2570
  %3693 = vmatpush1.bf16.msra.mxu0 %v2569
  %3694 = vmatprep.subr.bf16.mxu0 %v2572
  %3695 = vmatpush1.bf16.msra.mxu0 %v2571
  %3696 = vmatprep.subr.bf16.mxu0 %v2574
  %3697 = vmatpush1.bf16.msra.mxu0 %v2573
  %3698 = vmatprep.subr.bf16.mxu0 %v2576
  %3699 = vmatpush1.bf16.msra.mxu0 %v2575
  %3700 = vmatprep.subr.bf16.mxu0 %v2578
  %3701 = vmatpush1.bf16.msra.mxu0 %v2577
  %3702 = vmatprep.subr.bf16.mxu0 %v2580
  %3703 = vmatpush1.bf16.msra.mxu0 %v2579
  %3704 = vmatprep.subr.bf16.mxu0 %v2582
  %3705 = vmatpush1.bf16.msra.mxu0 %v2581
  %3706 = vmatprep.subr.bf16.mxu0 %v2584
  %3707 = vmatpush1.bf16.msra.mxu0 %v2583
  %3708 = vmatprep.subr.bf16.mxu0 %v2586
  %3709 = vmatpush1.bf16.msra.mxu0 %v2585
  %3710 = vmatprep.subr.bf16.mxu0 %v2588
  %3711 = vmatpush1.bf16.msra.mxu0 %v2587
  %3712 = vmatprep.subr.bf16.mxu0 %v2590
  %3713 = vmatpush1.bf16.msra.mxu0 %v2589
  %3714 = vmatprep.subr.bf16.mxu0 %v2592
  %3715 = vmatpush1.bf16.msra.mxu0 %v2591
  %3716 = vmatprep.mubr.bf16.mxu0 %v632
  %3717 = vmatmul.mubr.bf16.gmra.mrb[0].mxu0 %v631
  %v3718 = vpop.f32.mrb[0].mxu0
  %v3719 = vadd.f32 %v3678, %v3718
  %v3720 = vpop.f32.mrb[0].mxu0
  %v3721 = vadd.f32 %v3680, %v3720
  %v3722 = vpop.f32.mrb[0].mxu0
  %v3723 = vpop.f32.mrb[0].mxu0
  %3724 = vdwg.mxu0
  %3725 = vmatprep.subr.bf16.mxu0 %v2594
  %3726 = vmatpush1.bf16.msra.mxu0 %v2593
  %3727 = vmatprep.subr.bf16.mxu0 %v2596
  %3728 = vmatpush1.bf16.msra.mxu0 %v2595
  %3729 = vmatprep.subr.bf16.mxu0 %v2598
  %3730 = vmatpush1.bf16.msra.mxu0 %v2597
  %3731 = vmatprep.subr.bf16.mxu0 %v2600
  %3732 = vmatpush1.bf16.msra.mxu0 %v2599
  %3733 = vmatprep.subr.bf16.mxu0 %v2602
  %3734 = vmatpush1.bf16.msra.mxu0 %v2601
  %3735 = vmatprep.subr.bf16.mxu0 %v2604
  %3736 = vmatpush1.bf16.msra.mxu0 %v2603
  %3737 = vmatprep.subr.bf16.mxu0 %v2606
  %3738 = vmatpush1.bf16.msra.mxu0 %v2605
  %3739 = vmatprep.subr.bf16.mxu0 %v2608
  %3740 = vmatpush1.bf16.msra.mxu0 %v2607
  %3741 = vmatprep.subr.bf16.mxu0 %v2610
  %3742 = vmatpush1.bf16.msra.mxu0 %v2609
  %3743 = vmatprep.subr.bf16.mxu0 %v2612
  %3744 = vmatpush1.bf16.msra.mxu0 %v2611
  %3745 = vmatprep.subr.bf16.mxu0 %v2614
  %3746 = vmatpush1.bf16.msra.mxu0 %v2613
  %3747 = vmatprep.subr.bf16.mxu0 %v2616
  %3748 = vmatpush1.bf16.msra.mxu0 %v2615
  %3749 = vmatprep.subr.bf16.mxu0 %v2618
  %3750 = vmatpush1.bf16.msra.mxu0 %v2617
  %3751 = vmatprep.subr.bf16.mxu0 %v2620
  %3752 = vmatpush1.bf16.msra.mxu0 %v2619
  %3753 = vmatprep.subr.bf16.mxu0 %v2622
  %3754 = vmatpush1.bf16.msra.mxu0 %v2621
  %3755 = vmatprep.subr.bf16.mxu0 %v2624
  %3756 = vmatpush1.bf16.msra.mxu0 %v2623
  %3757 = vmatprep.mubr.bf16.mxu0 %v634
  %3758 = vmatmul.mubr.bf16.gmra.mrb[0].mxu0 %v633
  %v3759 = vpop.f32.mrb[0].mxu0
  %v3760 = vadd.f32 %v3719, %v3759
  %v3761 = vpop.f32.mrb[0].mxu0
  %v3762 = vadd.f32 %v3721, %v3761
  %v3763 = vpop.f32.mrb[0].mxu0
  %v3764 = vpop.f32.mrb[0].mxu0
  %3765 = vdwg.mxu0
  %3766 = vmatprep.subr.bf16.mxu0 %v2626
  %3767 = vmatpush1.bf16.msra.mxu0 %v2625
  %3768 = vmatprep.subr.bf16.mxu0 %v2628
  %3769 = vmatpush1.bf16.msra.mxu0 %v2627
  %3770 = vmatprep.subr.bf16.mxu0 %v2630
  %3771 = vmatpush1.bf16.msra.mxu0 %v2629
  %3772 = vmatprep.subr.bf16.mxu0 %v2632
  %3773 = vmatpush1.bf16.msra.mxu0 %v2631
  %3774 = vmatprep.subr.bf16.mxu0 %v2634
  %3775 = vmatpush1.bf16.msra.mxu0 %v2633
  %3776 = vmatprep.subr.bf16.mxu0 %v2636
  %3777 = vmatpush1.bf16.msra.mxu0 %v2635
  %3778 = vmatprep.subr.bf16.mxu0 %v2638
  %3779 = vmatpush1.bf16.msra.mxu0 %v2637
  %3780 = vmatprep.subr.bf16.mxu0 %v2640
  %3781 = vmatpush1.bf16.msra.mxu0 %v2639
  %3782 = vmatprep.subr.bf16.mxu0 %v2642
  %3783 = vmatpush1.bf16.msra.mxu0 %v2641
  %3784 = vmatprep.subr.bf16.mxu0 %v2644
  %3785 = vmatpush1.bf16.msra.mxu0 %v2643
  %3786 = vmatprep.subr.bf16.mxu0 %v2646
  %3787 = vmatpush1.bf16.msra.mxu0 %v2645
  %3788 = vmatprep.subr.bf16.mxu0 %v2648
  %3789 = vmatpush1.bf16.msra.mxu0 %v2647
  %3790 = vmatprep.subr.bf16.mxu0 %v2650
  %3791 = vmatpush1.bf16.msra.mxu0 %v2649
  %3792 = vmatprep.subr.bf16.mxu0 %v2652
  %3793 = vmatpush1.bf16.msra.mxu0 %v2651
  %3794 = vmatprep.subr.bf16.mxu0 %v2654
  %3795 = vmatpush1.bf16.msra.mxu0 %v2653
  %3796 = vmatprep.subr.bf16.mxu0 %v2656
  %3797 = vmatpush1.bf16.msra.mxu0 %v2655
  %3798 = vmatprep.mubr.bf16.mxu0 %v636
  %3799 = vmatmul.mubr.bf16.gmra.mrb[0].mxu0 %v635
  %v3800 = vpop.f32.mrb[0].mxu0
  %v3801 = vadd.f32 %v3760, %v3800
  %v3802 = vpop.f32.mrb[0].mxu0
  %v3803 = vadd.f32 %v3762, %v3802
  %v3804 = vpop.f32.mrb[0].mxu0
  %v3805 = vpop.f32.mrb[0].mxu0
  %3806 = vdwg.mxu0
  %3807 = vmatprep.subr.bf16.mxu0 %v2658
  %3808 = vmatpush1.bf16.msra.mxu0 %v2657
  %3809 = vmatprep.subr.bf16.mxu0 %v2660
  %3810 = vmatpush1.bf16.msra.mxu0 %v2659
  %3811 = vmatprep.subr.bf16.mxu0 %v2662
  %3812 = vmatpush1.bf16.msra.mxu0 %v2661
  %3813 = vmatprep.subr.bf16.mxu0 %v2664
  %3814 = vmatpush1.bf16.msra.mxu0 %v2663
  %3815 = vmatprep.subr.bf16.mxu0 %v2666
  %3816 = vmatpush1.bf16.msra.mxu0 %v2665
  %3817 = vmatprep.subr.bf16.mxu0 %v2668
  %3818 = vmatpush1.bf16.msra.mxu0 %v2667
  %3819 = vmatprep.subr.bf16.mxu0 %v2670
  %3820 = vmatpush1.bf16.msra.mxu0 %v2669
  %3821 = vmatprep.subr.bf16.mxu0 %v2672
  %3822 = vmatpush1.bf16.msra.mxu0 %v2671
  %3823 = vmatprep.subr.bf16.mxu0 %v2674
  %3824 = vmatpush1.bf16.msra.mxu0 %v2673
  %3825 = vmatprep.subr.bf16.mxu0 %v2676
  %3826 = vmatpush1.bf16.msra.mxu0 %v2675
  %3827 = vmatprep.subr.bf16.mxu0 %v2678
  %3828 = vmatpush1.bf16.msra.mxu0 %v2677
  %3829 = vmatprep.subr.bf16.mxu0 %v2680
  %3830 = vmatpush1.bf16.msra.mxu0 %v2679
  %3831 = vmatprep.subr.bf16.mxu0 %v2682
  %3832 = vmatpush1.bf16.msra.mxu0 %v2681
  %3833 = vmatprep.subr.bf16.mxu0 %v2684
  %3834 = vmatpush1.bf16.msra.mxu0 %v2683
  %3835 = vmatprep.subr.bf16.mxu0 %v2686
  %3836 = vmatpush1.bf16.msra.mxu0 %v2685
  %3837 = vmatprep.subr.bf16.mxu0 %v2688
  %3838 = vmatpush1.bf16.msra.mxu0 %v2687
  %3839 = vmatprep.mubr.bf16.mxu0 %v638
  %3840 = vmatmul.mubr.bf16.gmra.mrb[0].mxu0 %v637
  %v3841 = vpop.f32.mrb[0].mxu0
  %v3842 = vadd.f32 %v3801, %v3841
  %v3843 = vpop.f32.mrb[0].mxu0
  %v3844 = vadd.f32 %v3803, %v3843
  %v3845 = vpop.f32.mrb[0].mxu0
  %v3846 = vpop.f32.mrb[0].mxu0
  %3847 = vdwg.mxu0
  %3848 = vmatprep.subr.bf16.mxu0 %v2690
  %3849 = vmatpush1.bf16.msra.mxu0 %v2689
  %3850 = vmatprep.subr.bf16.mxu0 %v2692
  %3851 = vmatpush1.bf16.msra.mxu0 %v2691
  %3852 = vmatprep.subr.bf16.mxu0 %v2694
  %3853 = vmatpush1.bf16.msra.mxu0 %v2693
  %3854 = vmatprep.subr.bf16.mxu0 %v2696
  %3855 = vmatpush1.bf16.msra.mxu0 %v2695
  %3856 = vmatprep.subr.bf16.mxu0 %v2698
  %3857 = vmatpush1.bf16.msra.mxu0 %v2697
  %3858 = vmatprep.subr.bf16.mxu0 %v2700
  %3859 = vmatpush1.bf16.msra.mxu0 %v2699
  %3860 = vmatprep.subr.bf16.mxu0 %v2702
  %3861 = vmatpush1.bf16.msra.mxu0 %v2701
  %3862 = vmatprep.subr.bf16.mxu0 %v2704
  %3863 = vmatpush1.bf16.msra.mxu0 %v2703
  %3864 = vmatprep.subr.bf16.mxu0 %v2706
  %3865 = vmatpush1.bf16.msra.mxu0 %v2705
  %3866 = vmatprep.subr.bf16.mxu0 %v2708
  %3867 = vmatpush1.bf16.msra.mxu0 %v2707
  %3868 = vmatprep.subr.bf16.mxu0 %v2710
  %3869 = vmatpush1.bf16.msra.mxu0 %v2709
  %3870 = vmatprep.subr.bf16.mxu0 %v2712
  %3871 = vmatpush1.bf16.msra.mxu0 %v2711
  %3872 = vmatprep.subr.bf16.mxu0 %v2714
  %3873 = vmatpush1.bf16.msra.mxu0 %v2713
  %3874 = vmatprep.subr.bf16.mxu0 %v2716
  %3875 = vmatpush1.bf16.msra.mxu0 %v2715
  %3876 = vmatprep.subr.bf16.mxu0 %v2718
  %3877 = vmatpush1.bf16.msra.mxu0 %v2717
  %3878 = vmatprep.subr.bf16.mxu0 %v2720
  %3879 = vmatpush1.bf16.msra.mxu0 %v2719
  %3880 = vmatprep.mubr.bf16.mxu0 %v640
  %3881 = vmatmul.mubr.bf16.gmra.mrb[0].mxu0 %v639
  %v3882 = vpop.f32.mrb[0].mxu0
  %v3883 = vadd.f32 %v3842, %v3882
  %v3884 = vpop.f32.mrb[0].mxu0
  %v3885 = vadd.f32 %v3844, %v3884
  %v3886 = vpop.f32.mrb[0].mxu0
  %v3887 = vpop.f32.mrb[0].mxu0
  %3888 = vdwg.mxu0
  %v3889 = vmax.f32 %v3883, 0.0
  %v3890 = vmax.f32 %v3885, 0.0
  %v3891 = vpack.c.bf16 %v3889, %v3889
  %v3892 = vpack.c.bf16 %v3890, %v3890
  %v3893 = vld [vmem:[%s3] sm:$0xf]
  %v3894 = vld [vmem:[%s3 + $0x4] sm:$0xf]
  %v3895 = vld [vmem:[%s3 + $0x8] sm:$0xf]
  %v3896 = vld [vmem:[%s3 + $0xc] sm:$0xf]
  %v3897 = vld [vmem:[%s3 + $0x10] sm:$0xf]
  %v3898 = vld [vmem:[%s3 + $0x14] sm:$0xf]
  %v3899 = vld [vmem:[%s3 + $0x18] sm:$0xf]
  %v3900 = vld [vmem:[%s3 + $0x1c] sm:$0xf]
  %v3901 = vld [vmem:[%s3 + $0x20] sm:$0xf]
  %v3902 = vld [vmem:[%s3 + $0x24] sm:$0xf]
  %v3903 = vld [vmem:[%s3 + $0x28] sm:$0xf]
  %v3904 = vld [vmem:[%s3 + $0x2c] sm:$0xf]
  %v3905 = vld [vmem:[%s3 + $0x30] sm:$0xf]
  %v3906 = vld [vmem:[%s3 + $0x34] sm:$0xf]
  %v3907 = vld [vmem:[%s3 + $0x38] sm:$0xf]
  %v3908 = vld [vmem:[%s3 + $0x3c] sm:$0xf]
  %v3909 = vld [vmem:[%s3 + $0x40] sm:$0xf]
  %v3910 = vld [vmem:[%s3 + $0x44] sm:$0xf]
  %v3911 = vld [vmem:[%s3 + $0x48] sm:$0xf]
  %v3912 = vld [vmem:[%s3 + $0x4c] sm:$0xf]
  %v3913 = vld [vmem:[%s3 + $0x50] sm:$0xf]
  %v3914 = vld [vmem:[%s3 + $0x54] sm:$0xf]
  %v3915 = vld [vmem:[%s3 + $0x58] sm:$0xf]
  %v3916 = vld [vmem:[%s3 + $0x5c] sm:$0xf]
  %v3917 = vld [vmem:[%s3 + $0x60] sm:$0xf]
  %v3918 = vld [vmem:[%s3 + $0x64] sm:$0xf]
  %v3919 = vld [vmem:[%s3 + $0x68] sm:$0xf]
  %v3920 = vld [vmem:[%s3 + $0x6c] sm:$0xf]
  %v3921 = vld [vmem:[%s3 + $0x70] sm:$0xf]
  %v3922 = vld [vmem:[%s3 + $0x74] sm:$0xf]
  %v3923 = vld [vmem:[%s3 + $0x78] sm:$0xf]
  %v3924 = vld [vmem:[%s3 + $0x7c] sm:$0xf]
  %v3925 = vld [vmem:[%s4] sm:$0x1]
  %v3927 = vlaneseq
  %v3928 = vshrl.u32 %v3927, 7
  %v3929 = vsub.s32 0, %v3928
  %v3930 = vrot.slane %v3925, %v3929
  %v3964 = vunpack.c.l.b16 %v3893
  %v3965 = vunpack.c.l.b16 %v3894
  %v3966 = vunpack.c.l.b16 %v3895
  %v3967 = vunpack.c.l.b16 %v3896
  %v3968 = vunpack.c.l.b16 %v3897
  %v3969 = vunpack.c.l.b16 %v3898
  %v3970 = vunpack.c.l.b16 %v3899
  %v3971 = vunpack.c.l.b16 %v3900
  %v3972 = vunpack.c.l.b16 %v3901
  %v3973 = vunpack.c.l.b16 %v3902
  %v3974 = vunpack.c.l.b16 %v3903
  %v3975 = vunpack.c.l.b16 %v3904
  %v3976 = vunpack.c.l.b16 %v3905
  %v3977 = vunpack.c.l.b16 %v3906
  %v3978 = vunpack.c.l.b16 %v3907
  %v3979 = vunpack.c.l.b16 %v3908
  %v3980 = vunpack.c.l.b16 %v3909
  %v3981 = vunpack.c.l.b16 %v3910
  %v3982 = vunpack.c.l.b16 %v3911
  %v3983 = vunpack.c.l.b16 %v3912
  %v3984 = vunpack.c.l.b16 %v3913
  %v3985 = vunpack.c.l.b16 %v3914
  %v3986 = vunpack.c.l.b16 %v3915
  %v3987 = vunpack.c.l.b16 %v3916
  %v3988 = vunpack.c.l.b16 %v3917
  %v3989 = vunpack.c.l.b16 %v3918
  %v3990 = vunpack.c.l.b16 %v3919
  %v3991 = vunpack.c.l.b16 %v3920
  %v3992 = vunpack.c.l.b16 %v3921
  %v3993 = vunpack.c.l.b16 %v3922
  %v3994 = vunpack.c.l.b16 %v3923
  %v3995 = vunpack.c.l.b16 %v3924
  %v3996 = vpack.c.b16 %v3965, %v3964
  %v3997 = vpack.c.b16 %v3967, %v3966
  %v3998 = vpack.c.b16 %v3969, %v3968
  %v3999 = vpack.c.b16 %v3971, %v3970
  %v4000 = vpack.c.b16 %v3973, %v3972
  %v4001 = vpack.c.b16 %v3975, %v3974
  %v4002 = vpack.c.b16 %v3977, %v3976
  %v4003 = vpack.c.b16 %v3979, %v3978
  %v4004 = vpack.c.b16 %v3981, %v3980
  %v4005 = vpack.c.b16 %v3983, %v3982
  %v4006 = vpack.c.b16 %v3985, %v3984
  %v4007 = vpack.c.b16 %v3987, %v3986
  %v4008 = vpack.c.b16 %v3989, %v3988
  %v4009 = vpack.c.b16 %v3991, %v3990
  %v4010 = vpack.c.b16 %v3993, %v3992
  %v4011 = vpack.c.b16 %v3995, %v3994
  %4028 = vmatprep.subr.bf16.mxu0 0
  %4029 = vmatpush1.bf16.msra.mxu0 %v3996
  %4030 = vmatprep.subr.bf16.mxu0 0
  %4031 = vmatpush1.bf16.msra.mxu0 %v3997
  %4032 = vmatprep.subr.bf16.mxu0 0
  %4033 = vmatpush1.bf16.msra.mxu0 %v3998
  %4034 = vmatprep.subr.bf16.mxu0 0
  %4035 = vmatpush1.bf16.msra.mxu0 %v3999
  %4036 = vmatprep.subr.bf16.mxu0 0
  %4037 = vmatpush1.bf16.msra.mxu0 %v4000
  %4038 = vmatprep.subr.bf16.mxu0 0
  %4039 = vmatpush1.bf16.msra.mxu0 %v4001
  %4040 = vmatprep.subr.bf16.mxu0 0
  %4041 = vmatpush1.bf16.msra.mxu0 %v4002
  %4042 = vmatprep.subr.bf16.mxu0 0
  %4043 = vmatpush1.bf16.msra.mxu0 %v4003
  %4044 = vmatprep.subr.bf16.mxu0 0
  %4045 = vmatpush1.bf16.msra.mxu0 %v4004
  %4046 = vmatprep.subr.bf16.mxu0 0
  %4047 = vmatpush1.bf16.msra.mxu0 %v4005
  %4048 = vmatprep.subr.bf16.mxu0 0
  %4049 = vmatpush1.bf16.msra.mxu0 %v4006
  %4050 = vmatprep.subr.bf16.mxu0 0
  %4051 = vmatpush1.bf16.msra.mxu0 %v4007
  %4052 = vmatprep.subr.bf16.mxu0 0
  %4053 = vmatpush1.bf16.msra.mxu0 %v4008
  %4054 = vmatprep.subr.bf16.mxu0 0
  %4055 = vmatpush1.bf16.msra.mxu0 %v4009
  %4056 = vmatprep.subr.bf16.mxu0 0
  %4057 = vmatpush1.bf16.msra.mxu0 %v4010
  %4058 = vmatprep.subr.bf16.mxu0 0
  %4059 = vmatpush1.bf16.msra.mxu0 %v4011
  %4060 = vmatprep.mubr.bf16.mxu0 %v3892
  %4061 = vmatmul.mubr.bf16.gmra.mrb[0].mxu0 %v3891
  %v4062 = vpop.f32.mrb[0].mxu0
  %v4063 = vadd.f32 %v3930, %v4062
  %v4064 = vpop.f32.mrb[0].mxu0
  %v4065 = vpop.f32.mrb[0].mxu0
  %v4066 = vpop.f32.mrb[0].mxu0
  %4067 = vdwg.mxu0
  %4068 = vst [vmem:[%s5] sm:$0xff] %v4063
  // Predicated region
  $region22: #{q_network2_forward.3} parent=0 // pred_check
    _
  $region23: #{q_network2_forward.3} parent=0 // pred_check_branch
    %4070 = sbr.rel (0) target = $region25
  $region24: #{q_network2_forward.3} parent=0 // pred_region
    _
  $region25: #{q_network2_forward.3} parent=0 // pred_fallthru
    _
  // Predicated region
  $region26: #{q_network2_forward.3} parent=0 // pred_check
    _
  $region27: #{q_network2_forward.3} parent=0 // pred_check_branch
    %4072 = sbr.rel (0) target = $region29
  $region28: #{q_network2_forward.3} parent=0 // pred_region
    _
  $region29: #{q_network2_forward.3} parent=0 // pred_fallthru
    _

</llo_original>
